<compile_context>
chip_gen: v5e
topology: v5e:2x2
jax: 0.10.0
libtpu: 0.0.40
codegen_flags: <defaults>
</compile_context>

<pallas_src>
import jax
import jax.numpy as jnp
from jax.experimental import pallas as pl
from jax.experimental.pallas import tpu as pltpu


# Small footprint per grid step; explicit limit leaves plenty of headroom on
# v5e/v6e (128 MiB) and v7x (64 MiB physical).
_MOSAIC_PARAMS = pltpu.CompilerParams(
    dimension_semantics=("parallel",),      # shard row tiles across v7x's 2 TCs
    vmem_limit_bytes=32 * 1024 * 1024,
)


def _round_up(x, m):
    return ((x + m - 1) // m) * m


def _pick_row_tile(rows, max_tile=256):
    if rows >= max_tile:
        return max_tile
    return _round_up(max(rows, 1), 8)


# --------------------------------------------------------------------------
# Kernel 1: fused fc1 (+relu) and the 1x1-input ConvTranspose (+bias, +relu),
# both expressed as matmuls.  Weights arrive in bf16, biases in f32.
# --------------------------------------------------------------------------
def _head_kernel(xh_ref, xs_ref, w1h_ref, w1s_ref, b1_ref, wc1_ref, bc1_ref,
                 o_ref):
    xh = xh_ref[...].astype(jnp.bfloat16)
    xs = xs_ref[...].astype(jnp.bfloat16)
    h = jnp.dot(xh, w1h_ref[...], preferred_element_type=jnp.float32)
    h = h + jnp.dot(xs, w1s_ref[...], preferred_element_type=jnp.float32)
    h = jnp.maximum(h + b1_ref[...], 0.0)                       # fc1 + relu
    y = jnp.dot(h.astype(jnp.bfloat16), wc1_ref[...],
                preferred_element_type=jnp.float32)
    o_ref[...] = jnp.maximum(y + bc1_ref[...], 0.0)             # conv1 + relu


def _head_forward(xh, xs, w1h, w1s, b1, wc1_mat, bc1, *, row_tile=256):
    n = xh.shape[0]
    tile = _pick_row_tile(n, row_tile)
    n_p = _round_up(n, tile)
    if n_p != n:
        xh = jnp.pad(xh, ((0, n_p - n), (0, 0)))
        xs = jnp.pad(xs, ((0, n_p - n), (0, 0)))
    cols = wc1_mat.shape[1]
    out = pl.pallas_call(
        _head_kernel,
        out_shape=jax.ShapeDtypeStruct((n_p, cols), jnp.float32),
        grid=(n_p // tile,),
        in_specs=[
            pl.BlockSpec((tile, xh.shape[1]), lambda i: (i, 0)),
            pl.BlockSpec((tile, xs.shape[1]), lambda i: (i, 0)),
            pl.BlockSpec(w1h.shape, lambda i: (0, 0)),      # resident weights
            pl.BlockSpec(w1s.shape, lambda i: (0, 0)),
            pl.BlockSpec(b1.shape, lambda i: (0, 0)),
            pl.BlockSpec(wc1_mat.shape, lambda i: (0, 0)),
            pl.BlockSpec(bc1.shape, lambda i: (0, 0)),
        ],
        out_specs=pl.BlockSpec((tile, cols), lambda i: (i, 0)),
        compiler_params=_MOSAIC_PARAMS,
    )(xh, xs, w1h, w1s, b1, wc1_mat, bc1)
    return out[:n]


# --------------------------------------------------------------------------
# Kernel 2: tap-batched matmul used by every remaining ConvTranspose layer:
#   contrib = x_flat @ W_taps, x_flat: (rows, Cin), W_taps: (Cin, K*K*Cout_pad)
# --------------------------------------------------------------------------
def _tap_matmul_kernel(x_ref, w_ref, o_ref):
    o_ref[...] = jnp.dot(x_ref[...].astype(jnp.bfloat16), w_ref[...],
                         preferred_element_type=jnp.float32)


def _tiled_matmul(x, w_bf16, *, row_tile=256):
    rows, cin = x.shape
    cols = w_bf16.shape[1]
    tile = _pick_row_tile(rows, row_tile)
    rows_p = _round_up(rows, tile)
    if rows_p != rows:
        x = jnp.pad(x, ((0, rows_p - rows), (0, 0)))
    out = pl.pallas_call(
        _tap_matmul_kernel,
        out_shape=jax.ShapeDtypeStruct((rows_p, cols), jnp.float32),
        grid=(rows_p // tile,),
        in_specs=[
            pl.BlockSpec((tile, cin), lambda i: (i, 0)),
            pl.BlockSpec((cin, cols), lambda i: (0, 0)),    # resident weight
        ],
        out_specs=pl.BlockSpec((tile, cols), lambda i: (i, 0)),
        compiler_params=_MOSAIC_PARAMS,
    )(x, w_bf16)
    return out[:rows]


def _conv_transpose_layer(x_nhwc, w, b, stride, *, apply_relu, row_tile=256):
    """ConvTranspose2d (padding=0, output_padding=0) via one Pallas matmul.

    x_nhwc: (N, H, W, Cin); w: (Cin, Cout, K, K) (torch ConvTranspose layout);
    b: (Cout,).  Returns (N, OH, OW, Cout) with OH = (H-1)*stride + K.
    """
    N, H, W, cin = x_nhwc.shape
    cout, K = w.shape[1], w.shape[2]
    OH = (H - 1) * stride + K
    OW = (W - 1) * stride + K

    cols = K * K * cout
    cols_p = _round_up(cols, 128)                    # lane-dense output stores
    w_taps = jnp.transpose(w, (0, 2, 3, 1)).reshape(cin, cols)
    w_taps = jnp.pad(w_taps, ((0, 0), (0, cols_p - cols))).astype(jnp.bfloat16)

    x_flat = x_nhwc.reshape(N * H * W, cin)
    contrib = _tiled_matmul(x_flat, w_taps, row_tile=row_tile)[:, :cols]
    contrib = contrib.reshape(N, H, W, K, K, cout)

    # TODO(synk): the strided tap interleave below is plain-JAX scatter-add
    # glue (pure data movement, no FLOPs); it could be folded into the Pallas
    # kernel with strided pl.ds stores if it ever shows up in profiles.
    out = jnp.zeros((N, OH, OW, cout), jnp.float32)
    for ky in range(K):
        for kx in range(K):
            out = out.at[:, ky:ky + stride * H:stride,
                            kx:kx + stride * W:stride, :].add(
                                contrib[:, :, :, ky, kx, :])
    out = out + b.reshape(1, 1, 1, cout)
    if apply_relu:
        out = jnp.maximum(out, 0.0)
    return out


# --------------------------------------------------------------------------
# Full forward pass
# --------------------------------------------------------------------------
def image_decoder_forward(h_t, s_t, params, *, row_tile=256):
    """Pallas implementation of ImageDecoder.forward.

    h_t: (T, B, belief_size), s_t: (T, B, state_size)
    returns {'loc': (T, B, image_dim, 64, 64), 'scale': 1.0}
    """
    T, B = h_t.shape[:2]
    N = T * B
    xh = h_t.reshape(N, -1).astype(jnp.float32)
    xs = s_t.reshape(N, -1).astype(jnp.float32)
    belief_size = xh.shape[1]

    E = params["fc1_w"].shape[1]
    # Split W1 so the wrapper-side concat disappears (x_h @ W1h + x_s @ W1s).
    w1h = params["fc1_w"][:belief_size].astype(jnp.bfloat16)
    w1s = params["fc1_w"][belief_size:].astype(jnp.bfloat16)
    b1 = params["fc1_b"].reshape(1, E)

    # First ConvTranspose (1x1 spatial input) == linear map E -> C1*K1*K1,
    # with columns laid out (ky, kx, co) so the result is directly NHWC.
    wc1 = params["conv1_w"]                          # (E, C1, K1, K1)
    C1, K1 = wc1.shape[1], wc1.shape[2]
    cols1 = C1 * K1 * K1
    cols1_p = _round_up(cols1, 128)
    wc1_mat = jnp.transpose(wc1, (0, 2, 3, 1)).reshape(E, cols1)
    wc1_mat = jnp.pad(wc1_mat, ((0, 0), (0, cols1_p - cols1))).astype(jnp.bfloat16)
    bc1 = jnp.tile(params["conv1_b"], K1 * K1)
    bc1 = jnp.pad(bc1, (0, cols1_p - cols1)).reshape(1, cols1_p)

    y1 = _head_forward(xh, xs, w1h, w1s, b1, wc1_mat, bc1, row_tile=row_tile)
    y1 = y1[:, :cols1].reshape(N, K1, K1, C1)                  # (N, 5, 5, 128)

    y2 = _conv_transpose_layer(y1, params["conv2_w"], params["conv2_b"], 2,
                               apply_relu=True, row_tile=row_tile)   # (N,13,13,64)
    y3 = _conv_transpose_layer(y2, params["conv3_w"], params["conv3_b"], 2,
                               apply_relu=True, row_tile=row_tile)   # (N,30,30,32)
    y4 = _conv_transpose_layer(y3, params["conv4_w"], params["conv4_b"], 2,
                               apply_relu=False, row_tile=row_tile)  # (N,64,64,C)

    obs = jnp.transpose(y4, (0, 3, 1, 2))                      # NCHW
    obs = obs.reshape(T, B, *obs.shape[1:])
    return {"loc": obs, "scale": 1.0}


# --------------------------------------------------------------------------
# Synthetic parameter init (shapes match the PyTorch module's layers)
# --------------------------------------------------------------------------
def init_params(key, belief_size, state_size, embedding_size, image_dim=3):
    keys = jax.random.split(key, 10)
    din = belief_size + state_size
    E = embedding_size

    def w_init(k, shape, fan):
        return jax.random.normal(k, shape, jnp.float32) * jnp.sqrt(2.0 / fan)

    def b_init(k, shape):
        return jax.random.normal(k, shape, jnp.float32) * 0.1

    return {
        # fc1 stored as (in_features, out_features) so kernel computes x @ W.
        "fc1_w": w_init(keys[0], (din, E), din),
        "fc1_b": b_init(keys[1], (E,)),
        # ConvTranspose2d weights in torch layout (Cin, Cout, K, K).
        "conv1_w": w_init(keys[2], (E, 128, 5, 5), E),
        "conv1_b": b_init(keys[3], (128,)),
        "conv2_w": w_init(keys[4], (128, 64, 5, 5), 128 * 25 // 4),
        "conv2_b": b_init(keys[5], (64,)),
        "conv3_w": w_init(keys[6], (64, 32, 6, 6), 64 * 36 // 4),
        "conv3_b": b_init(keys[7], (32,)),
        "conv4_w": w_init(keys[8], (32, image_dim, 6, 6), 32 * 36 // 4),
        "conv4_b": b_init(keys[9], (image_dim,)),
    }


# --------------------------------------------------------------------------
# Independent pure-JAX reference (f32, highest precision)
# --------------------------------------------------------------------------
def _reference_forward(h_t, s_t, params):
    T, B = h_t.shape[:2]
    N = T * B
    x = jnp.concatenate([h_t.reshape(N, -1), s_t.reshape(N, -1)], axis=1)
    h = jax.nn.relu(jnp.dot(x, params["fc1_w"],
                            precision=jax.lax.Precision.HIGHEST)
                    + params["fc1_b"])
    y = h.reshape(N, -1, 1, 1)                                  # NCHW

    def conv_t(y, w, b, stride):
        K = w.shape[2]
        rhs = jnp.flip(w, (2, 3)).transpose(1, 0, 2, 3)         # (Cout,Cin,K,K)
        out = jax.lax.conv_general_dilated(
            y, rhs, window_strides=(1, 1),
            padding=[(K - 1, K - 1), (K - 1, K - 1)],
            lhs_dilation=(stride, stride),
            dimension_numbers=("NCHW", "OIHW", "NCHW"),
            precision=jax.lax.Precision.HIGHEST)
        return out + b.reshape(1, -1, 1, 1)

    y = jax.nn.relu(conv_t(y, params["conv1_w"], params["conv1_b"], 2))
    y = jax.nn.relu(conv_t(y, params["conv2_w"], params["conv2_b"], 2))
    y = jax.nn.relu(conv_t(y, params["conv3_w"], params["conv3_b"], 2))
    y = conv_t(y, params["conv4_w"], params["conv4_b"], 2)
    return y.reshape(T, B, *y.shape[1:])


if __name__ == "__main__":
    T, B = 2, 4
    belief_size, state_size = 32, 16
    embedding_size = 32
    image_dim = 3

    key = jax.random.PRNGKey(0)
    kp, kh, ks = jax.random.split(key, 3)
    params = init_params(kp, belief_size, state_size, embedding_size, image_dim)

    h_t = jax.random.normal(kh, (T, B, belief_size), jnp.float32)
    s_t = jax.random.normal(ks, (T, B, state_size), jnp.float32)

    forward = jax.jit(image_decoder_forward)
    result = forward(h_t, s_t, params)
    loc = jax.block_until_ready(result["loc"])

    ref = _reference_forward(h_t, s_t, params)
    assert loc.shape == (T, B, image_dim, 64, 64), loc.shape
    assert float(result["scale"]) == 1.0
    max_err = float(jnp.max(jnp.abs(loc - ref)))
    # bf16 MXU operands with f32 accumulation vs. f32 HIGHEST-precision ref.
    assert jnp.allclose(loc, ref, atol=3e-2, rtol=3e-2), f"max abs err {max_err}"

    print("KERNEL_OK")
</pallas_src>

<mosaic_0001>
module attributes {stable_mosaic.version = 11 : i64} {
  func.func @_head_kernel(%arg0: i32, %arg1: memref<8x32xf32, #tpu.memory_space<vmem>>, %arg2: memref<8x16xf32, #tpu.memory_space<vmem>>, %arg3: memref<32x32xbf16, #tpu.memory_space<vmem>>, %arg4: memref<16x32xbf16, #tpu.memory_space<vmem>>, %arg5: memref<1x32xf32, #tpu.memory_space<vmem>>, %arg6: memref<32x3200xbf16, #tpu.memory_space<vmem>>, %arg7: memref<1x3200xf32, #tpu.memory_space<vmem>>, %arg8: memref<8x3200xf32, #tpu.memory_space<vmem>>) attributes {dimension_semantics = [#tpu.dimension_semantics<parallel>], iteration_bounds = array<i64: 1>, scalar_prefetch = 0 : i64, scratch_operands = 0 : i64, tpu.core_type = #tpu.core_type<tc>, window_params = [{transform_indices = @transform_0, window_bounds = array<i64: 8, 32>}, {transform_indices = @transform_1, window_bounds = array<i64: 8, 16>}, {pipeline_mode = #tpu.pipeline_mode<synchronous>, transform_indices = @transform_2, window_bounds = array<i64: 32, 32>}, {pipeline_mode = #tpu.pipeline_mode<synchronous>, transform_indices = @transform_3, window_bounds = array<i64: 16, 32>}, {pipeline_mode = #tpu.pipeline_mode<synchronous>, transform_indices = @transform_4, window_bounds = array<i64: 1, 32>}, {pipeline_mode = #tpu.pipeline_mode<synchronous>, transform_indices = @transform_5, window_bounds = array<i64: 32, 3200>}, {pipeline_mode = #tpu.pipeline_mode<synchronous>, transform_indices = @transform_6, window_bounds = array<i64: 1, 3200>}, {transform_indices = @transform_7, window_bounds = array<i64: 8, 3200>}]} {
    %c0 = arith.constant 0 : index
    %c0_0 = arith.constant 0 : index
    %0 = vector.load %arg1[%c0, %c0_0] : memref<8x32xf32, #tpu.memory_space<vmem>>, vector<8x32xf32>
    %1 = arith.truncf %0 : vector<8x32xf32> to vector<8x32xbf16>
    %c0_1 = arith.constant 0 : index
    %c0_2 = arith.constant 0 : index
    %2 = vector.load %arg2[%c0_1, %c0_2] : memref<8x16xf32, #tpu.memory_space<vmem>>, vector<8x16xf32>
    %3 = arith.truncf %2 : vector<8x16xf32> to vector<8x16xbf16>
    %c0_3 = arith.constant 0 : index
    %c0_4 = arith.constant 0 : index
    %4 = vector.load %arg3[%c0_3, %c0_4] : memref<32x32xbf16, #tpu.memory_space<vmem>>, vector<32x32xbf16>
    %cst = arith.constant dense<0.000000e+00> : vector<8x32xf32>
    %5 = tpu.matmul %1, %4, %cst {dimension_numbers = #tpu.dot_dimension_numbers<[1], [0], [0], [1], [0, 0, 1, 1], [], []>} : vector<8x32xbf16>, vector<32x32xbf16>, vector<8x32xf32> -> vector<8x32xf32>
    %c0_5 = arith.constant 0 : index
    %c0_6 = arith.constant 0 : index
    %6 = vector.load %arg4[%c0_5, %c0_6] : memref<16x32xbf16, #tpu.memory_space<vmem>>, vector<16x32xbf16>
    %cst_7 = arith.constant dense<0.000000e+00> : vector<8x32xf32>
    %7 = tpu.matmul %3, %6, %cst_7 {dimension_numbers = #tpu.dot_dimension_numbers<[1], [0], [0], [1], [0, 0, 1, 1], [], []>} : vector<8x16xbf16>, vector<16x32xbf16>, vector<8x32xf32> -> vector<8x32xf32>
    %8 = arith.addf %5, %7 : vector<8x32xf32>
    %c0_8 = arith.constant 0 : index
    %c0_9 = arith.constant 0 : index
    %9 = vector.load %arg5[%c0_8, %c0_9] : memref<1x32xf32, #tpu.memory_space<vmem>>, vector<1x32xf32>
    %10 = vector.broadcast %9 : vector<1x32xf32> to vector<8x32xf32>
    %11 = arith.addf %8, %10 : vector<8x32xf32>
    %cst_10 = arith.constant 0.000000e+00 : f32
    %12 = vector.broadcast %cst_10 : f32 to vector<8x32xf32>
    %13 = arith.maximumf %11, %12 : vector<8x32xf32>
    %14 = arith.truncf %13 : vector<8x32xf32> to vector<8x32xbf16>
    %c0_11 = arith.constant 0 : index
    %c0_12 = arith.constant 0 : index
    %15 = vector.load %arg6[%c0_11, %c0_12] : memref<32x3200xbf16, #tpu.memory_space<vmem>>, vector<32x3200xbf16>
    %cst_13 = arith.constant dense<0.000000e+00> : vector<8x3200xf32>
    %16 = tpu.matmul %14, %15, %cst_13 {dimension_numbers = #tpu.dot_dimension_numbers<[1], [0], [0], [1], [0, 0, 1, 1], [], []>} : vector<8x32xbf16>, vector<32x3200xbf16>, vector<8x3200xf32> -> vector<8x3200xf32>
    %c0_14 = arith.constant 0 : index
    %c0_15 = arith.constant 0 : index
    %17 = vector.load %arg7[%c0_14, %c0_15] : memref<1x3200xf32, #tpu.memory_space<vmem>>, vector<1x3200xf32>
    %18 = vector.broadcast %17 : vector<1x3200xf32> to vector<8x3200xf32>
    %19 = arith.addf %16, %18 : vector<8x3200xf32>
    %cst_16 = arith.constant 0.000000e+00 : f32
    %20 = vector.broadcast %cst_16 : f32 to vector<8x3200xf32>
    %21 = arith.maximumf %19, %20 : vector<8x3200xf32>
    %c0_17 = arith.constant 0 : index
    %c0_18 = arith.constant 0 : index
    %22 = vector.load %arg8[%c0_17, %c0_18] : memref<8x3200xf32, #tpu.memory_space<vmem>>, vector<8x3200xf32>
    tpu.vector_store %arg8[%c0_17, %c0_18], %21 {strides = array<i32>} : memref<8x3200xf32, #tpu.memory_space<vmem>>, vector<8x3200xf32>,
    return
  }
  func.func @transform_0(%arg0: i32) -> (i32, i32) {
    %c0_i32 = arith.constant 0 : i32
    %c0_i32_0 = arith.constant 0 : i32
    return %arg0, %c0_i32 : i32, i32
  }
  func.func @transform_1(%arg0: i32) -> (i32, i32) {
    %c0_i32 = arith.constant 0 : i32
    %c0_i32_0 = arith.constant 0 : i32
    return %arg0, %c0_i32 : i32, i32
  }
  func.func @transform_2(%arg0: i32) -> (i32, i32) {
    %c0_i32 = arith.constant 0 : i32
    %c0_i32_0 = arith.constant 0 : i32
    %c0_i32_1 = arith.constant 0 : i32
    return %c0_i32, %c0_i32_0 : i32, i32
  }
  func.func @transform_3(%arg0: i32) -> (i32, i32) {
    %c0_i32 = arith.constant 0 : i32
    %c0_i32_0 = arith.constant 0 : i32
    %c0_i32_1 = arith.constant 0 : i32
    return %c0_i32, %c0_i32_0 : i32, i32
  }
  func.func @transform_4(%arg0: i32) -> (i32, i32) {
    %c0_i32 = arith.constant 0 : i32
    %c0_i32_0 = arith.constant 0 : i32
    %c0_i32_1 = arith.constant 0 : i32
    return %c0_i32, %c0_i32_0 : i32, i32
  }
  func.func @transform_5(%arg0: i32) -> (i32, i32) {
    %c0_i32 = arith.constant 0 : i32
    %c0_i32_0 = arith.constant 0 : i32
    %c0_i32_1 = arith.constant 0 : i32
    return %c0_i32, %c0_i32_0 : i32, i32
  }
  func.func @transform_6(%arg0: i32) -> (i32, i32) {
    %c0_i32 = arith.constant 0 : i32
    %c0_i32_0 = arith.constant 0 : i32
    %c0_i32_1 = arith.constant 0 : i32
    return %c0_i32, %c0_i32_0 : i32, i32
  }
  func.func @transform_7(%arg0: i32) -> (i32, i32) {
    %c0_i32 = arith.constant 0 : i32
    %c0_i32_0 = arith.constant 0 : i32
    return %arg0, %c0_i32 : i32, i32
  }
}

module attributes {stable_mosaic.version = 11 : i64} {
  func.func @_tap_matmul_kernel(%arg0: i32, %arg1: memref<200x128xf32, #tpu.memory_space<vmem>>, %arg2: memref<128x1664xbf16, #tpu.memory_space<vmem>>, %arg3: memref<200x1664xf32, #tpu.memory_space<vmem>>) attributes {dimension_semantics = [#tpu.dimension_semantics<parallel>], iteration_bounds = array<i64: 1>, scalar_prefetch = 0 : i64, scratch_operands = 0 : i64, tpu.core_type = #tpu.core_type<tc>, window_params = [{transform_indices = @transform_0, window_bounds = array<i64: 200, 128>}, {pipeline_mode = #tpu.pipeline_mode<synchronous>, transform_indices = @transform_1, window_bounds = array<i64: 128, 1664>}, {transform_indices = @transform_2, window_bounds = array<i64: 200, 1664>}]} {
    %c0 = arith.constant 0 : index
    %c0_0 = arith.constant 0 : index
    %0 = vector.load %arg1[%c0, %c0_0] : memref<200x128xf32, #tpu.memory_space<vmem>>, vector<200x128xf32>
    %1 = arith.truncf %0 : vector<200x128xf32> to vector<200x128xbf16>
    %c0_1 = arith.constant 0 : index
    %c0_2 = arith.constant 0 : index
    %2 = vector.load %arg2[%c0_1, %c0_2] : memref<128x1664xbf16, #tpu.memory_space<vmem>>, vector<128x1664xbf16>
    %cst = arith.constant dense<0.000000e+00> : vector<200x1664xf32>
    %3 = tpu.matmul %1, %2, %cst {dimension_numbers = #tpu.dot_dimension_numbers<[1], [0], [0], [1], [0, 0, 1, 1], [], []>} : vector<200x128xbf16>, vector<128x1664xbf16>, vector<200x1664xf32> -> vector<200x1664xf32>
    %c0_3 = arith.constant 0 : index
    %c0_4 = arith.constant 0 : index
    %4 = vector.load %arg3[%c0_3, %c0_4] : memref<200x1664xf32, #tpu.memory_space<vmem>>, vector<200x1664xf32>
    tpu.vector_store %arg3[%c0_3, %c0_4], %3 {strides = array<i32>} : memref<200x1664xf32, #tpu.memory_space<vmem>>, vector<200x1664xf32>,
    return
  }
  func.func @transform_0(%arg0: i32) -> (i32, i32) {
    %c0_i32 = arith.constant 0 : i32
    %c0_i32_0 = arith.constant 0 : i32
    return %arg0, %c0_i32 : i32, i32
  }
  func.func @transform_1(%arg0: i32) -> (i32, i32) {
    %c0_i32 = arith.constant 0 : i32
    %c0_i32_0 = arith.constant 0 : i32
    %c0_i32_1 = arith.constant 0 : i32
    return %c0_i32, %c0_i32_0 : i32, i32
  }
  func.func @transform_2(%arg0: i32) -> (i32, i32) {
    %c0_i32 = arith.constant 0 : i32
    %c0_i32_0 = arith.constant 0 : i32
    return %arg0, %c0_i32 : i32, i32
  }
}

module attributes {stable_mosaic.version = 11 : i64} {
  func.func @_tap_matmul_kernel(%arg0: i32, %arg1: memref<256x64xf32, #tpu.memory_space<vmem>>, %arg2: memref<64x1152xbf16, #tpu.memory_space<vmem>>, %arg3: memref<256x1152xf32, #tpu.memory_space<vmem>>) attributes {dimension_semantics = [#tpu.dimension_semantics<parallel>], iteration_bounds = array<i64: 6>, scalar_prefetch = 0 : i64, scratch_operands = 0 : i64, tpu.core_type = #tpu.core_type<tc>, window_params = [{transform_indices = @transform_0, window_bounds = array<i64: 256, 64>}, {pipeline_mode = #tpu.pipeline_mode<synchronous>, transform_indices = @transform_1, window_bounds = array<i64: 64, 1152>}, {transform_indices = @transform_2, window_bounds = array<i64: 256, 1152>}]} {
    %c0 = arith.constant 0 : index
    %c0_0 = arith.constant 0 : index
    %0 = vector.load %arg1[%c0, %c0_0] : memref<256x64xf32, #tpu.memory_space<vmem>>, vector<256x64xf32>
    %1 = arith.truncf %0 : vector<256x64xf32> to vector<256x64xbf16>
    %c0_1 = arith.constant 0 : index
    %c0_2 = arith.constant 0 : index
    %2 = vector.load %arg2[%c0_1, %c0_2] : memref<64x1152xbf16, #tpu.memory_space<vmem>>, vector<64x1152xbf16>
    %cst = arith.constant dense<0.000000e+00> : vector<256x1152xf32>
    %3 = tpu.matmul %1, %2, %cst {dimension_numbers = #tpu.dot_dimension_numbers<[1], [0], [0], [1], [0, 0, 1, 1], [], []>} : vector<256x64xbf16>, vector<64x1152xbf16>, vector<256x1152xf32> -> vector<256x1152xf32>
    %c0_3 = arith.constant 0 : index
    %c0_4 = arith.constant 0 : index
    %4 = vector.load %arg3[%c0_3, %c0_4] : memref<256x1152xf32, #tpu.memory_space<vmem>>, vector<256x1152xf32>
    tpu.vector_store %arg3[%c0_3, %c0_4], %3 {strides = array<i32>} : memref<256x1152xf32, #tpu.memory_space<vmem>>, vector<256x1152xf32>,
    return
  }
  func.func @transform_0(%arg0: i32) -> (i32, i32) {
    %c0_i32 = arith.constant 0 : i32
    %c0_i32_0 = arith.constant 0 : i32
    return %arg0, %c0_i32 : i32, i32
  }
  func.func @transform_1(%arg0: i32) -> (i32, i32) {
    %c0_i32 = arith.constant 0 : i32
    %c0_i32_0 = arith.constant 0 : i32
    %c0_i32_1 = arith.constant 0 : i32
    return %c0_i32, %c0_i32_0 : i32, i32
  }
  func.func @transform_2(%arg0: i32) -> (i32, i32) {
    %c0_i32 = arith.constant 0 : i32
    %c0_i32_0 = arith.constant 0 : i32
    return %arg0, %c0_i32 : i32, i32
  }
}

module attributes {stable_mosaic.version = 11 : i64} {
  func.func @_tap_matmul_kernel(%arg0: i32, %arg1: memref<256x32xf32, #tpu.memory_space<vmem>>, %arg2: memref<32x128xbf16, #tpu.memory_space<vmem>>, %arg3: memref<256x128xf32, #tpu.memory_space<vmem>>) attributes {dimension_semantics = [#tpu.dimension_semantics<parallel>], iteration_bounds = array<i64: 29>, scalar_prefetch = 0 : i64, scratch_operands = 0 : i64, tpu.core_type = #tpu.core_type<tc>, window_params = [{transform_indices = @transform_0, window_bounds = array<i64: 256, 32>}, {pipeline_mode = #tpu.pipeline_mode<synchronous>, transform_indices = @transform_1, window_bounds = array<i64: 32, 128>}, {transform_indices = @transform_2, window_bounds = array<i64: 256, 128>}]} {
    %c0 = arith.constant 0 : index
    %c0_0 = arith.constant 0 : index
    %0 = vector.load %arg1[%c0, %c0_0] : memref<256x32xf32, #tpu.memory_space<vmem>>, vector<256x32xf32>
    %1 = arith.truncf %0 : vector<256x32xf32> to vector<256x32xbf16>
    %c0_1 = arith.constant 0 : index
    %c0_2 = arith.constant 0 : index
    %2 = vector.load %arg2[%c0_1, %c0_2] : memref<32x128xbf16, #tpu.memory_space<vmem>>, vector<32x128xbf16>
    %cst = arith.constant dense<0.000000e+00> : vector<256x128xf32>
    %3 = tpu.matmul %1, %2, %cst {dimension_numbers = #tpu.dot_dimension_numbers<[1], [0], [0], [1], [0, 0, 1, 1], [], []>} : vector<256x32xbf16>, vector<32x128xbf16>, vector<256x128xf32> -> vector<256x128xf32>
    %c0_3 = arith.constant 0 : index
    %c0_4 = arith.constant 0 : index
    %4 = vector.load %arg3[%c0_3, %c0_4] : memref<256x128xf32, #tpu.memory_space<vmem>>, vector<256x128xf32>
    tpu.vector_store %arg3[%c0_3, %c0_4], %3 {strides = array<i32>} : memref<256x128xf32, #tpu.memory_space<vmem>>, vector<256x128xf32>,
    return
  }
  func.func @transform_0(%arg0: i32) -> (i32, i32) {
    %c0_i32 = arith.constant 0 : i32
    %c0_i32_0 = arith.constant 0 : i32
    return %arg0, %c0_i32 : i32, i32
  }
  func.func @transform_1(%arg0: i32) -> (i32, i32) {
    %c0_i32 = arith.constant 0 : i32
    %c0_i32_0 = arith.constant 0 : i32
    %c0_i32_1 = arith.constant 0 : i32
    return %c0_i32, %c0_i32_0 : i32, i32
  }
  func.func @transform_2(%arg0: i32) -> (i32, i32) {
    %c0_i32 = arith.constant 0 : i32
    %c0_i32_0 = arith.constant 0 : i32
    return %arg0, %c0_i32 : i32, i32
  }
}

</mosaic_0001>

<llo_original>
// kernel: image_decoder_forward.4
$region0: #{image_decoder_forward.4}
  #allocation0 [shape = 'u32[]', space=smem, size = 0x4, offset = 0x4, fixed_abs, tag = 'smem constant byte address 0x4 - core index']
  #allocation1 [shape = 'u32[72,128]{1,0:T(1,128)}', space=vmem, size = 0x9000, scoped, tag = 'internal scratch']
  %s0 = inlined_call_operand.hbm [shape: f32[8,32], index: 0, kind: input, shape index: {}]
  %s1 = inlined_call_operand.hbm [shape: f32[8,16], index: 1, kind: input, shape index: {}]
  %s2 = inlined_call_operand.vmem [shape: bf16[32,32], index: 2, kind: input, shape index: {}]
  %s3 = inlined_call_operand.vmem [shape: bf16[16,32], index: 3, kind: input, shape index: {}]
  %s4 = inlined_call_operand.hbm [shape: f32[1,32], index: 4, kind: input, shape index: {}]
  %s5 = inlined_call_operand.vmem [shape: bf16[32,3200], index: 5, kind: input, shape index: {}]
  %s6 = inlined_call_operand.vmem [shape: f32[1,3200], index: 6, kind: input, shape index: {}]
  %s7 = inlined_call_operand.vmem [shape: f32[8,3200], index: 7, kind: output, shape index: {}]
  %s8 = sld [smem:[#allocation0]]
  $region50: #{image_decoder_forward.4} parent=0
    _
  %s10 = ssub.s32 1, %s8
  %s11 = scalar_select 0, %s10, %s8
  $region1: #{image_decoder_forward.4} parent=0
    #allocation2 [shape = 'u8[4096]{0}', space=vmem, size = 0x1000, scoped, tag = 'input window, operand 0, single buffered']
    #allocation3 [shape = 's32[1]{0}', space=sflag, size = 0x4, scoped, tag = 'scoped memory for image_decoder_forward.4']
    #allocation4 [shape = 'u8[4096]{0}', space=vmem, size = 0x1000, scoped, tag = 'input window, operand 1, single buffered']
    #allocation5 [shape = 's32[1]{0}', space=sflag, size = 0x4, scoped, tag = 'scoped memory for image_decoder_forward.4']
    #allocation6 [shape = 'u8[512]{0}', space=vmem, size = 0x400, scoped, tag = 'input window, operand 4, single buffered']
    %12 = vsyncpa [#allocation3], 0
    %13 = vsyncpa [#allocation5], 0
    // Predicated region
    $region2: #{image_decoder_forward.4} parent=1 // pred_check
      _
    $region3: #{image_decoder_forward.4} parent=1 // pred_check_branch
      %15 = sbr.rel (0) target = $region5
    $region4: #{image_decoder_forward.4} parent=1 // pred_region
      %17 = vsyncadd [#allocation3], 0
      %s19 = sshll.u32 %s0, 4
      %s20 = int_to_ptr.hbm [resolvable:$true] %s19
      %s21 = sshll.u32 [#allocation2], 4
      %s22 = int_to_ptr.vmem [resolvable:$true] %s21
      %24 = dma.hbm_to_vmem [thread:$0]  %s20, 128, %s22, [#allocation3]
    $region5: #{image_decoder_forward.4} parent=1 // pred_fallthru
      _
    // Predicated region
    $region6: #{image_decoder_forward.4} parent=1 // pred_check
      _
    $region7: #{image_decoder_forward.4} parent=1 // pred_check_branch
      %26 = sbr.rel (0) target = $region9
    $region8: #{image_decoder_forward.4} parent=1 // pred_region
      %28 = vsyncadd [#allocation5], 0
      %s30 = sshll.u32 %s1, 4
      %s31 = int_to_ptr.hbm [resolvable:$true] %s30
      %s32 = sshll.u32 [#allocation4], 4
      %s33 = int_to_ptr.vmem [resolvable:$true] %s32
      %35 = dma.hbm_to_vmem [thread:$0]  %s31, 128, %s33, [#allocation5]
    $region9: #{image_decoder_forward.4} parent=1 // pred_fallthru
      _
    // Predicated region
    $region10: #{image_decoder_forward.4} parent=1 // pred_check
      _
    $region11: #{image_decoder_forward.4} parent=1 // pred_check_branch
      %37 = sbr.rel (0) target = $region13
    $region12: #{image_decoder_forward.4} parent=1 // pred_region
      _
    $region13: #{image_decoder_forward.4} parent=1 // pred_fallthru
      _
    // Predicated region
    $region14: #{image_decoder_forward.4} parent=1 // pred_check
      _
    $region15: #{image_decoder_forward.4} parent=1 // pred_check_branch
      %39 = sbr.rel (0) target = $region17
    $region16: #{image_decoder_forward.4} parent=1 // pred_region
      _
    $region17: #{image_decoder_forward.4} parent=1 // pred_fallthru
      _
    // Predicated region
    $region18: #{image_decoder_forward.4} parent=1 // pred_check
      _
    $region19: #{image_decoder_forward.4} parent=1 // pred_check_branch
      %41 = sbr.rel (0) target = $region21
    $region20: #{image_decoder_forward.4} parent=1 // pred_region
      %43 = vsyncadd [#allocation5], 0
      %s45 = sshll.u32 %s4, 4
      %s46 = int_to_ptr.hbm [resolvable:$true] %s45
      %s47 = sshll.u32 [#allocation6], 4
      %s48 = int_to_ptr.vmem [resolvable:$true] %s47
      %50 = dma.hbm_to_vmem [thread:$0]  %s46, 16, %s48, [#allocation5]
    $region21: #{image_decoder_forward.4} parent=1 // pred_fallthru
      _
    // Predicated region
    $region22: #{image_decoder_forward.4} parent=1 // pred_check
      _
    $region23: #{image_decoder_forward.4} parent=1 // pred_check_branch
      %52 = sbr.rel (0) target = $region25
    $region24: #{image_decoder_forward.4} parent=1 // pred_region
      _
    $region25: #{image_decoder_forward.4} parent=1 // pred_fallthru
      _
    // Predicated region
    $region26: #{image_decoder_forward.4} parent=1 // pred_check
      _
    $region27: #{image_decoder_forward.4} parent=1 // pred_check_branch
      %54 = sbr.rel (0) target = $region29
    $region28: #{image_decoder_forward.4} parent=1 // pred_region
      _
    $region29: #{image_decoder_forward.4} parent=1 // pred_fallthru
      _
    // Predicated region
    $region30: #{image_decoder_forward.4} parent=1 // pred_check
      _
    $region31: #{image_decoder_forward.4} parent=1 // pred_check_branch
      %56 = sbr.rel (0) target = $region33
    $region32: #{image_decoder_forward.4} parent=1 // pred_region
      %58 = dma.done [#allocation3], 128
    $region33: #{image_decoder_forward.4} parent=1 // pred_fallthru
      _
    // Predicated region
    $region34: #{image_decoder_forward.4} parent=1 // pred_check
      _
    $region35: #{image_decoder_forward.4} parent=1 // pred_check_branch
      %60 = sbr.rel (0) target = $region37
    $region36: #{image_decoder_forward.4} parent=1 // pred_region
      %62 = dma.done [#allocation5], 128
    $region37: #{image_decoder_forward.4} parent=1 // pred_fallthru
      _
    // Predicated region
    $region38: #{image_decoder_forward.4} parent=1 // pred_check
      _
    $region39: #{image_decoder_forward.4} parent=1 // pred_check_branch
      %64 = sbr.rel (0) target = $region41
    $region40: #{image_decoder_forward.4} parent=1 // pred_region
      %66 = dma.done [#allocation5], 16
    $region41: #{image_decoder_forward.4} parent=1 // pred_fallthru
      _
    %v68 = vld [vmem:[#allocation2] sm:$0xff]
    %v69 = vpack.c.bf16 %v68, %v68
    %v70 = vld [vmem:[#allocation4] sm:$0xff]
    %v71 = vpack.c.bf16 %v70, %v70
    %v72 = vld [vmem:[%s2] sm:$0xf]
    %v73 = vld [vmem:[%s2 + $0x4] sm:$0xf]
    %v74 = vld [vmem:[%s2 + $0x8] sm:$0xf]
    %v75 = vld [vmem:[%s2 + $0xc] sm:$0xf]
    %v76 = vld [vmem:[%s3] sm:$0xf]
    %v77 = vld [vmem:[%s3 + $0x4] sm:$0xf]
    %v80 = vunpack.c.l.b16 %v76
    %v81 = vunpack.c.l.b16 %v77
    %v82 = vpack.c.b16 %v81, %v80
    %vm84 = vcmask 130048
    %v86 = vsel %vm84, %v71, 0
    %88 = vmatpush.bf16.msra.mxu0 0
    %89 = vmatpush.bf16.msra.mxu0 0
    %90 = vmatpush.bf16.msra.mxu0 0
    %91 = vmatpush.bf16.msra.mxu0 0
    %92 = vmatpush.bf16.msra.mxu0 0
    %93 = vmatpush.bf16.msra.mxu0 0
    %94 = vmatpush.bf16.msra.mxu0 0
    %95 = vmatpush.bf16.msra.mxu0 %v82
    %96 = vmatmul.bf16.gmra.mxu0 %v86
    %v97 = vpop.f32.mrf.mxu0
    %v98 = vadd.f32 0.0, %v97
    %v99 = vpop.f32.mrf.mxu0
    %100 = vdwg.mxu0
    %v105 = vunpack.c.l.b16 %v72
    %v106 = vunpack.c.l.b16 %v73
    %v107 = vunpack.c.l.b16 %v74
    %v108 = vunpack.c.l.b16 %v75
    %v109 = vpack.c.b16 %v106, %v105
    %v110 = vpack.c.b16 %v108, %v107
    %vm113 = vcmask 261120
    %v115 = vsel %vm113, %v69, 0
    %117 = vmatpush.bf16.msra.mxu0 0
    %118 = vmatpush.bf16.msra.mxu0 0
    %119 = vmatpush.bf16.msra.mxu0 0
    %120 = vmatpush.bf16.msra.mxu0 0
    %121 = vmatpush.bf16.msra.mxu0 0
    %122 = vmatpush.bf16.msra.mxu0 0
    %123 = vmatpush.bf16.msra.mxu0 %v110
    %124 = vmatpush.bf16.msra.mxu0 %v109
    %125 = vmatmul.bf16.gmra.mxu0 %v115
    %v126 = vpop.f32.mrf.mxu0
    %v127 = vadd.f32 %v98, %v126
    %v128 = vpop.f32.mrf.mxu0
    %129 = vdwg.mxu0
    %v130 = vld [vmem:[#allocation6] sm:$0x1]
    %v132 = vperm.slane %v130, 0
    %v134 = vadd.f32 %v127, %v132
    %v135 = vmax.f32 %v134, 0.0
    %v136 = vpack.c.bf16 %v135, %v135
    %v137 = vld [vmem:[%s5] sm:$0xff]
    %v138 = vld [vmem:[%s5 + $0x8] sm:$0xff]
    %v139 = vld [vmem:[%s5 + $0x10] sm:$0xff]
    %v140 = vld [vmem:[%s5 + $0x18] sm:$0xff]
    %v141 = vld [vmem:[%s5 + $0x20] sm:$0xff]
    %v142 = vld [vmem:[%s5 + $0x28] sm:$0xff]
    %v143 = vld [vmem:[%s5 + $0x30] sm:$0xff]
    %v144 = vld [vmem:[%s5 + $0x38] sm:$0xff]
    %v145 = vld [vmem:[%s5 + $0x40] sm:$0xff]
    %v146 = vld [vmem:[%s5 + $0x48] sm:$0xff]
    %v147 = vld [vmem:[%s5 + $0x50] sm:$0xff]
    %v148 = vld [vmem:[%s5 + $0x58] sm:$0xff]
    %v149 = vld [vmem:[%s5 + $0x60] sm:$0xf]
    %v150 = vld [vmem:[%s5 + $0x64] sm:$0xff]
    %v151 = vld [vmem:[%s5 + $0x6c] sm:$0xff]
    %v152 = vld [vmem:[%s5 + $0x74] sm:$0xff]
    %v153 = vld [vmem:[%s5 + $0x7c] sm:$0xff]
    %v154 = vld [vmem:[%s5 + $0x84] sm:$0xff]
    %v155 = vld [vmem:[%s5 + $0x8c] sm:$0xff]
    %v156 = vld [vmem:[%s5 + $0x94] sm:$0xff]
    %v157 = vld [vmem:[%s5 + $0x9c] sm:$0xff]
    %v158 = vld [vmem:[%s5 + $0xa4] sm:$0xff]
    %v159 = vld [vmem:[%s5 + $0xac] sm:$0xff]
    %v160 = vld [vmem:[%s5 + $0xb4] sm:$0xff]
    %v161 = vld [vmem:[%s5 + $0xbc] sm:$0xff]
    %v162 = vld [vmem:[%s5 + $0xc4] sm:$0xf]
    %v163 = vld [vmem:[%s5 + $0xc8] sm:$0xff]
    %v164 = vld [vmem:[%s5 + $0xd0] sm:$0xff]
    %v165 = vld [vmem:[%s5 + $0xd8] sm:$0xff]
    %v166 = vld [vmem:[%s5 + $0xe0] sm:$0xff]
    %v167 = vld [vmem:[%s5 + $0xe8] sm:$0xff]
    %v168 = vld [vmem:[%s5 + $0xf0] sm:$0xff]
    %v169 = vld [vmem:[%s5 + $0xf8] sm:$0xff]
    %v170 = vld [vmem:[%s5 + $0x100] sm:$0xff]
    %v171 = vld [vmem:[%s5 + $0x108] sm:$0xff]
    %v172 = vld [vmem:[%s5 + $0x110] sm:$0xff]
    %v173 = vld [vmem:[%s5 + $0x118] sm:$0xff]
    %v174 = vld [vmem:[%s5 + $0x120] sm:$0xff]
    %v175 = vld [vmem:[%s5 + $0x128] sm:$0xf]
    %v176 = vld [vmem:[%s5 + $0x12c] sm:$0xff]
    %v177 = vld [vmem:[%s5 + $0x134] sm:$0xff]
    %v178 = vld [vmem:[%s5 + $0x13c] sm:$0xff]
    %v179 = vld [vmem:[%s5 + $0x144] sm:$0xff]
    %v180 = vld [vmem:[%s5 + $0x14c] sm:$0xff]
    %v181 = vld [vmem:[%s5 + $0x154] sm:$0xff]
    %v182 = vld [vmem:[%s5 + $0x15c] sm:$0xff]
    %v183 = vld [vmem:[%s5 + $0x164] sm:$0xff]
    %v184 = vld [vmem:[%s5 + $0x16c] sm:$0xff]
    %v185 = vld [vmem:[%s5 + $0x174] sm:$0xff]
    %v186 = vld [vmem:[%s5 + $0x17c] sm:$0xff]
    %v187 = vld [vmem:[%s5 + $0x184] sm:$0xff]
    %v188 = vld [vmem:[%s5 + $0x18c] sm:$0xf]
    %v189 = vld [vmem:[%s6] sm:$0xff]
    %v190 = vld [vmem:[%s6 + $0x8] sm:$0xff]
    %v191 = vld [vmem:[%s6 + $0x10] sm:$0xff]
    %v192 = vld [vmem:[%s6 + $0x18] sm:$0x1]
    %v197 = vperm.slane %v189, 0
    %v198 = vperm.slane %v189, 1
    %v199 = vperm.slane %v189, 2
    %v200 = vperm.slane %v189, 3
    %v201 = vperm.slane %v189, 4
    %v202 = vperm.slane %v189, 5
    %v203 = vperm.slane %v189, 6
    %v204 = vperm.slane %v189, 7
    %v205 = vperm.slane %v190, 0
    %v206 = vperm.slane %v190, 1
    %v207 = vperm.slane %v190, 2
    %v208 = vperm.slane %v190, 3
    %v209 = vperm.slane %v190, 4
    %v210 = vperm.slane %v190, 5
    %v211 = vperm.slane %v190, 6
    %v212 = vperm.slane %v190, 7
    %v213 = vperm.slane %v191, 0
    %v214 = vperm.slane %v191, 1
    %v215 = vperm.slane %v191, 2
    %v216 = vperm.slane %v191, 3
    %v217 = vperm.slane %v191, 4
    %v218 = vperm.slane %v191, 5
    %v219 = vperm.slane %v191, 6
    %v220 = vperm.slane %v191, 7
    %v221 = vperm.slane %v192, 0
    %v299 = vunpack.c.l.b16 %v137
    %v300 = vunpack.c.h.b16 %v137
    %v301 = vunpack.c.l.b16 %v138
    %v302 = vunpack.c.h.b16 %v138
    %v303 = vunpack.c.l.b16 %v139
    %v304 = vunpack.c.h.b16 %v139
    %v305 = vunpack.c.l.b16 %v140
    %v306 = vunpack.c.h.b16 %v140
    %v307 = vunpack.c.l.b16 %v141
    %v308 = vunpack.c.h.b16 %v141
    %v309 = vunpack.c.l.b16 %v142
    %v310 = vunpack.c.h.b16 %v142
    %v311 = vunpack.c.l.b16 %v143
    %v312 = vunpack.c.h.b16 %v143
    %v313 = vunpack.c.l.b16 %v144
    %v314 = vunpack.c.h.b16 %v144
    %v315 = vunpack.c.l.b16 %v145
    %v316 = vunpack.c.h.b16 %v145
    %v317 = vunpack.c.l.b16 %v146
    %v318 = vunpack.c.h.b16 %v146
    %v319 = vunpack.c.l.b16 %v147
    %v320 = vunpack.c.h.b16 %v147
    %v321 = vunpack.c.l.b16 %v148
    %v322 = vunpack.c.h.b16 %v148
    %v323 = vunpack.c.l.b16 %v149
    %v324 = vunpack.c.l.b16 %v150
    %v325 = vunpack.c.h.b16 %v150
    %v326 = vunpack.c.l.b16 %v151
    %v327 = vunpack.c.h.b16 %v151
    %v328 = vunpack.c.l.b16 %v152
    %v329 = vunpack.c.h.b16 %v152
    %v330 = vunpack.c.l.b16 %v153
    %v331 = vunpack.c.h.b16 %v153
    %v332 = vunpack.c.l.b16 %v154
    %v333 = vunpack.c.h.b16 %v154
    %v334 = vunpack.c.l.b16 %v155
    %v335 = vunpack.c.h.b16 %v155
    %v336 = vunpack.c.l.b16 %v156
    %v337 = vunpack.c.h.b16 %v156
    %v338 = vunpack.c.l.b16 %v157
    %v339 = vunpack.c.h.b16 %v157
    %v340 = vunpack.c.l.b16 %v158
    %v341 = vunpack.c.h.b16 %v158
    %v342 = vunpack.c.l.b16 %v159
    %v343 = vunpack.c.h.b16 %v159
    %v344 = vunpack.c.l.b16 %v160
    %v345 = vunpack.c.h.b16 %v160
    %v346 = vunpack.c.l.b16 %v161
    %v347 = vunpack.c.h.b16 %v161
    %v348 = vunpack.c.l.b16 %v162
    %v349 = vunpack.c.l.b16 %v163
    %v350 = vunpack.c.h.b16 %v163
    %v351 = vunpack.c.l.b16 %v164
    %v352 = vunpack.c.h.b16 %v164
    %v353 = vunpack.c.l.b16 %v165
    %v354 = vunpack.c.h.b16 %v165
    %v355 = vunpack.c.l.b16 %v166
    %v356 = vunpack.c.h.b16 %v166
    %v357 = vunpack.c.l.b16 %v167
    %v358 = vunpack.c.h.b16 %v167
    %v359 = vunpack.c.l.b16 %v168
    %v360 = vunpack.c.h.b16 %v168
    %v361 = vunpack.c.l.b16 %v169
    %v362 = vunpack.c.h.b16 %v169
    %v363 = vunpack.c.l.b16 %v170
    %v364 = vunpack.c.h.b16 %v170
    %v365 = vunpack.c.l.b16 %v171
    %v366 = vunpack.c.h.b16 %v171
    %v367 = vunpack.c.l.b16 %v172
    %v368 = vunpack.c.h.b16 %v172
    %v369 = vunpack.c.l.b16 %v173
    %v370 = vunpack.c.h.b16 %v173
    %v371 = vunpack.c.l.b16 %v174
    %v372 = vunpack.c.h.b16 %v174
    %v373 = vunpack.c.l.b16 %v175
    %v374 = vunpack.c.l.b16 %v176
    %v375 = vunpack.c.h.b16 %v176
    %v376 = vunpack.c.l.b16 %v177
    %v377 = vunpack.c.h.b16 %v177
    %v378 = vunpack.c.l.b16 %v178
    %v379 = vunpack.c.h.b16 %v178
    %v380 = vunpack.c.l.b16 %v179
    %v381 = vunpack.c.h.b16 %v179
    %v382 = vunpack.c.l.b16 %v180
    %v383 = vunpack.c.h.b16 %v180
    %v384 = vunpack.c.l.b16 %v181
    %v385 = vunpack.c.h.b16 %v181
    %v386 = vunpack.c.l.b16 %v182
    %v387 = vunpack.c.h.b16 %v182
    %v388 = vunpack.c.l.b16 %v183
    %v389 = vunpack.c.h.b16 %v183
    %v390 = vunpack.c.l.b16 %v184
    %v391 = vunpack.c.h.b16 %v184
    %v392 = vunpack.c.l.b16 %v185
    %v393 = vunpack.c.h.b16 %v185
    %v394 = vunpack.c.l.b16 %v186
    %v395 = vunpack.c.h.b16 %v186
    %v396 = vunpack.c.l.b16 %v187
    %v397 = vunpack.c.h.b16 %v187
    %v398 = vunpack.c.l.b16 %v188
    %v399 = vpack.c.b16 %v324, %v299
    %v400 = vpack.c.b16 %v325, %v300
    %v401 = vpack.c.b16 %v326, %v301
    %v402 = vpack.c.b16 %v327, %v302
    %v403 = vpack.c.b16 %v328, %v303
    %v404 = vpack.c.b16 %v329, %v304
    %v405 = vpack.c.b16 %v330, %v305
    %v406 = vpack.c.b16 %v331, %v306
    %v407 = vpack.c.b16 %v332, %v307
    %v408 = vpack.c.b16 %v333, %v308
    %v409 = vpack.c.b16 %v334, %v309
    %v410 = vpack.c.b16 %v335, %v310
    %v411 = vpack.c.b16 %v336, %v311
    %v412 = vpack.c.b16 %v337, %v312
    %v413 = vpack.c.b16 %v338, %v313
    %v414 = vpack.c.b16 %v339, %v314
    %v415 = vpack.c.b16 %v340, %v315
    %v416 = vpack.c.b16 %v341, %v316
    %v417 = vpack.c.b16 %v342, %v317
    %v418 = vpack.c.b16 %v343, %v318
    %v419 = vpack.c.b16 %v344, %v319
    %v420 = vpack.c.b16 %v345, %v320
    %v421 = vpack.c.b16 %v346, %v321
    %v422 = vpack.c.b16 %v347, %v322
    %v423 = vpack.c.b16 %v348, %v323
    %v424 = vpack.c.b16 %v374, %v349
    %v425 = vpack.c.b16 %v375, %v350
    %v426 = vpack.c.b16 %v376, %v351
    %v427 = vpack.c.b16 %v377, %v352
    %v428 = vpack.c.b16 %v378, %v353
    %v429 = vpack.c.b16 %v379, %v354
    %v430 = vpack.c.b16 %v380, %v355
    %v431 = vpack.c.b16 %v381, %v356
    %v432 = vpack.c.b16 %v382, %v357
    %v433 = vpack.c.b16 %v383, %v358
    %v434 = vpack.c.b16 %v384, %v359
    %v435 = vpack.c.b16 %v385, %v360
    %v436 = vpack.c.b16 %v386, %v361
    %v437 = vpack.c.b16 %v387, %v362
    %v438 = vpack.c.b16 %v388, %v363
    %v439 = vpack.c.b16 %v389, %v364
    %v440 = vpack.c.b16 %v390, %v365
    %v441 = vpack.c.b16 %v391, %v366
    %v442 = vpack.c.b16 %v392, %v367
    %v443 = vpack.c.b16 %v393, %v368
    %v444 = vpack.c.b16 %v394, %v369
    %v445 = vpack.c.b16 %v395, %v370
    %v446 = vpack.c.b16 %v396, %v371
    %v447 = vpack.c.b16 %v397, %v372
    %v448 = vpack.c.b16 %v398, %v373
    %v500 = vsel %vm113, %v136, 0
    %502 = vmatpush.bf16.msra.mxu0 0
    %503 = vmatpush.bf16.msra.mxu0 0
    %504 = vmatpush.bf16.msra.mxu0 0
    %505 = vmatpush.bf16.msra.mxu0 0
    %506 = vmatpush.bf16.msra.mxu0 0
    %507 = vmatpush.bf16.msra.mxu0 0
    %508 = vmatpush.bf16.msra.mxu0 %v424
    %509 = vmatpush.bf16.msra.mxu0 %v399
    %510 = vmatmul.bf16.gmra.mxu0 %v500
    %v511 = vpop.f32.mrf.mxu0
    %v512 = vadd.f32 %v197, %v511
    %v513 = vpop.f32.mrf.mxu0
    %514 = vdwg.mxu0
    %515 = vmatpush.bf16.msra.mxu0 0
    %516 = vmatpush.bf16.msra.mxu0 0
    %517 = vmatpush.bf16.msra.mxu0 0
    %518 = vmatpush.bf16.msra.mxu0 0
    %519 = vmatpush.bf16.msra.mxu0 0
    %520 = vmatpush.bf16.msra.mxu0 0
    %521 = vmatpush.bf16.msra.mxu0 %v425
    %522 = vmatpush.bf16.msra.mxu0 %v400
    %523 = vmatmul.bf16.gmra.mxu0 %v500
    %v524 = vpop.f32.mrf.mxu0
    %v525 = vadd.f32 %v198, %v524
    %v526 = vpop.f32.mrf.mxu0
    %527 = vdwg.mxu0
    %528 = vmatpush.bf16.msra.mxu0 0
    %529 = vmatpush.bf16.msra.mxu0 0
    %530 = vmatpush.bf16.msra.mxu0 0
    %531 = vmatpush.bf16.msra.mxu0 0
    %532 = vmatpush.bf16.msra.mxu0 0
    %533 = vmatpush.bf16.msra.mxu0 0
    %534 = vmatpush.bf16.msra.mxu0 %v426
    %535 = vmatpush.bf16.msra.mxu0 %v401
    %536 = vmatmul.bf16.gmra.mxu0 %v500
    %v537 = vpop.f32.mrf.mxu0
    %v538 = vadd.f32 %v199, %v537
    %v539 = vpop.f32.mrf.mxu0
    %540 = vdwg.mxu0
    %541 = vmatpush.bf16.msra.mxu0 0
    %542 = vmatpush.bf16.msra.mxu0 0
    %543 = vmatpush.bf16.msra.mxu0 0
    %544 = vmatpush.bf16.msra.mxu0 0
    %545 = vmatpush.bf16.msra.mxu0 0
    %546 = vmatpush.bf16.msra.mxu0 0
    %547 = vmatpush.bf16.msra.mxu0 %v427
    %548 = vmatpush.bf16.msra.mxu0 %v402
    %549 = vmatmul.bf16.gmra.mxu0 %v500
    %v550 = vpop.f32.mrf.mxu0
    %v551 = vadd.f32 %v200, %v550
    %v552 = vpop.f32.mrf.mxu0
    %553 = vdwg.mxu0
    %554 = vmatpush.bf16.msra.mxu0 0
    %555 = vmatpush.bf16.msra.mxu0 0
    %556 = vmatpush.bf16.msra.mxu0 0
    %557 = vmatpush.bf16.msra.mxu0 0
    %558 = vmatpush.bf16.msra.mxu0 0
    %559 = vmatpush.bf16.msra.mxu0 0
    %560 = vmatpush.bf16.msra.mxu0 %v428
    %561 = vmatpush.bf16.msra.mxu0 %v403
    %562 = vmatmul.bf16.gmra.mxu0 %v500
    %v563 = vpop.f32.mrf.mxu0
    %v564 = vadd.f32 %v201, %v563
    %v565 = vpop.f32.mrf.mxu0
    %566 = vdwg.mxu0
    %567 = vmatpush.bf16.msra.mxu0 0
    %568 = vmatpush.bf16.msra.mxu0 0
    %569 = vmatpush.bf16.msra.mxu0 0
    %570 = vmatpush.bf16.msra.mxu0 0
    %571 = vmatpush.bf16.msra.mxu0 0
    %572 = vmatpush.bf16.msra.mxu0 0
    %573 = vmatpush.bf16.msra.mxu0 %v429
    %574 = vmatpush.bf16.msra.mxu0 %v404
    %575 = vmatmul.bf16.gmra.mxu0 %v500
    %v576 = vpop.f32.mrf.mxu0
    %v577 = vadd.f32 %v202, %v576
    %v578 = vpop.f32.mrf.mxu0
    %579 = vdwg.mxu0
    %580 = vmatpush.bf16.msra.mxu0 0
    %581 = vmatpush.bf16.msra.mxu0 0
    %582 = vmatpush.bf16.msra.mxu0 0
    %583 = vmatpush.bf16.msra.mxu0 0
    %584 = vmatpush.bf16.msra.mxu0 0
    %585 = vmatpush.bf16.msra.mxu0 0
    %586 = vmatpush.bf16.msra.mxu0 %v430
    %587 = vmatpush.bf16.msra.mxu0 %v405
    %588 = vmatmul.bf16.gmra.mxu0 %v500
    %v589 = vpop.f32.mrf.mxu0
    %v590 = vadd.f32 %v203, %v589
    %v591 = vpop.f32.mrf.mxu0
    %592 = vdwg.mxu0
    %593 = vmatpush.bf16.msra.mxu0 0
    %594 = vmatpush.bf16.msra.mxu0 0
    %595 = vmatpush.bf16.msra.mxu0 0
    %596 = vmatpush.bf16.msra.mxu0 0
    %597 = vmatpush.bf16.msra.mxu0 0
    %598 = vmatpush.bf16.msra.mxu0 0
    %599 = vmatpush.bf16.msra.mxu0 %v431
    %600 = vmatpush.bf16.msra.mxu0 %v406
    %601 = vmatmul.bf16.gmra.mxu0 %v500
    %v602 = vpop.f32.mrf.mxu0
    %v603 = vadd.f32 %v204, %v602
    %v604 = vpop.f32.mrf.mxu0
    %605 = vdwg.mxu0
    %606 = vmatpush.bf16.msra.mxu0 0
    %607 = vmatpush.bf16.msra.mxu0 0
    %608 = vmatpush.bf16.msra.mxu0 0
    %609 = vmatpush.bf16.msra.mxu0 0
    %610 = vmatpush.bf16.msra.mxu0 0
    %611 = vmatpush.bf16.msra.mxu0 0
    %612 = vmatpush.bf16.msra.mxu0 %v432
    %613 = vmatpush.bf16.msra.mxu0 %v407
    %614 = vmatmul.bf16.gmra.mxu0 %v500
    %v615 = vpop.f32.mrf.mxu0
    %v616 = vadd.f32 %v205, %v615
    %v617 = vpop.f32.mrf.mxu0
    %618 = vdwg.mxu0
    %619 = vmatpush.bf16.msra.mxu0 0
    %620 = vmatpush.bf16.msra.mxu0 0
    %621 = vmatpush.bf16.msra.mxu0 0
    %622 = vmatpush.bf16.msra.mxu0 0
    %623 = vmatpush.bf16.msra.mxu0 0
    %624 = vmatpush.bf16.msra.mxu0 0
    %625 = vmatpush.bf16.msra.mxu0 %v433
    %626 = vmatpush.bf16.msra.mxu0 %v408
    %627 = vmatmul.bf16.gmra.mxu0 %v500
    %v628 = vpop.f32.mrf.mxu0
    %v629 = vadd.f32 %v206, %v628
    %v630 = vpop.f32.mrf.mxu0
    %631 = vdwg.mxu0
    %632 = vmatpush.bf16.msra.mxu0 0
    %633 = vmatpush.bf16.msra.mxu0 0
    %634 = vmatpush.bf16.msra.mxu0 0
    %635 = vmatpush.bf16.msra.mxu0 0
    %636 = vmatpush.bf16.msra.mxu0 0
    %637 = vmatpush.bf16.msra.mxu0 0
    %638 = vmatpush.bf16.msra.mxu0 %v434
    %639 = vmatpush.bf16.msra.mxu0 %v409
    %640 = vmatmul.bf16.gmra.mxu0 %v500
    %v641 = vpop.f32.mrf.mxu0
    %v642 = vadd.f32 %v207, %v641
    %v643 = vpop.f32.mrf.mxu0
    %644 = vdwg.mxu0
    %645 = vmatpush.bf16.msra.mxu0 0
    %646 = vmatpush.bf16.msra.mxu0 0
    %647 = vmatpush.bf16.msra.mxu0 0
    %648 = vmatpush.bf16.msra.mxu0 0
    %649 = vmatpush.bf16.msra.mxu0 0
    %650 = vmatpush.bf16.msra.mxu0 0
    %651 = vmatpush.bf16.msra.mxu0 %v435
    %652 = vmatpush.bf16.msra.mxu0 %v410
    %653 = vmatmul.bf16.gmra.mxu0 %v500
    %v654 = vpop.f32.mrf.mxu0
    %v655 = vadd.f32 %v208, %v654
    %v656 = vpop.f32.mrf.mxu0
    %657 = vdwg.mxu0
    %658 = vmatpush.bf16.msra.mxu0 0
    %659 = vmatpush.bf16.msra.mxu0 0
    %660 = vmatpush.bf16.msra.mxu0 0
    %661 = vmatpush.bf16.msra.mxu0 0
    %662 = vmatpush.bf16.msra.mxu0 0
    %663 = vmatpush.bf16.msra.mxu0 0
    %664 = vmatpush.bf16.msra.mxu0 %v436
    %665 = vmatpush.bf16.msra.mxu0 %v411
    %666 = vmatmul.bf16.gmra.mxu0 %v500
    %v667 = vpop.f32.mrf.mxu0
    %v668 = vadd.f32 %v209, %v667
    %v669 = vpop.f32.mrf.mxu0
    %670 = vdwg.mxu0
    %671 = vmatpush.bf16.msra.mxu0 0
    %672 = vmatpush.bf16.msra.mxu0 0
    %673 = vmatpush.bf16.msra.mxu0 0
    %674 = vmatpush.bf16.msra.mxu0 0
    %675 = vmatpush.bf16.msra.mxu0 0
    %676 = vmatpush.bf16.msra.mxu0 0
    %677 = vmatpush.bf16.msra.mxu0 %v437
    %678 = vmatpush.bf16.msra.mxu0 %v412
    %679 = vmatmul.bf16.gmra.mxu0 %v500
    %v680 = vpop.f32.mrf.mxu0
    %v681 = vadd.f32 %v210, %v680
    %v682 = vpop.f32.mrf.mxu0
    %683 = vdwg.mxu0
    %684 = vmatpush.bf16.msra.mxu0 0
    %685 = vmatpush.bf16.msra.mxu0 0
    %686 = vmatpush.bf16.msra.mxu0 0
    %687 = vmatpush.bf16.msra.mxu0 0
    %688 = vmatpush.bf16.msra.mxu0 0
    %689 = vmatpush.bf16.msra.mxu0 0
    %690 = vmatpush.bf16.msra.mxu0 %v438
    %691 = vmatpush.bf16.msra.mxu0 %v413
    %692 = vmatmul.bf16.gmra.mxu0 %v500
    %v693 = vpop.f32.mrf.mxu0
    %v694 = vadd.f32 %v211, %v693
    %v695 = vpop.f32.mrf.mxu0
    %696 = vdwg.mxu0
    %697 = vmatpush.bf16.msra.mxu0 0
    %698 = vmatpush.bf16.msra.mxu0 0
    %699 = vmatpush.bf16.msra.mxu0 0
    %700 = vmatpush.bf16.msra.mxu0 0
    %701 = vmatpush.bf16.msra.mxu0 0
    %702 = vmatpush.bf16.msra.mxu0 0
    %703 = vmatpush.bf16.msra.mxu0 %v439
    %704 = vmatpush.bf16.msra.mxu0 %v414
    %705 = vmatmul.bf16.gmra.mxu0 %v500
    %v706 = vpop.f32.mrf.mxu0
    %v707 = vadd.f32 %v212, %v706
    %v708 = vpop.f32.mrf.mxu0
    %709 = vdwg.mxu0
    %710 = vmatpush.bf16.msra.mxu0 0
    %711 = vmatpush.bf16.msra.mxu0 0
    %712 = vmatpush.bf16.msra.mxu0 0
    %713 = vmatpush.bf16.msra.mxu0 0
    %714 = vmatpush.bf16.msra.mxu0 0
    %715 = vmatpush.bf16.msra.mxu0 0
    %716 = vmatpush.bf16.msra.mxu0 %v440
    %717 = vmatpush.bf16.msra.mxu0 %v415
    %718 = vmatmul.bf16.gmra.mxu0 %v500
    %v719 = vpop.f32.mrf.mxu0
    %v720 = vadd.f32 %v213, %v719
    %v721 = vpop.f32.mrf.mxu0
    %722 = vdwg.mxu0
    %723 = vmatpush.bf16.msra.mxu0 0
    %724 = vmatpush.bf16.msra.mxu0 0
    %725 = vmatpush.bf16.msra.mxu0 0
    %726 = vmatpush.bf16.msra.mxu0 0
    %727 = vmatpush.bf16.msra.mxu0 0
    %728 = vmatpush.bf16.msra.mxu0 0
    %729 = vmatpush.bf16.msra.mxu0 %v441
    %730 = vmatpush.bf16.msra.mxu0 %v416
    %731 = vmatmul.bf16.gmra.mxu0 %v500
    %v732 = vpop.f32.mrf.mxu0
    %v733 = vadd.f32 %v214, %v732
    %v734 = vpop.f32.mrf.mxu0
    %735 = vdwg.mxu0
    %736 = vmatpush.bf16.msra.mxu0 0
    %737 = vmatpush.bf16.msra.mxu0 0
    %738 = vmatpush.bf16.msra.mxu0 0
    %739 = vmatpush.bf16.msra.mxu0 0
    %740 = vmatpush.bf16.msra.mxu0 0
    %741 = vmatpush.bf16.msra.mxu0 0
    %742 = vmatpush.bf16.msra.mxu0 %v442
    %743 = vmatpush.bf16.msra.mxu0 %v417
    %744 = vmatmul.bf16.gmra.mxu0 %v500
    %v745 = vpop.f32.mrf.mxu0
    %v746 = vadd.f32 %v215, %v745
    %v747 = vpop.f32.mrf.mxu0
    %748 = vdwg.mxu0
    %749 = vmatpush.bf16.msra.mxu0 0
    %750 = vmatpush.bf16.msra.mxu0 0
    %751 = vmatpush.bf16.msra.mxu0 0
    %752 = vmatpush.bf16.msra.mxu0 0
    %753 = vmatpush.bf16.msra.mxu0 0
    %754 = vmatpush.bf16.msra.mxu0 0
    %755 = vmatpush.bf16.msra.mxu0 %v443
    %756 = vmatpush.bf16.msra.mxu0 %v418
    %757 = vmatmul.bf16.gmra.mxu0 %v500
    %v758 = vpop.f32.mrf.mxu0
    %v759 = vadd.f32 %v216, %v758
    %v760 = vpop.f32.mrf.mxu0
    %761 = vdwg.mxu0
    %762 = vmatpush.bf16.msra.mxu0 0
    %763 = vmatpush.bf16.msra.mxu0 0
    %764 = vmatpush.bf16.msra.mxu0 0
    %765 = vmatpush.bf16.msra.mxu0 0
    %766 = vmatpush.bf16.msra.mxu0 0
    %767 = vmatpush.bf16.msra.mxu0 0
    %768 = vmatpush.bf16.msra.mxu0 %v444
    %769 = vmatpush.bf16.msra.mxu0 %v419
    %770 = vmatmul.bf16.gmra.mxu0 %v500
    %v771 = vpop.f32.mrf.mxu0
    %v772 = vadd.f32 %v217, %v771
    %v773 = vpop.f32.mrf.mxu0
    %774 = vdwg.mxu0
    %775 = vmatpush.bf16.msra.mxu0 0
    %776 = vmatpush.bf16.msra.mxu0 0
    %777 = vmatpush.bf16.msra.mxu0 0
    %778 = vmatpush.bf16.msra.mxu0 0
    %779 = vmatpush.bf16.msra.mxu0 0
    %780 = vmatpush.bf16.msra.mxu0 0
    %781 = vmatpush.bf16.msra.mxu0 %v445
    %782 = vmatpush.bf16.msra.mxu0 %v420
    %783 = vmatmul.bf16.gmra.mxu0 %v500
    %v784 = vpop.f32.mrf.mxu0
    %v785 = vadd.f32 %v218, %v784
    %v786 = vpop.f32.mrf.mxu0
    %787 = vdwg.mxu0
    %788 = vmatpush.bf16.msra.mxu0 0
    %789 = vmatpush.bf16.msra.mxu0 0
    %790 = vmatpush.bf16.msra.mxu0 0
    %791 = vmatpush.bf16.msra.mxu0 0
    %792 = vmatpush.bf16.msra.mxu0 0
    %793 = vmatpush.bf16.msra.mxu0 0
    %794 = vmatpush.bf16.msra.mxu0 %v446
    %795 = vmatpush.bf16.msra.mxu0 %v421
    %796 = vmatmul.bf16.gmra.mxu0 %v500
    %v797 = vpop.f32.mrf.mxu0
    %v798 = vadd.f32 %v219, %v797
    %v799 = vpop.f32.mrf.mxu0
    %800 = vdwg.mxu0
    %801 = vmatpush.bf16.msra.mxu0 0
    %802 = vmatpush.bf16.msra.mxu0 0
    %803 = vmatpush.bf16.msra.mxu0 0
    %804 = vmatpush.bf16.msra.mxu0 0
    %805 = vmatpush.bf16.msra.mxu0 0
    %806 = vmatpush.bf16.msra.mxu0 0
    %807 = vmatpush.bf16.msra.mxu0 %v447
    %808 = vmatpush.bf16.msra.mxu0 %v422
    %809 = vmatmul.bf16.gmra.mxu0 %v500
    %v810 = vpop.f32.mrf.mxu0
    %v811 = vadd.f32 %v220, %v810
    %v812 = vpop.f32.mrf.mxu0
    %813 = vdwg.mxu0
    %814 = vmatpush.bf16.msra.mxu0 0
    %815 = vmatpush.bf16.msra.mxu0 0
    %816 = vmatpush.bf16.msra.mxu0 0
    %817 = vmatpush.bf16.msra.mxu0 0
    %818 = vmatpush.bf16.msra.mxu0 0
    %819 = vmatpush.bf16.msra.mxu0 0
    %820 = vmatpush.bf16.msra.mxu0 %v448
    %821 = vmatpush.bf16.msra.mxu0 %v423
    %822 = vmatmul.bf16.gmra.mxu0 %v500
    %v823 = vpop.f32.mrf.mxu0
    %v824 = vadd.f32 %v221, %v823
    %v825 = vpop.f32.mrf.mxu0
    %826 = vdwg.mxu0
    %v827 = vmax.f32 %v512, 0.0
    %v828 = vmax.f32 %v525, 0.0
    %v829 = vmax.f32 %v538, 0.0
    %v830 = vmax.f32 %v551, 0.0
    %v831 = vmax.f32 %v564, 0.0
    %v832 = vmax.f32 %v577, 0.0
    %v833 = vmax.f32 %v590, 0.0
    %v834 = vmax.f32 %v603, 0.0
    %v835 = vmax.f32 %v616, 0.0
    %v836 = vmax.f32 %v629, 0.0
    %v837 = vmax.f32 %v642, 0.0
    %v838 = vmax.f32 %v655, 0.0
    %v839 = vmax.f32 %v668, 0.0
    %v840 = vmax.f32 %v681, 0.0
    %v841 = vmax.f32 %v694, 0.0
    %v842 = vmax.f32 %v707, 0.0
    %v843 = vmax.f32 %v720, 0.0
    %v844 = vmax.f32 %v733, 0.0
    %v845 = vmax.f32 %v746, 0.0
    %v846 = vmax.f32 %v759, 0.0
    %v847 = vmax.f32 %v772, 0.0
    %v848 = vmax.f32 %v785, 0.0
    %v849 = vmax.f32 %v798, 0.0
    %v850 = vmax.f32 %v811, 0.0
    %v851 = vmax.f32 %v824, 0.0
    %852 = vst [vmem:[%s7] sm:$0xff] %v827
    %853 = vst [vmem:[%s7 + $0x8] sm:$0xff] %v828
    %854 = vst [vmem:[%s7 + $0x10] sm:$0xff] %v829
    %855 = vst [vmem:[%s7 + $0x18] sm:$0xff] %v830
    %856 = vst [vmem:[%s7 + $0x20] sm:$0xff] %v831
    %857 = vst [vmem:[%s7 + $0x28] sm:$0xff] %v832
    %858 = vst [vmem:[%s7 + $0x30] sm:$0xff] %v833
    %859 = vst [vmem:[%s7 + $0x38] sm:$0xff] %v834
    %860 = vst [vmem:[%s7 + $0x40] sm:$0xff] %v835
    %861 = vst [vmem:[%s7 + $0x48] sm:$0xff] %v836
    %862 = vst [vmem:[%s7 + $0x50] sm:$0xff] %v837
    %863 = vst [vmem:[%s7 + $0x58] sm:$0xff] %v838
    %864 = vst [vmem:[%s7 + $0x60] sm:$0xff] %v839
    %865 = vst [vmem:[%s7 + $0x68] sm:$0xff] %v840
    %866 = vst [vmem:[%s7 + $0x70] sm:$0xff] %v841
    %867 = vst [vmem:[%s7 + $0x78] sm:$0xff] %v842
    %868 = vst [vmem:[%s7 + $0x80] sm:$0xff] %v843
    %869 = vst [vmem:[%s7 + $0x88] sm:$0xff] %v844
    %870 = vst [vmem:[%s7 + $0x90] sm:$0xff] %v845
    %871 = vst [vmem:[%s7 + $0x98] sm:$0xff] %v846
    %872 = vst [vmem:[%s7 + $0xa0] sm:$0xff] %v847
    %873 = vst [vmem:[%s7 + $0xa8] sm:$0xff] %v848
    %874 = vst [vmem:[%s7 + $0xb0] sm:$0xff] %v849
    %875 = vst [vmem:[%s7 + $0xb8] sm:$0xff] %v850
    %876 = vst [vmem:[%s7 + $0xc0] sm:$0xff] %v851
    // Predicated region
    $region42: #{image_decoder_forward.4} parent=1 // pred_check
      _
    $region43: #{image_decoder_forward.4} parent=1 // pred_check_branch
      %878 = sbr.rel (0) target = $region45
    $region44: #{image_decoder_forward.4} parent=1 // pred_region
      _
    $region45: #{image_decoder_forward.4} parent=1 // pred_fallthru
      _
    // Predicated region
    $region46: #{image_decoder_forward.4} parent=1 // pred_check
      _
    $region47: #{image_decoder_forward.4} parent=1 // pred_check_branch
      %880 = sbr.rel (0) target = $region49
    $region48: #{image_decoder_forward.4} parent=1 // pred_region
      _
    $region49: #{image_decoder_forward.4} parent=1 // pred_fallthru
      _
    %881 = vsyncpa [#allocation3], 1
    %882 = vsyncpa [#allocation5], 1

// kernel: image_decoder_forward.5
$region0: #{image_decoder_forward.5}
  #allocation0 [shape = 'u32[]', space=smem, size = 0x4, offset = 0x4, fixed_abs, tag = 'smem constant byte address 0x4 - core index']
  #allocation1 [shape = 'u32[72,128]{1,0:T(1,128)}', space=vmem, size = 0x9000, scoped, tag = 'internal scratch']
  %s0 = inlined_call_operand.vmem [shape: f32[200,128], index: 0, kind: input, shape index: {}]
  %s1 = inlined_call_operand.vmem [shape: bf16[128,1664], index: 1, kind: input, shape index: {}]
  %s2 = inlined_call_operand.vmem [shape: f32[200,1664], index: 2, kind: output, shape index: {}]
  %s3 = sld [smem:[#allocation0]]
  $region18: #{image_decoder_forward.5} parent=0
    _
  %s5 = ssub.s32 1, %s3
  %s6 = scalar_select 0, %s5, %s3
  // Predicated region
  $region2: #{image_decoder_forward.5} parent=0 // pred_check
    _
  $region3: #{image_decoder_forward.5} parent=0 // pred_check_branch
    %8 = sbr.rel (0) target = $region5
  $region4: #{image_decoder_forward.5} parent=0 // pred_region
    _
  $region5: #{image_decoder_forward.5} parent=0 // pred_fallthru
    _
  // Predicated region
  $region6: #{image_decoder_forward.5} parent=0 // pred_check
    _
  $region7: #{image_decoder_forward.5} parent=0 // pred_check_branch
    %10 = sbr.rel (0) target = $region9
  $region8: #{image_decoder_forward.5} parent=0 // pred_region
    _
  $region9: #{image_decoder_forward.5} parent=0 // pred_fallthru
    _
  %v11 = vld [vmem:[%s0] sm:$0xff]
  %v12 = vld [vmem:[%s0 + $0x8] sm:$0xff]
  %v13 = vld [vmem:[%s0 + $0x10] sm:$0xff]
  %v14 = vld [vmem:[%s0 + $0x18] sm:$0xff]
  %v15 = vld [vmem:[%s0 + $0x20] sm:$0xff]
  %v16 = vld [vmem:[%s0 + $0x28] sm:$0xff]
  %v17 = vld [vmem:[%s0 + $0x30] sm:$0xff]
  %v18 = vld [vmem:[%s0 + $0x38] sm:$0xff]
  %v19 = vld [vmem:[%s0 + $0x40] sm:$0xff]
  %v20 = vld [vmem:[%s0 + $0x48] sm:$0xff]
  %v21 = vld [vmem:[%s0 + $0x50] sm:$0xff]
  %v22 = vld [vmem:[%s0 + $0x58] sm:$0xff]
  %v23 = vld [vmem:[%s0 + $0x60] sm:$0xff]
  %v24 = vld [vmem:[%s0 + $0x68] sm:$0xff]
  %v25 = vld [vmem:[%s0 + $0x70] sm:$0xff]
  %v26 = vld [vmem:[%s0 + $0x78] sm:$0xff]
  %v27 = vld [vmem:[%s0 + $0x80] sm:$0xff]
  %v28 = vld [vmem:[%s0 + $0x88] sm:$0xff]
  %v29 = vld [vmem:[%s0 + $0x90] sm:$0xff]
  %v30 = vld [vmem:[%s0 + $0x98] sm:$0xff]
  %v31 = vld [vmem:[%s0 + $0xa0] sm:$0xff]
  %v32 = vld [vmem:[%s0 + $0xa8] sm:$0xff]
  %v33 = vld [vmem:[%s0 + $0xb0] sm:$0xff]
  %v34 = vld [vmem:[%s0 + $0xb8] sm:$0xff]
  %v35 = vld [vmem:[%s0 + $0xc0] sm:$0xff]
  %v36 = vpack.c.bf16 %v12, %v11
  %v37 = vpack.c.bf16 %v14, %v13
  %v38 = vpack.c.bf16 %v16, %v15
  %v39 = vpack.c.bf16 %v18, %v17
  %v40 = vpack.c.bf16 %v20, %v19
  %v41 = vpack.c.bf16 %v22, %v21
  %v42 = vpack.c.bf16 %v24, %v23
  %v43 = vpack.c.bf16 %v26, %v25
  %v44 = vpack.c.bf16 %v28, %v27
  %v45 = vpack.c.bf16 %v30, %v29
  %v46 = vpack.c.bf16 %v32, %v31
  %v47 = vpack.c.bf16 %v34, %v33
  %v48 = vpack.c.bf16 %v35, %v35
  %v49 = vld [vmem:[%s1] sm:$0xff]
  %v50 = vld [vmem:[%s1 + $0x8] sm:$0xff]
  %v51 = vld [vmem:[%s1 + $0x10] sm:$0xff]
  %v52 = vld [vmem:[%s1 + $0x18] sm:$0xff]
  %v53 = vld [vmem:[%s1 + $0x20] sm:$0xff]
  %v54 = vld [vmem:[%s1 + $0x28] sm:$0xff]
  %v55 = vld [vmem:[%s1 + $0x30] sm:$0xf]
  %v56 = vld [vmem:[%s1 + $0x34] sm:$0xff]
  %v57 = vld [vmem:[%s1 + $0x3c] sm:$0xff]
  %v58 = vld [vmem:[%s1 + $0x44] sm:$0xff]
  %v59 = vld [vmem:[%s1 + $0x4c] sm:$0xff]
  %v60 = vld [vmem:[%s1 + $0x54] sm:$0xff]
  %v61 = vld [vmem:[%s1 + $0x5c] sm:$0xff]
  %v62 = vld [vmem:[%s1 + $0x64] sm:$0xf]
  %v63 = vld [vmem:[%s1 + $0x68] sm:$0xff]
  %v64 = vld [vmem:[%s1 + $0x70] sm:$0xff]
  %v65 = vld [vmem:[%s1 + $0x78] sm:$0xff]
  %v66 = vld [vmem:[%s1 + $0x80] sm:$0xff]
  %v67 = vld [vmem:[%s1 + $0x88] sm:$0xff]
  %v68 = vld [vmem:[%s1 + $0x90] sm:$0xff]
  %v69 = vld [vmem:[%s1 + $0x98] sm:$0xf]
  %v70 = vld [vmem:[%s1 + $0x9c] sm:$0xff]
  %v71 = vld [vmem:[%s1 + $0xa4] sm:$0xff]
  %v72 = vld [vmem:[%s1 + $0xac] sm:$0xff]
  %v73 = vld [vmem:[%s1 + $0xb4] sm:$0xff]
  %v74 = vld [vmem:[%s1 + $0xbc] sm:$0xff]
  %v75 = vld [vmem:[%s1 + $0xc4] sm:$0xff]
  %v76 = vld [vmem:[%s1 + $0xcc] sm:$0xf]
  %v77 = vld [vmem:[%s1 + $0xd0] sm:$0xff]
  %v78 = vld [vmem:[%s1 + $0xd8] sm:$0xff]
  %v79 = vld [vmem:[%s1 + $0xe0] sm:$0xff]
  %v80 = vld [vmem:[%s1 + $0xe8] sm:$0xff]
  %v81 = vld [vmem:[%s1 + $0xf0] sm:$0xff]
  %v82 = vld [vmem:[%s1 + $0xf8] sm:$0xff]
  %v83 = vld [vmem:[%s1 + $0x100] sm:$0xf]
  %v84 = vld [vmem:[%s1 + $0x104] sm:$0xff]
  %v85 = vld [vmem:[%s1 + $0x10c] sm:$0xff]
  %v86 = vld [vmem:[%s1 + $0x114] sm:$0xff]
  %v87 = vld [vmem:[%s1 + $0x11c] sm:$0xff]
  %v88 = vld [vmem:[%s1 + $0x124] sm:$0xff]
  %v89 = vld [vmem:[%s1 + $0x12c] sm:$0xff]
  %v90 = vld [vmem:[%s1 + $0x134] sm:$0xf]
  %v91 = vld [vmem:[%s1 + $0x138] sm:$0xff]
  %v92 = vld [vmem:[%s1 + $0x140] sm:$0xff]
  %v93 = vld [vmem:[%s1 + $0x148] sm:$0xff]
  %v94 = vld [vmem:[%s1 + $0x150] sm:$0xff]
  %v95 = vld [vmem:[%s1 + $0x158] sm:$0xff]
  %v96 = vld [vmem:[%s1 + $0x160] sm:$0xff]
  %v97 = vld [vmem:[%s1 + $0x168] sm:$0xf]
  %v98 = vld [vmem:[%s1 + $0x16c] sm:$0xff]
  %v99 = vld [vmem:[%s1 + $0x174] sm:$0xff]
  %v100 = vld [vmem:[%s1 + $0x17c] sm:$0xff]
  %v101 = vld [vmem:[%s1 + $0x184] sm:$0xff]
  %v102 = vld [vmem:[%s1 + $0x18c] sm:$0xff]
  %v103 = vld [vmem:[%s1 + $0x194] sm:$0xff]
  %v104 = vld [vmem:[%s1 + $0x19c] sm:$0xf]
  %v105 = vld [vmem:[%s1 + $0x1a0] sm:$0xff]
  %v106 = vld [vmem:[%s1 + $0x1a8] sm:$0xff]
  %v107 = vld [vmem:[%s1 + $0x1b0] sm:$0xff]
  %v108 = vld [vmem:[%s1 + $0x1b8] sm:$0xff]
  %v109 = vld [vmem:[%s1 + $0x1c0] sm:$0xff]
  %v110 = vld [vmem:[%s1 + $0x1c8] sm:$0xff]
  %v111 = vld [vmem:[%s1 + $0x1d0] sm:$0xf]
  %v112 = vld [vmem:[%s1 + $0x1d4] sm:$0xff]
  %v113 = vld [vmem:[%s1 + $0x1dc] sm:$0xff]
  %v114 = vld [vmem:[%s1 + $0x1e4] sm:$0xff]
  %v115 = vld [vmem:[%s1 + $0x1ec] sm:$0xff]
  %v116 = vld [vmem:[%s1 + $0x1f4] sm:$0xff]
  %v117 = vld [vmem:[%s1 + $0x1fc] sm:$0xff]
  %v118 = vld [vmem:[%s1 + $0x204] sm:$0xf]
  %v119 = vld [vmem:[%s1 + $0x208] sm:$0xff]
  %v120 = vld [vmem:[%s1 + $0x210] sm:$0xff]
  %v121 = vld [vmem:[%s1 + $0x218] sm:$0xff]
  %v122 = vld [vmem:[%s1 + $0x220] sm:$0xff]
  %v123 = vld [vmem:[%s1 + $0x228] sm:$0xff]
  %v124 = vld [vmem:[%s1 + $0x230] sm:$0xff]
  %v125 = vld [vmem:[%s1 + $0x238] sm:$0xf]
  %v126 = vld [vmem:[%s1 + $0x23c] sm:$0xff]
  %v127 = vld [vmem:[%s1 + $0x244] sm:$0xff]
  %v128 = vld [vmem:[%s1 + $0x24c] sm:$0xff]
  %v129 = vld [vmem:[%s1 + $0x254] sm:$0xff]
  %v130 = vld [vmem:[%s1 + $0x25c] sm:$0xff]
  %v131 = vld [vmem:[%s1 + $0x264] sm:$0xff]
  %v132 = vld [vmem:[%s1 + $0x26c] sm:$0xf]
  %v133 = vld [vmem:[%s1 + $0x270] sm:$0xff]
  %v134 = vld [vmem:[%s1 + $0x278] sm:$0xff]
  %v135 = vld [vmem:[%s1 + $0x280] sm:$0xff]
  %v136 = vld [vmem:[%s1 + $0x288] sm:$0xff]
  %v137 = vld [vmem:[%s1 + $0x290] sm:$0xff]
  %v138 = vld [vmem:[%s1 + $0x298] sm:$0xff]
  %v139 = vld [vmem:[%s1 + $0x2a0] sm:$0xf]
  %v140 = vld [vmem:[%s1 + $0x2a4] sm:$0xff]
  %v141 = vld [vmem:[%s1 + $0x2ac] sm:$0xff]
  %v142 = vld [vmem:[%s1 + $0x2b4] sm:$0xff]
  %v143 = vld [vmem:[%s1 + $0x2bc] sm:$0xff]
  %v144 = vld [vmem:[%s1 + $0x2c4] sm:$0xff]
  %v145 = vld [vmem:[%s1 + $0x2cc] sm:$0xff]
  %v146 = vld [vmem:[%s1 + $0x2d4] sm:$0xf]
  %v147 = vld [vmem:[%s1 + $0x2d8] sm:$0xff]
  %v148 = vld [vmem:[%s1 + $0x2e0] sm:$0xff]
  %v149 = vld [vmem:[%s1 + $0x2e8] sm:$0xff]
  %v150 = vld [vmem:[%s1 + $0x2f0] sm:$0xff]
  %v151 = vld [vmem:[%s1 + $0x2f8] sm:$0xff]
  %v152 = vld [vmem:[%s1 + $0x300] sm:$0xff]
  %v153 = vld [vmem:[%s1 + $0x308] sm:$0xf]
  %v154 = vld [vmem:[%s1 + $0x30c] sm:$0xff]
  %v155 = vld [vmem:[%s1 + $0x314] sm:$0xff]
  %v156 = vld [vmem:[%s1 + $0x31c] sm:$0xff]
  %v157 = vld [vmem:[%s1 + $0x324] sm:$0xff]
  %v158 = vld [vmem:[%s1 + $0x32c] sm:$0xff]
  %v159 = vld [vmem:[%s1 + $0x334] sm:$0xff]
  %v160 = vld [vmem:[%s1 + $0x33c] sm:$0xf]
  %v273 = vunpack.c.l.b16 %v49
  %v274 = vunpack.c.h.b16 %v49
  %v275 = vunpack.c.l.b16 %v50
  %v276 = vunpack.c.h.b16 %v50
  %v277 = vunpack.c.l.b16 %v51
  %v278 = vunpack.c.h.b16 %v51
  %v279 = vunpack.c.l.b16 %v52
  %v280 = vunpack.c.h.b16 %v52
  %v281 = vunpack.c.l.b16 %v53
  %v282 = vunpack.c.h.b16 %v53
  %v283 = vunpack.c.l.b16 %v54
  %v284 = vunpack.c.h.b16 %v54
  %v285 = vunpack.c.l.b16 %v55
  %v286 = vunpack.c.l.b16 %v56
  %v287 = vunpack.c.h.b16 %v56
  %v288 = vunpack.c.l.b16 %v57
  %v289 = vunpack.c.h.b16 %v57
  %v290 = vunpack.c.l.b16 %v58
  %v291 = vunpack.c.h.b16 %v58
  %v292 = vunpack.c.l.b16 %v59
  %v293 = vunpack.c.h.b16 %v59
  %v294 = vunpack.c.l.b16 %v60
  %v295 = vunpack.c.h.b16 %v60
  %v296 = vunpack.c.l.b16 %v61
  %v297 = vunpack.c.h.b16 %v61
  %v298 = vunpack.c.l.b16 %v62
  %v299 = vunpack.c.l.b16 %v63
  %v300 = vunpack.c.h.b16 %v63
  %v301 = vunpack.c.l.b16 %v64
  %v302 = vunpack.c.h.b16 %v64
  %v303 = vunpack.c.l.b16 %v65
  %v304 = vunpack.c.h.b16 %v65
  %v305 = vunpack.c.l.b16 %v66
  %v306 = vunpack.c.h.b16 %v66
  %v307 = vunpack.c.l.b16 %v67
  %v308 = vunpack.c.h.b16 %v67
  %v309 = vunpack.c.l.b16 %v68
  %v310 = vunpack.c.h.b16 %v68
  %v311 = vunpack.c.l.b16 %v69
  %v312 = vunpack.c.l.b16 %v70
  %v313 = vunpack.c.h.b16 %v70
  %v314 = vunpack.c.l.b16 %v71
  %v315 = vunpack.c.h.b16 %v71
  %v316 = vunpack.c.l.b16 %v72
  %v317 = vunpack.c.h.b16 %v72
  %v318 = vunpack.c.l.b16 %v73
  %v319 = vunpack.c.h.b16 %v73
  %v320 = vunpack.c.l.b16 %v74
  %v321 = vunpack.c.h.b16 %v74
  %v322 = vunpack.c.l.b16 %v75
  %v323 = vunpack.c.h.b16 %v75
  %v324 = vunpack.c.l.b16 %v76
  %v325 = vunpack.c.l.b16 %v77
  %v326 = vunpack.c.h.b16 %v77
  %v327 = vunpack.c.l.b16 %v78
  %v328 = vunpack.c.h.b16 %v78
  %v329 = vunpack.c.l.b16 %v79
  %v330 = vunpack.c.h.b16 %v79
  %v331 = vunpack.c.l.b16 %v80
  %v332 = vunpack.c.h.b16 %v80
  %v333 = vunpack.c.l.b16 %v81
  %v334 = vunpack.c.h.b16 %v81
  %v335 = vunpack.c.l.b16 %v82
  %v336 = vunpack.c.h.b16 %v82
  %v337 = vunpack.c.l.b16 %v83
  %v338 = vunpack.c.l.b16 %v84
  %v339 = vunpack.c.h.b16 %v84
  %v340 = vunpack.c.l.b16 %v85
  %v341 = vunpack.c.h.b16 %v85
  %v342 = vunpack.c.l.b16 %v86
  %v343 = vunpack.c.h.b16 %v86
  %v344 = vunpack.c.l.b16 %v87
  %v345 = vunpack.c.h.b16 %v87
  %v346 = vunpack.c.l.b16 %v88
  %v347 = vunpack.c.h.b16 %v88
  %v348 = vunpack.c.l.b16 %v89
  %v349 = vunpack.c.h.b16 %v89
  %v350 = vunpack.c.l.b16 %v90
  %v351 = vunpack.c.l.b16 %v91
  %v352 = vunpack.c.h.b16 %v91
  %v353 = vunpack.c.l.b16 %v92
  %v354 = vunpack.c.h.b16 %v92
  %v355 = vunpack.c.l.b16 %v93
  %v356 = vunpack.c.h.b16 %v93
  %v357 = vunpack.c.l.b16 %v94
  %v358 = vunpack.c.h.b16 %v94
  %v359 = vunpack.c.l.b16 %v95
  %v360 = vunpack.c.h.b16 %v95
  %v361 = vunpack.c.l.b16 %v96
  %v362 = vunpack.c.h.b16 %v96
  %v363 = vunpack.c.l.b16 %v97
  %v364 = vunpack.c.l.b16 %v98
  %v365 = vunpack.c.h.b16 %v98
  %v366 = vunpack.c.l.b16 %v99
  %v367 = vunpack.c.h.b16 %v99
  %v368 = vunpack.c.l.b16 %v100
  %v369 = vunpack.c.h.b16 %v100
  %v370 = vunpack.c.l.b16 %v101
  %v371 = vunpack.c.h.b16 %v101
  %v372 = vunpack.c.l.b16 %v102
  %v373 = vunpack.c.h.b16 %v102
  %v374 = vunpack.c.l.b16 %v103
  %v375 = vunpack.c.h.b16 %v103
  %v376 = vunpack.c.l.b16 %v104
  %v377 = vunpack.c.l.b16 %v105
  %v378 = vunpack.c.h.b16 %v105
  %v379 = vunpack.c.l.b16 %v106
  %v380 = vunpack.c.h.b16 %v106
  %v381 = vunpack.c.l.b16 %v107
  %v382 = vunpack.c.h.b16 %v107
  %v383 = vunpack.c.l.b16 %v108
  %v384 = vunpack.c.h.b16 %v108
  %v385 = vunpack.c.l.b16 %v109
  %v386 = vunpack.c.h.b16 %v109
  %v387 = vunpack.c.l.b16 %v110
  %v388 = vunpack.c.h.b16 %v110
  %v389 = vunpack.c.l.b16 %v111
  %v390 = vunpack.c.l.b16 %v112
  %v391 = vunpack.c.h.b16 %v112
  %v392 = vunpack.c.l.b16 %v113
  %v393 = vunpack.c.h.b16 %v113
  %v394 = vunpack.c.l.b16 %v114
  %v395 = vunpack.c.h.b16 %v114
  %v396 = vunpack.c.l.b16 %v115
  %v397 = vunpack.c.h.b16 %v115
  %v398 = vunpack.c.l.b16 %v116
  %v399 = vunpack.c.h.b16 %v116
  %v400 = vunpack.c.l.b16 %v117
  %v401 = vunpack.c.h.b16 %v117
  %v402 = vunpack.c.l.b16 %v118
  %v403 = vunpack.c.l.b16 %v119
  %v404 = vunpack.c.h.b16 %v119
  %v405 = vunpack.c.l.b16 %v120
  %v406 = vunpack.c.h.b16 %v120
  %v407 = vunpack.c.l.b16 %v121
  %v408 = vunpack.c.h.b16 %v121
  %v409 = vunpack.c.l.b16 %v122
  %v410 = vunpack.c.h.b16 %v122
  %v411 = vunpack.c.l.b16 %v123
  %v412 = vunpack.c.h.b16 %v123
  %v413 = vunpack.c.l.b16 %v124
  %v414 = vunpack.c.h.b16 %v124
  %v415 = vunpack.c.l.b16 %v125
  %v416 = vunpack.c.l.b16 %v126
  %v417 = vunpack.c.h.b16 %v126
  %v418 = vunpack.c.l.b16 %v127
  %v419 = vunpack.c.h.b16 %v127
  %v420 = vunpack.c.l.b16 %v128
  %v421 = vunpack.c.h.b16 %v128
  %v422 = vunpack.c.l.b16 %v129
  %v423 = vunpack.c.h.b16 %v129
  %v424 = vunpack.c.l.b16 %v130
  %v425 = vunpack.c.h.b16 %v130
  %v426 = vunpack.c.l.b16 %v131
  %v427 = vunpack.c.h.b16 %v131
  %v428 = vunpack.c.l.b16 %v132
  %v429 = vunpack.c.l.b16 %v133
  %v430 = vunpack.c.h.b16 %v133
  %v431 = vunpack.c.l.b16 %v134
  %v432 = vunpack.c.h.b16 %v134
  %v433 = vunpack.c.l.b16 %v135
  %v434 = vunpack.c.h.b16 %v135
  %v435 = vunpack.c.l.b16 %v136
  %v436 = vunpack.c.h.b16 %v136
  %v437 = vunpack.c.l.b16 %v137
  %v438 = vunpack.c.h.b16 %v137
  %v439 = vunpack.c.l.b16 %v138
  %v440 = vunpack.c.h.b16 %v138
  %v441 = vunpack.c.l.b16 %v139
  %v442 = vunpack.c.l.b16 %v140
  %v443 = vunpack.c.h.b16 %v140
  %v444 = vunpack.c.l.b16 %v141
  %v445 = vunpack.c.h.b16 %v141
  %v446 = vunpack.c.l.b16 %v142
  %v447 = vunpack.c.h.b16 %v142
  %v448 = vunpack.c.l.b16 %v143
  %v449 = vunpack.c.h.b16 %v143
  %v450 = vunpack.c.l.b16 %v144
  %v451 = vunpack.c.h.b16 %v144
  %v452 = vunpack.c.l.b16 %v145
  %v453 = vunpack.c.h.b16 %v145
  %v454 = vunpack.c.l.b16 %v146
  %v455 = vunpack.c.l.b16 %v147
  %v456 = vunpack.c.h.b16 %v147
  %v457 = vunpack.c.l.b16 %v148
  %v458 = vunpack.c.h.b16 %v148
  %v459 = vunpack.c.l.b16 %v149
  %v460 = vunpack.c.h.b16 %v149
  %v461 = vunpack.c.l.b16 %v150
  %v462 = vunpack.c.h.b16 %v150
  %v463 = vunpack.c.l.b16 %v151
  %v464 = vunpack.c.h.b16 %v151
  %v465 = vunpack.c.l.b16 %v152
  %v466 = vunpack.c.h.b16 %v152
  %v467 = vunpack.c.l.b16 %v153
  %v468 = vunpack.c.l.b16 %v154
  %v469 = vunpack.c.h.b16 %v154
  %v470 = vunpack.c.l.b16 %v155
  %v471 = vunpack.c.h.b16 %v155
  %v472 = vunpack.c.l.b16 %v156
  %v473 = vunpack.c.h.b16 %v156
  %v474 = vunpack.c.l.b16 %v157
  %v475 = vunpack.c.h.b16 %v157
  %v476 = vunpack.c.l.b16 %v158
  %v477 = vunpack.c.h.b16 %v158
  %v478 = vunpack.c.l.b16 %v159
  %v479 = vunpack.c.h.b16 %v159
  %v480 = vunpack.c.l.b16 %v160
  %v481 = vpack.c.b16 %v286, %v273
  %v482 = vpack.c.b16 %v287, %v274
  %v483 = vpack.c.b16 %v288, %v275
  %v484 = vpack.c.b16 %v289, %v276
  %v485 = vpack.c.b16 %v290, %v277
  %v486 = vpack.c.b16 %v291, %v278
  %v487 = vpack.c.b16 %v292, %v279
  %v488 = vpack.c.b16 %v293, %v280
  %v489 = vpack.c.b16 %v294, %v281
  %v490 = vpack.c.b16 %v295, %v282
  %v491 = vpack.c.b16 %v296, %v283
  %v492 = vpack.c.b16 %v297, %v284
  %v493 = vpack.c.b16 %v298, %v285
  %v494 = vpack.c.b16 %v312, %v299
  %v495 = vpack.c.b16 %v313, %v300
  %v496 = vpack.c.b16 %v314, %v301
  %v497 = vpack.c.b16 %v315, %v302
  %v498 = vpack.c.b16 %v316, %v303
  %v499 = vpack.c.b16 %v317, %v304
  %v500 = vpack.c.b16 %v318, %v305
  %v501 = vpack.c.b16 %v319, %v306
  %v502 = vpack.c.b16 %v320, %v307
  %v503 = vpack.c.b16 %v321, %v308
  %v504 = vpack.c.b16 %v322, %v309
  %v505 = vpack.c.b16 %v323, %v310
  %v506 = vpack.c.b16 %v324, %v311
  %v507 = vpack.c.b16 %v338, %v325
  %v508 = vpack.c.b16 %v339, %v326
  %v509 = vpack.c.b16 %v340, %v327
  %v510 = vpack.c.b16 %v341, %v328
  %v511 = vpack.c.b16 %v342, %v329
  %v512 = vpack.c.b16 %v343, %v330
  %v513 = vpack.c.b16 %v344, %v331
  %v514 = vpack.c.b16 %v345, %v332
  %v515 = vpack.c.b16 %v346, %v333
  %v516 = vpack.c.b16 %v347, %v334
  %v517 = vpack.c.b16 %v348, %v335
  %v518 = vpack.c.b16 %v349, %v336
  %v519 = vpack.c.b16 %v350, %v337
  %v520 = vpack.c.b16 %v364, %v351
  %v521 = vpack.c.b16 %v365, %v352
  %v522 = vpack.c.b16 %v366, %v353
  %v523 = vpack.c.b16 %v367, %v354
  %v524 = vpack.c.b16 %v368, %v355
  %v525 = vpack.c.b16 %v369, %v356
  %v526 = vpack.c.b16 %v370, %v357
  %v527 = vpack.c.b16 %v371, %v358
  %v528 = vpack.c.b16 %v372, %v359
  %v529 = vpack.c.b16 %v373, %v360
  %v530 = vpack.c.b16 %v374, %v361
  %v531 = vpack.c.b16 %v375, %v362
  %v532 = vpack.c.b16 %v376, %v363
  %v533 = vpack.c.b16 %v390, %v377
  %v534 = vpack.c.b16 %v391, %v378
  %v535 = vpack.c.b16 %v392, %v379
  %v536 = vpack.c.b16 %v393, %v380
  %v537 = vpack.c.b16 %v394, %v381
  %v538 = vpack.c.b16 %v395, %v382
  %v539 = vpack.c.b16 %v396, %v383
  %v540 = vpack.c.b16 %v397, %v384
  %v541 = vpack.c.b16 %v398, %v385
  %v542 = vpack.c.b16 %v399, %v386
  %v543 = vpack.c.b16 %v400, %v387
  %v544 = vpack.c.b16 %v401, %v388
  %v545 = vpack.c.b16 %v402, %v389
  %v546 = vpack.c.b16 %v416, %v403
  %v547 = vpack.c.b16 %v417, %v404
  %v548 = vpack.c.b16 %v418, %v405
  %v549 = vpack.c.b16 %v419, %v406
  %v550 = vpack.c.b16 %v420, %v407
  %v551 = vpack.c.b16 %v421, %v408
  %v552 = vpack.c.b16 %v422, %v409
  %v553 = vpack.c.b16 %v423, %v410
  %v554 = vpack.c.b16 %v424, %v411
  %v555 = vpack.c.b16 %v425, %v412
  %v556 = vpack.c.b16 %v426, %v413
  %v557 = vpack.c.b16 %v427, %v414
  %v558 = vpack.c.b16 %v428, %v415
  %v559 = vpack.c.b16 %v442, %v429
  %v560 = vpack.c.b16 %v443, %v430
  %v561 = vpack.c.b16 %v444, %v431
  %v562 = vpack.c.b16 %v445, %v432
  %v563 = vpack.c.b16 %v446, %v433
  %v564 = vpack.c.b16 %v447, %v434
  %v565 = vpack.c.b16 %v448, %v435
  %v566 = vpack.c.b16 %v449, %v436
  %v567 = vpack.c.b16 %v450, %v437
  %v568 = vpack.c.b16 %v451, %v438
  %v569 = vpack.c.b16 %v452, %v439
  %v570 = vpack.c.b16 %v453, %v440
  %v571 = vpack.c.b16 %v454, %v441
  %v572 = vpack.c.b16 %v468, %v455
  %v573 = vpack.c.b16 %v469, %v456
  %v574 = vpack.c.b16 %v470, %v457
  %v575 = vpack.c.b16 %v471, %v458
  %v576 = vpack.c.b16 %v472, %v459
  %v577 = vpack.c.b16 %v473, %v460
  %v578 = vpack.c.b16 %v474, %v461
  %v579 = vpack.c.b16 %v475, %v462
  %v580 = vpack.c.b16 %v476, %v463
  %v581 = vpack.c.b16 %v477, %v464
  %v582 = vpack.c.b16 %v478, %v465
  %v583 = vpack.c.b16 %v479, %v466
  %v584 = vpack.c.b16 %v480, %v467
  %689 = vmatpush.bf16.msra.mxu0 %v572
  %690 = vmatpush.bf16.msra.mxu0 %v559
  %691 = vmatpush.bf16.msra.mxu0 %v546
  %692 = vmatpush.bf16.msra.mxu0 %v533
  %693 = vmatpush.bf16.msra.mxu0 %v520
  %694 = vmatpush.bf16.msra.mxu0 %v507
  %695 = vmatpush.bf16.msra.mxu0 %v494
  %696 = vmatpush.bf16.msra.mxu0 %v481
  %697 = vmatmul.bf16.gmra.mxu0 %v36
  %v698 = vpop.f32.mrf.mxu0
  %v699 = vadd.f32 0.0, %v698
  %v700 = vpop.f32.mrf.mxu0
  %v701 = vadd.f32 0.0, %v700
  %702 = vmatmul.bf16.gmra.mxu0 %v37
  %v703 = vpop.f32.mrf.mxu0
  %v704 = vadd.f32 0.0, %v703
  %v705 = vpop.f32.mrf.mxu0
  %v706 = vadd.f32 0.0, %v705
  %707 = vmatmul.bf16.gmra.mxu0 %v38
  %v708 = vpop.f32.mrf.mxu0
  %v709 = vadd.f32 0.0, %v708
  %v710 = vpop.f32.mrf.mxu0
  %v711 = vadd.f32 0.0, %v710
  %712 = vmatmul.bf16.gmra.mxu0 %v39
  %v713 = vpop.f32.mrf.mxu0
  %v714 = vadd.f32 0.0, %v713
  %v715 = vpop.f32.mrf.mxu0
  %v716 = vadd.f32 0.0, %v715
  %717 = vmatmul.bf16.gmra.mxu0 %v40
  %v718 = vpop.f32.mrf.mxu0
  %v719 = vadd.f32 0.0, %v718
  %v720 = vpop.f32.mrf.mxu0
  %v721 = vadd.f32 0.0, %v720
  %722 = vmatmul.bf16.gmra.mxu0 %v41
  %v723 = vpop.f32.mrf.mxu0
  %v724 = vadd.f32 0.0, %v723
  %v725 = vpop.f32.mrf.mxu0
  %v726 = vadd.f32 0.0, %v725
  %727 = vmatmul.bf16.gmra.mxu0 %v42
  %v728 = vpop.f32.mrf.mxu0
  %v729 = vadd.f32 0.0, %v728
  %v730 = vpop.f32.mrf.mxu0
  %v731 = vadd.f32 0.0, %v730
  %732 = vmatmul.bf16.gmra.mxu0 %v43
  %v733 = vpop.f32.mrf.mxu0
  %v734 = vadd.f32 0.0, %v733
  %v735 = vpop.f32.mrf.mxu0
  %v736 = vadd.f32 0.0, %v735
  %737 = vmatmul.bf16.gmra.mxu0 %v44
  %v738 = vpop.f32.mrf.mxu0
  %v739 = vadd.f32 0.0, %v738
  %v740 = vpop.f32.mrf.mxu0
  %v741 = vadd.f32 0.0, %v740
  %742 = vmatmul.bf16.gmra.mxu0 %v45
  %v743 = vpop.f32.mrf.mxu0
  %v744 = vadd.f32 0.0, %v743
  %v745 = vpop.f32.mrf.mxu0
  %v746 = vadd.f32 0.0, %v745
  %747 = vmatmul.bf16.gmra.mxu0 %v46
  %v748 = vpop.f32.mrf.mxu0
  %v749 = vadd.f32 0.0, %v748
  %v750 = vpop.f32.mrf.mxu0
  %v751 = vadd.f32 0.0, %v750
  %752 = vmatmul.bf16.gmra.mxu0 %v47
  %v753 = vpop.f32.mrf.mxu0
  %v754 = vadd.f32 0.0, %v753
  %v755 = vpop.f32.mrf.mxu0
  %v756 = vadd.f32 0.0, %v755
  %757 = vmatmul.bf16.gmra.mxu0 %v48
  %v758 = vpop.f32.mrf.mxu0
  %v759 = vadd.f32 0.0, %v758
  %v760 = vpop.f32.mrf.mxu0
  %761 = vdwg.mxu0
  %762 = vmatpush.bf16.msra.mxu0 %v573
  %763 = vmatpush.bf16.msra.mxu0 %v560
  %764 = vmatpush.bf16.msra.mxu0 %v547
  %765 = vmatpush.bf16.msra.mxu0 %v534
  %766 = vmatpush.bf16.msra.mxu0 %v521
  %767 = vmatpush.bf16.msra.mxu0 %v508
  %768 = vmatpush.bf16.msra.mxu0 %v495
  %769 = vmatpush.bf16.msra.mxu0 %v482
  %770 = vmatmul.bf16.gmra.mxu0 %v36
  %v771 = vpop.f32.mrf.mxu0
  %v772 = vadd.f32 0.0, %v771
  %v773 = vpop.f32.mrf.mxu0
  %v774 = vadd.f32 0.0, %v773
  %775 = vmatmul.bf16.gmra.mxu0 %v37
  %v776 = vpop.f32.mrf.mxu0
  %v777 = vadd.f32 0.0, %v776
  %v778 = vpop.f32.mrf.mxu0
  %v779 = vadd.f32 0.0, %v778
  %780 = vmatmul.bf16.gmra.mxu0 %v38
  %v781 = vpop.f32.mrf.mxu0
  %v782 = vadd.f32 0.0, %v781
  %v783 = vpop.f32.mrf.mxu0
  %v784 = vadd.f32 0.0, %v783
  %785 = vmatmul.bf16.gmra.mxu0 %v39
  %v786 = vpop.f32.mrf.mxu0
  %v787 = vadd.f32 0.0, %v786
  %v788 = vpop.f32.mrf.mxu0
  %v789 = vadd.f32 0.0, %v788
  %790 = vmatmul.bf16.gmra.mxu0 %v40
  %v791 = vpop.f32.mrf.mxu0
  %v792 = vadd.f32 0.0, %v791
  %v793 = vpop.f32.mrf.mxu0
  %v794 = vadd.f32 0.0, %v793
  %795 = vmatmul.bf16.gmra.mxu0 %v41
  %v796 = vpop.f32.mrf.mxu0
  %v797 = vadd.f32 0.0, %v796
  %v798 = vpop.f32.mrf.mxu0
  %v799 = vadd.f32 0.0, %v798
  %800 = vmatmul.bf16.gmra.mxu0 %v42
  %v801 = vpop.f32.mrf.mxu0
  %v802 = vadd.f32 0.0, %v801
  %v803 = vpop.f32.mrf.mxu0
  %v804 = vadd.f32 0.0, %v803
  %805 = vmatmul.bf16.gmra.mxu0 %v43
  %v806 = vpop.f32.mrf.mxu0
  %v807 = vadd.f32 0.0, %v806
  %v808 = vpop.f32.mrf.mxu0
  %v809 = vadd.f32 0.0, %v808
  %810 = vmatmul.bf16.gmra.mxu0 %v44
  %v811 = vpop.f32.mrf.mxu0
  %v812 = vadd.f32 0.0, %v811
  %v813 = vpop.f32.mrf.mxu0
  %v814 = vadd.f32 0.0, %v813
  %815 = vmatmul.bf16.gmra.mxu0 %v45
  %v816 = vpop.f32.mrf.mxu0
  %v817 = vadd.f32 0.0, %v816
  %v818 = vpop.f32.mrf.mxu0
  %v819 = vadd.f32 0.0, %v818
  %820 = vmatmul.bf16.gmra.mxu0 %v46
  %v821 = vpop.f32.mrf.mxu0
  %v822 = vadd.f32 0.0, %v821
  %v823 = vpop.f32.mrf.mxu0
  %v824 = vadd.f32 0.0, %v823
  %825 = vmatmul.bf16.gmra.mxu0 %v47
  %v826 = vpop.f32.mrf.mxu0
  %v827 = vadd.f32 0.0, %v826
  %v828 = vpop.f32.mrf.mxu0
  %v829 = vadd.f32 0.0, %v828
  %830 = vmatmul.bf16.gmra.mxu0 %v48
  %v831 = vpop.f32.mrf.mxu0
  %v832 = vadd.f32 0.0, %v831
  %v833 = vpop.f32.mrf.mxu0
  %834 = vdwg.mxu0
  %835 = vmatpush.bf16.msra.mxu0 %v574
  %836 = vmatpush.bf16.msra.mxu0 %v561
  %837 = vmatpush.bf16.msra.mxu0 %v548
  %838 = vmatpush.bf16.msra.mxu0 %v535
  %839 = vmatpush.bf16.msra.mxu0 %v522
  %840 = vmatpush.bf16.msra.mxu0 %v509
  %841 = vmatpush.bf16.msra.mxu0 %v496
  %842 = vmatpush.bf16.msra.mxu0 %v483
  %843 = vmatmul.bf16.gmra.mxu0 %v36
  %v844 = vpop.f32.mrf.mxu0
  %v845 = vadd.f32 0.0, %v844
  %v846 = vpop.f32.mrf.mxu0
  %v847 = vadd.f32 0.0, %v846
  %848 = vmatmul.bf16.gmra.mxu0 %v37
  %v849 = vpop.f32.mrf.mxu0
  %v850 = vadd.f32 0.0, %v849
  %v851 = vpop.f32.mrf.mxu0
  %v852 = vadd.f32 0.0, %v851
  %853 = vmatmul.bf16.gmra.mxu0 %v38
  %v854 = vpop.f32.mrf.mxu0
  %v855 = vadd.f32 0.0, %v854
  %v856 = vpop.f32.mrf.mxu0
  %v857 = vadd.f32 0.0, %v856
  %858 = vmatmul.bf16.gmra.mxu0 %v39
  %v859 = vpop.f32.mrf.mxu0
  %v860 = vadd.f32 0.0, %v859
  %v861 = vpop.f32.mrf.mxu0
  %v862 = vadd.f32 0.0, %v861
  %863 = vmatmul.bf16.gmra.mxu0 %v40
  %v864 = vpop.f32.mrf.mxu0
  %v865 = vadd.f32 0.0, %v864
  %v866 = vpop.f32.mrf.mxu0
  %v867 = vadd.f32 0.0, %v866
  %868 = vmatmul.bf16.gmra.mxu0 %v41
  %v869 = vpop.f32.mrf.mxu0
  %v870 = vadd.f32 0.0, %v869
  %v871 = vpop.f32.mrf.mxu0
  %v872 = vadd.f32 0.0, %v871
  %873 = vmatmul.bf16.gmra.mxu0 %v42
  %v874 = vpop.f32.mrf.mxu0
  %v875 = vadd.f32 0.0, %v874
  %v876 = vpop.f32.mrf.mxu0
  %v877 = vadd.f32 0.0, %v876
  %878 = vmatmul.bf16.gmra.mxu0 %v43
  %v879 = vpop.f32.mrf.mxu0
  %v880 = vadd.f32 0.0, %v879
  %v881 = vpop.f32.mrf.mxu0
  %v882 = vadd.f32 0.0, %v881
  %883 = vmatmul.bf16.gmra.mxu0 %v44
  %v884 = vpop.f32.mrf.mxu0
  %v885 = vadd.f32 0.0, %v884
  %v886 = vpop.f32.mrf.mxu0
  %v887 = vadd.f32 0.0, %v886
  %888 = vmatmul.bf16.gmra.mxu0 %v45
  %v889 = vpop.f32.mrf.mxu0
  %v890 = vadd.f32 0.0, %v889
  %v891 = vpop.f32.mrf.mxu0
  %v892 = vadd.f32 0.0, %v891
  %893 = vmatmul.bf16.gmra.mxu0 %v46
  %v894 = vpop.f32.mrf.mxu0
  %v895 = vadd.f32 0.0, %v894
  %v896 = vpop.f32.mrf.mxu0
  %v897 = vadd.f32 0.0, %v896
  %898 = vmatmul.bf16.gmra.mxu0 %v47
  %v899 = vpop.f32.mrf.mxu0
  %v900 = vadd.f32 0.0, %v899
  %v901 = vpop.f32.mrf.mxu0
  %v902 = vadd.f32 0.0, %v901
  %903 = vmatmul.bf16.gmra.mxu0 %v48
  %v904 = vpop.f32.mrf.mxu0
  %v905 = vadd.f32 0.0, %v904
  %v906 = vpop.f32.mrf.mxu0
  %907 = vdwg.mxu0
  %908 = vmatpush.bf16.msra.mxu0 %v575
  %909 = vmatpush.bf16.msra.mxu0 %v562
  %910 = vmatpush.bf16.msra.mxu0 %v549
  %911 = vmatpush.bf16.msra.mxu0 %v536
  %912 = vmatpush.bf16.msra.mxu0 %v523
  %913 = vmatpush.bf16.msra.mxu0 %v510
  %914 = vmatpush.bf16.msra.mxu0 %v497
  %915 = vmatpush.bf16.msra.mxu0 %v484
  %916 = vmatmul.bf16.gmra.mxu0 %v36
  %v917 = vpop.f32.mrf.mxu0
  %v918 = vadd.f32 0.0, %v917
  %v919 = vpop.f32.mrf.mxu0
  %v920 = vadd.f32 0.0, %v919
  %921 = vmatmul.bf16.gmra.mxu0 %v37
  %v922 = vpop.f32.mrf.mxu0
  %v923 = vadd.f32 0.0, %v922
  %v924 = vpop.f32.mrf.mxu0
  %v925 = vadd.f32 0.0, %v924
  %926 = vmatmul.bf16.gmra.mxu0 %v38
  %v927 = vpop.f32.mrf.mxu0
  %v928 = vadd.f32 0.0, %v927
  %v929 = vpop.f32.mrf.mxu0
  %v930 = vadd.f32 0.0, %v929
  %931 = vmatmul.bf16.gmra.mxu0 %v39
  %v932 = vpop.f32.mrf.mxu0
  %v933 = vadd.f32 0.0, %v932
  %v934 = vpop.f32.mrf.mxu0
  %v935 = vadd.f32 0.0, %v934
  %936 = vmatmul.bf16.gmra.mxu0 %v40
  %v937 = vpop.f32.mrf.mxu0
  %v938 = vadd.f32 0.0, %v937
  %v939 = vpop.f32.mrf.mxu0
  %v940 = vadd.f32 0.0, %v939
  %941 = vmatmul.bf16.gmra.mxu0 %v41
  %v942 = vpop.f32.mrf.mxu0
  %v943 = vadd.f32 0.0, %v942
  %v944 = vpop.f32.mrf.mxu0
  %v945 = vadd.f32 0.0, %v944
  %946 = vmatmul.bf16.gmra.mxu0 %v42
  %v947 = vpop.f32.mrf.mxu0
  %v948 = vadd.f32 0.0, %v947
  %v949 = vpop.f32.mrf.mxu0
  %v950 = vadd.f32 0.0, %v949
  %951 = vmatmul.bf16.gmra.mxu0 %v43
  %v952 = vpop.f32.mrf.mxu0
  %v953 = vadd.f32 0.0, %v952
  %v954 = vpop.f32.mrf.mxu0
  %v955 = vadd.f32 0.0, %v954
  %956 = vmatmul.bf16.gmra.mxu0 %v44
  %v957 = vpop.f32.mrf.mxu0
  %v958 = vadd.f32 0.0, %v957
  %v959 = vpop.f32.mrf.mxu0
  %v960 = vadd.f32 0.0, %v959
  %961 = vmatmul.bf16.gmra.mxu0 %v45
  %v962 = vpop.f32.mrf.mxu0
  %v963 = vadd.f32 0.0, %v962
  %v964 = vpop.f32.mrf.mxu0
  %v965 = vadd.f32 0.0, %v964
  %966 = vmatmul.bf16.gmra.mxu0 %v46
  %v967 = vpop.f32.mrf.mxu0
  %v968 = vadd.f32 0.0, %v967
  %v969 = vpop.f32.mrf.mxu0
  %v970 = vadd.f32 0.0, %v969
  %971 = vmatmul.bf16.gmra.mxu0 %v47
  %v972 = vpop.f32.mrf.mxu0
  %v973 = vadd.f32 0.0, %v972
  %v974 = vpop.f32.mrf.mxu0
  %v975 = vadd.f32 0.0, %v974
  %976 = vmatmul.bf16.gmra.mxu0 %v48
  %v977 = vpop.f32.mrf.mxu0
  %v978 = vadd.f32 0.0, %v977
  %v979 = vpop.f32.mrf.mxu0
  %980 = vdwg.mxu0
  %981 = vmatpush.bf16.msra.mxu0 %v576
  %982 = vmatpush.bf16.msra.mxu0 %v563
  %983 = vmatpush.bf16.msra.mxu0 %v550
  %984 = vmatpush.bf16.msra.mxu0 %v537
  %985 = vmatpush.bf16.msra.mxu0 %v524
  %986 = vmatpush.bf16.msra.mxu0 %v511
  %987 = vmatpush.bf16.msra.mxu0 %v498
  %988 = vmatpush.bf16.msra.mxu0 %v485
  %989 = vmatmul.bf16.gmra.mxu0 %v36
  %v990 = vpop.f32.mrf.mxu0
  %v991 = vadd.f32 0.0, %v990
  %v992 = vpop.f32.mrf.mxu0
  %v993 = vadd.f32 0.0, %v992
  %994 = vmatmul.bf16.gmra.mxu0 %v37
  %v995 = vpop.f32.mrf.mxu0
  %v996 = vadd.f32 0.0, %v995
  %v997 = vpop.f32.mrf.mxu0
  %v998 = vadd.f32 0.0, %v997
  %999 = vmatmul.bf16.gmra.mxu0 %v38
  %v1000 = vpop.f32.mrf.mxu0
  %v1001 = vadd.f32 0.0, %v1000
  %v1002 = vpop.f32.mrf.mxu0
  %v1003 = vadd.f32 0.0, %v1002
  %1004 = vmatmul.bf16.gmra.mxu0 %v39
  %v1005 = vpop.f32.mrf.mxu0
  %v1006 = vadd.f32 0.0, %v1005
  %v1007 = vpop.f32.mrf.mxu0
  %v1008 = vadd.f32 0.0, %v1007
  %1009 = vmatmul.bf16.gmra.mxu0 %v40
  %v1010 = vpop.f32.mrf.mxu0
  %v1011 = vadd.f32 0.0, %v1010
  %v1012 = vpop.f32.mrf.mxu0
  %v1013 = vadd.f32 0.0, %v1012
  %1014 = vmatmul.bf16.gmra.mxu0 %v41
  %v1015 = vpop.f32.mrf.mxu0
  %v1016 = vadd.f32 0.0, %v1015
  %v1017 = vpop.f32.mrf.mxu0
  %v1018 = vadd.f32 0.0, %v1017
  %1019 = vmatmul.bf16.gmra.mxu0 %v42
  %v1020 = vpop.f32.mrf.mxu0
  %v1021 = vadd.f32 0.0, %v1020
  %v1022 = vpop.f32.mrf.mxu0
  %v1023 = vadd.f32 0.0, %v1022
  %1024 = vmatmul.bf16.gmra.mxu0 %v43
  %v1025 = vpop.f32.mrf.mxu0
  %v1026 = vadd.f32 0.0, %v1025
  %v1027 = vpop.f32.mrf.mxu0
  %v1028 = vadd.f32 0.0, %v1027
  %1029 = vmatmul.bf16.gmra.mxu0 %v44
  %v1030 = vpop.f32.mrf.mxu0
  %v1031 = vadd.f32 0.0, %v1030
  %v1032 = vpop.f32.mrf.mxu0
  %v1033 = vadd.f32 0.0, %v1032
  %1034 = vmatmul.bf16.gmra.mxu0 %v45
  %v1035 = vpop.f32.mrf.mxu0
  %v1036 = vadd.f32 0.0, %v1035
  %v1037 = vpop.f32.mrf.mxu0
  %v1038 = vadd.f32 0.0, %v1037
  %1039 = vmatmul.bf16.gmra.mxu0 %v46
  %v1040 = vpop.f32.mrf.mxu0
  %v1041 = vadd.f32 0.0, %v1040
  %v1042 = vpop.f32.mrf.mxu0
  %v1043 = vadd.f32 0.0, %v1042
  %1044 = vmatmul.bf16.gmra.mxu0 %v47
  %v1045 = vpop.f32.mrf.mxu0
  %v1046 = vadd.f32 0.0, %v1045
  %v1047 = vpop.f32.mrf.mxu0
  %v1048 = vadd.f32 0.0, %v1047
  %1049 = vmatmul.bf16.gmra.mxu0 %v48
  %v1050 = vpop.f32.mrf.mxu0
  %v1051 = vadd.f32 0.0, %v1050
  %v1052 = vpop.f32.mrf.mxu0
  %1053 = vdwg.mxu0
  %1054 = vmatpush.bf16.msra.mxu0 %v577
  %1055 = vmatpush.bf16.msra.mxu0 %v564
  %1056 = vmatpush.bf16.msra.mxu0 %v551
  %1057 = vmatpush.bf16.msra.mxu0 %v538
  %1058 = vmatpush.bf16.msra.mxu0 %v525
  %1059 = vmatpush.bf16.msra.mxu0 %v512
  %1060 = vmatpush.bf16.msra.mxu0 %v499
  %1061 = vmatpush.bf16.msra.mxu0 %v486
  %1062 = vmatmul.bf16.gmra.mxu0 %v36
  %v1063 = vpop.f32.mrf.mxu0
  %v1064 = vadd.f32 0.0, %v1063
  %v1065 = vpop.f32.mrf.mxu0
  %v1066 = vadd.f32 0.0, %v1065
  %1067 = vmatmul.bf16.gmra.mxu0 %v37
  %v1068 = vpop.f32.mrf.mxu0
  %v1069 = vadd.f32 0.0, %v1068
  %v1070 = vpop.f32.mrf.mxu0
  %v1071 = vadd.f32 0.0, %v1070
  %1072 = vmatmul.bf16.gmra.mxu0 %v38
  %v1073 = vpop.f32.mrf.mxu0
  %v1074 = vadd.f32 0.0, %v1073
  %v1075 = vpop.f32.mrf.mxu0
  %v1076 = vadd.f32 0.0, %v1075
  %1077 = vmatmul.bf16.gmra.mxu0 %v39
  %v1078 = vpop.f32.mrf.mxu0
  %v1079 = vadd.f32 0.0, %v1078
  %v1080 = vpop.f32.mrf.mxu0
  %v1081 = vadd.f32 0.0, %v1080
  %1082 = vmatmul.bf16.gmra.mxu0 %v40
  %v1083 = vpop.f32.mrf.mxu0
  %v1084 = vadd.f32 0.0, %v1083
  %v1085 = vpop.f32.mrf.mxu0
  %v1086 = vadd.f32 0.0, %v1085
  %1087 = vmatmul.bf16.gmra.mxu0 %v41
  %v1088 = vpop.f32.mrf.mxu0
  %v1089 = vadd.f32 0.0, %v1088
  %v1090 = vpop.f32.mrf.mxu0
  %v1091 = vadd.f32 0.0, %v1090
  %1092 = vmatmul.bf16.gmra.mxu0 %v42
  %v1093 = vpop.f32.mrf.mxu0
  %v1094 = vadd.f32 0.0, %v1093
  %v1095 = vpop.f32.mrf.mxu0
  %v1096 = vadd.f32 0.0, %v1095
  %1097 = vmatmul.bf16.gmra.mxu0 %v43
  %v1098 = vpop.f32.mrf.mxu0
  %v1099 = vadd.f32 0.0, %v1098
  %v1100 = vpop.f32.mrf.mxu0
  %v1101 = vadd.f32 0.0, %v1100
  %1102 = vmatmul.bf16.gmra.mxu0 %v44
  %v1103 = vpop.f32.mrf.mxu0
  %v1104 = vadd.f32 0.0, %v1103
  %v1105 = vpop.f32.mrf.mxu0
  %v1106 = vadd.f32 0.0, %v1105
  %1107 = vmatmul.bf16.gmra.mxu0 %v45
  %v1108 = vpop.f32.mrf.mxu0
  %v1109 = vadd.f32 0.0, %v1108
  %v1110 = vpop.f32.mrf.mxu0
  %v1111 = vadd.f32 0.0, %v1110
  %1112 = vmatmul.bf16.gmra.mxu0 %v46
  %v1113 = vpop.f32.mrf.mxu0
  %v1114 = vadd.f32 0.0, %v1113
  %v1115 = vpop.f32.mrf.mxu0
  %v1116 = vadd.f32 0.0, %v1115
  %1117 = vmatmul.bf16.gmra.mxu0 %v47
  %v1118 = vpop.f32.mrf.mxu0
  %v1119 = vadd.f32 0.0, %v1118
  %v1120 = vpop.f32.mrf.mxu0
  %v1121 = vadd.f32 0.0, %v1120
  %1122 = vmatmul.bf16.gmra.mxu0 %v48
  %v1123 = vpop.f32.mrf.mxu0
  %v1124 = vadd.f32 0.0, %v1123
  %v1125 = vpop.f32.mrf.mxu0
  %1126 = vdwg.mxu0
  %1127 = vmatpush.bf16.msra.mxu0 %v578
  %1128 = vmatpush.bf16.msra.mxu0 %v565
  %1129 = vmatpush.bf16.msra.mxu0 %v552
  %1130 = vmatpush.bf16.msra.mxu0 %v539
  %1131 = vmatpush.bf16.msra.mxu0 %v526
  %1132 = vmatpush.bf16.msra.mxu0 %v513
  %1133 = vmatpush.bf16.msra.mxu0 %v500
  %1134 = vmatpush.bf16.msra.mxu0 %v487
  %1135 = vmatmul.bf16.gmra.mxu0 %v36
  %v1136 = vpop.f32.mrf.mxu0
  %v1137 = vadd.f32 0.0, %v1136
  %v1138 = vpop.f32.mrf.mxu0
  %v1139 = vadd.f32 0.0, %v1138
  %1140 = vmatmul.bf16.gmra.mxu0 %v37
  %v1141 = vpop.f32.mrf.mxu0
  %v1142 = vadd.f32 0.0, %v1141
  %v1143 = vpop.f32.mrf.mxu0
  %v1144 = vadd.f32 0.0, %v1143
  %1145 = vmatmul.bf16.gmra.mxu0 %v38
  %v1146 = vpop.f32.mrf.mxu0
  %v1147 = vadd.f32 0.0, %v1146
  %v1148 = vpop.f32.mrf.mxu0
  %v1149 = vadd.f32 0.0, %v1148
  %1150 = vmatmul.bf16.gmra.mxu0 %v39
  %v1151 = vpop.f32.mrf.mxu0
  %v1152 = vadd.f32 0.0, %v1151
  %v1153 = vpop.f32.mrf.mxu0
  %v1154 = vadd.f32 0.0, %v1153
  %1155 = vmatmul.bf16.gmra.mxu0 %v40
  %v1156 = vpop.f32.mrf.mxu0
  %v1157 = vadd.f32 0.0, %v1156
  %v1158 = vpop.f32.mrf.mxu0
  %v1159 = vadd.f32 0.0, %v1158
  %1160 = vmatmul.bf16.gmra.mxu0 %v41
  %v1161 = vpop.f32.mrf.mxu0
  %v1162 = vadd.f32 0.0, %v1161
  %v1163 = vpop.f32.mrf.mxu0
  %v1164 = vadd.f32 0.0, %v1163
  %1165 = vmatmul.bf16.gmra.mxu0 %v42
  %v1166 = vpop.f32.mrf.mxu0
  %v1167 = vadd.f32 0.0, %v1166
  %v1168 = vpop.f32.mrf.mxu0
  %v1169 = vadd.f32 0.0, %v1168
  %1170 = vmatmul.bf16.gmra.mxu0 %v43
  %v1171 = vpop.f32.mrf.mxu0
  %v1172 = vadd.f32 0.0, %v1171
  %v1173 = vpop.f32.mrf.mxu0
  %v1174 = vadd.f32 0.0, %v1173
  %1175 = vmatmul.bf16.gmra.mxu0 %v44
  %v1176 = vpop.f32.mrf.mxu0
  %v1177 = vadd.f32 0.0, %v1176
  %v1178 = vpop.f32.mrf.mxu0
  %v1179 = vadd.f32 0.0, %v1178
  %1180 = vmatmul.bf16.gmra.mxu0 %v45
  %v1181 = vpop.f32.mrf.mxu0
  %v1182 = vadd.f32 0.0, %v1181
  %v1183 = vpop.f32.mrf.mxu0
  %v1184 = vadd.f32 0.0, %v1183
  %1185 = vmatmul.bf16.gmra.mxu0 %v46
  %v1186 = vpop.f32.mrf.mxu0
  %v1187 = vadd.f32 0.0, %v1186
  %v1188 = vpop.f32.mrf.mxu0
  %v1189 = vadd.f32 0.0, %v1188
  %1190 = vmatmul.bf16.gmra.mxu0 %v47
  %v1191 = vpop.f32.mrf.mxu0
  %v1192 = vadd.f32 0.0, %v1191
  %v1193 = vpop.f32.mrf.mxu0
  %v1194 = vadd.f32 0.0, %v1193
  %1195 = vmatmul.bf16.gmra.mxu0 %v48
  %v1196 = vpop.f32.mrf.mxu0
  %v1197 = vadd.f32 0.0, %v1196
  %v1198 = vpop.f32.mrf.mxu0
  %1199 = vdwg.mxu0
  %1200 = vmatpush.bf16.msra.mxu0 %v579
  %1201 = vmatpush.bf16.msra.mxu0 %v566
  %1202 = vmatpush.bf16.msra.mxu0 %v553
  %1203 = vmatpush.bf16.msra.mxu0 %v540
  %1204 = vmatpush.bf16.msra.mxu0 %v527
  %1205 = vmatpush.bf16.msra.mxu0 %v514
  %1206 = vmatpush.bf16.msra.mxu0 %v501
  %1207 = vmatpush.bf16.msra.mxu0 %v488
  %1208 = vmatmul.bf16.gmra.mxu0 %v36
  %v1209 = vpop.f32.mrf.mxu0
  %v1210 = vadd.f32 0.0, %v1209
  %v1211 = vpop.f32.mrf.mxu0
  %v1212 = vadd.f32 0.0, %v1211
  %1213 = vmatmul.bf16.gmra.mxu0 %v37
  %v1214 = vpop.f32.mrf.mxu0
  %v1215 = vadd.f32 0.0, %v1214
  %v1216 = vpop.f32.mrf.mxu0
  %v1217 = vadd.f32 0.0, %v1216
  %1218 = vmatmul.bf16.gmra.mxu0 %v38
  %v1219 = vpop.f32.mrf.mxu0
  %v1220 = vadd.f32 0.0, %v1219
  %v1221 = vpop.f32.mrf.mxu0
  %v1222 = vadd.f32 0.0, %v1221
  %1223 = vmatmul.bf16.gmra.mxu0 %v39
  %v1224 = vpop.f32.mrf.mxu0
  %v1225 = vadd.f32 0.0, %v1224
  %v1226 = vpop.f32.mrf.mxu0
  %v1227 = vadd.f32 0.0, %v1226
  %1228 = vmatmul.bf16.gmra.mxu0 %v40
  %v1229 = vpop.f32.mrf.mxu0
  %v1230 = vadd.f32 0.0, %v1229
  %v1231 = vpop.f32.mrf.mxu0
  %v1232 = vadd.f32 0.0, %v1231
  %1233 = vmatmul.bf16.gmra.mxu0 %v41
  %v1234 = vpop.f32.mrf.mxu0
  %v1235 = vadd.f32 0.0, %v1234
  %v1236 = vpop.f32.mrf.mxu0
  %v1237 = vadd.f32 0.0, %v1236
  %1238 = vmatmul.bf16.gmra.mxu0 %v42
  %v1239 = vpop.f32.mrf.mxu0
  %v1240 = vadd.f32 0.0, %v1239
  %v1241 = vpop.f32.mrf.mxu0
  %v1242 = vadd.f32 0.0, %v1241
  %1243 = vmatmul.bf16.gmra.mxu0 %v43
  %v1244 = vpop.f32.mrf.mxu0
  %v1245 = vadd.f32 0.0, %v1244
  %v1246 = vpop.f32.mrf.mxu0
  %v1247 = vadd.f32 0.0, %v1246
  %1248 = vmatmul.bf16.gmra.mxu0 %v44
  %v1249 = vpop.f32.mrf.mxu0
  %v1250 = vadd.f32 0.0, %v1249
  %v1251 = vpop.f32.mrf.mxu0
  %v1252 = vadd.f32 0.0, %v1251
  %1253 = vmatmul.bf16.gmra.mxu0 %v45
  %v1254 = vpop.f32.mrf.mxu0
  %v1255 = vadd.f32 0.0, %v1254
  %v1256 = vpop.f32.mrf.mxu0
  %v1257 = vadd.f32 0.0, %v1256
  %1258 = vmatmul.bf16.gmra.mxu0 %v46
  %v1259 = vpop.f32.mrf.mxu0
  %v1260 = vadd.f32 0.0, %v1259
  %v1261 = vpop.f32.mrf.mxu0
  %v1262 = vadd.f32 0.0, %v1261
  %1263 = vmatmul.bf16.gmra.mxu0 %v47
  %v1264 = vpop.f32.mrf.mxu0
  %v1265 = vadd.f32 0.0, %v1264
  %v1266 = vpop.f32.mrf.mxu0
  %v1267 = vadd.f32 0.0, %v1266
  %1268 = vmatmul.bf16.gmra.mxu0 %v48
  %v1269 = vpop.f32.mrf.mxu0
  %v1270 = vadd.f32 0.0, %v1269
  %v1271 = vpop.f32.mrf.mxu0
  %1272 = vdwg.mxu0
  %1273 = vmatpush.bf16.msra.mxu0 %v580
  %1274 = vmatpush.bf16.msra.mxu0 %v567
  %1275 = vmatpush.bf16.msra.mxu0 %v554
  %1276 = vmatpush.bf16.msra.mxu0 %v541
  %1277 = vmatpush.bf16.msra.mxu0 %v528
  %1278 = vmatpush.bf16.msra.mxu0 %v515
  %1279 = vmatpush.bf16.msra.mxu0 %v502
  %1280 = vmatpush.bf16.msra.mxu0 %v489
  %1281 = vmatmul.bf16.gmra.mxu0 %v36
  %v1282 = vpop.f32.mrf.mxu0
  %v1283 = vadd.f32 0.0, %v1282
  %v1284 = vpop.f32.mrf.mxu0
  %v1285 = vadd.f32 0.0, %v1284
  %1286 = vmatmul.bf16.gmra.mxu0 %v37
  %v1287 = vpop.f32.mrf.mxu0
  %v1288 = vadd.f32 0.0, %v1287
  %v1289 = vpop.f32.mrf.mxu0
  %v1290 = vadd.f32 0.0, %v1289
  %1291 = vmatmul.bf16.gmra.mxu0 %v38
  %v1292 = vpop.f32.mrf.mxu0
  %v1293 = vadd.f32 0.0, %v1292
  %v1294 = vpop.f32.mrf.mxu0
  %v1295 = vadd.f32 0.0, %v1294
  %1296 = vmatmul.bf16.gmra.mxu0 %v39
  %v1297 = vpop.f32.mrf.mxu0
  %v1298 = vadd.f32 0.0, %v1297
  %v1299 = vpop.f32.mrf.mxu0
  %v1300 = vadd.f32 0.0, %v1299
  %1301 = vmatmul.bf16.gmra.mxu0 %v40
  %v1302 = vpop.f32.mrf.mxu0
  %v1303 = vadd.f32 0.0, %v1302
  %v1304 = vpop.f32.mrf.mxu0
  %v1305 = vadd.f32 0.0, %v1304
  %1306 = vmatmul.bf16.gmra.mxu0 %v41
  %v1307 = vpop.f32.mrf.mxu0
  %v1308 = vadd.f32 0.0, %v1307
  %v1309 = vpop.f32.mrf.mxu0
  %v1310 = vadd.f32 0.0, %v1309
  %1311 = vmatmul.bf16.gmra.mxu0 %v42
  %v1312 = vpop.f32.mrf.mxu0
  %v1313 = vadd.f32 0.0, %v1312
  %v1314 = vpop.f32.mrf.mxu0
  %v1315 = vadd.f32 0.0, %v1314
  %1316 = vmatmul.bf16.gmra.mxu0 %v43
  %v1317 = vpop.f32.mrf.mxu0
  %v1318 = vadd.f32 0.0, %v1317
  %v1319 = vpop.f32.mrf.mxu0
  %v1320 = vadd.f32 0.0, %v1319
  %1321 = vmatmul.bf16.gmra.mxu0 %v44
  %v1322 = vpop.f32.mrf.mxu0
  %v1323 = vadd.f32 0.0, %v1322
  %v1324 = vpop.f32.mrf.mxu0
  %v1325 = vadd.f32 0.0, %v1324
  %1326 = vmatmul.bf16.gmra.mxu0 %v45
  %v1327 = vpop.f32.mrf.mxu0
  %v1328 = vadd.f32 0.0, %v1327
  %v1329 = vpop.f32.mrf.mxu0
  %v1330 = vadd.f32 0.0, %v1329
  %1331 = vmatmul.bf16.gmra.mxu0 %v46
  %v1332 = vpop.f32.mrf.mxu0
  %v1333 = vadd.f32 0.0, %v1332
  %v1334 = vpop.f32.mrf.mxu0
  %v1335 = vadd.f32 0.0, %v1334
  %1336 = vmatmul.bf16.gmra.mxu0 %v47
  %v1337 = vpop.f32.mrf.mxu0
  %v1338 = vadd.f32 0.0, %v1337
  %v1339 = vpop.f32.mrf.mxu0
  %v1340 = vadd.f32 0.0, %v1339
  %1341 = vmatmul.bf16.gmra.mxu0 %v48
  %v1342 = vpop.f32.mrf.mxu0
  %v1343 = vadd.f32 0.0, %v1342
  %v1344 = vpop.f32.mrf.mxu0
  %1345 = vdwg.mxu0
  %1346 = vmatpush.bf16.msra.mxu0 %v581
  %1347 = vmatpush.bf16.msra.mxu0 %v568
  %1348 = vmatpush.bf16.msra.mxu0 %v555
  %1349 = vmatpush.bf16.msra.mxu0 %v542
  %1350 = vmatpush.bf16.msra.mxu0 %v529
  %1351 = vmatpush.bf16.msra.mxu0 %v516
  %1352 = vmatpush.bf16.msra.mxu0 %v503
  %1353 = vmatpush.bf16.msra.mxu0 %v490
  %1354 = vmatmul.bf16.gmra.mxu0 %v36
  %v1355 = vpop.f32.mrf.mxu0
  %v1356 = vadd.f32 0.0, %v1355
  %v1357 = vpop.f32.mrf.mxu0
  %v1358 = vadd.f32 0.0, %v1357
  %1359 = vmatmul.bf16.gmra.mxu0 %v37
  %v1360 = vpop.f32.mrf.mxu0
  %v1361 = vadd.f32 0.0, %v1360
  %v1362 = vpop.f32.mrf.mxu0
  %v1363 = vadd.f32 0.0, %v1362
  %1364 = vmatmul.bf16.gmra.mxu0 %v38
  %v1365 = vpop.f32.mrf.mxu0
  %v1366 = vadd.f32 0.0, %v1365
  %v1367 = vpop.f32.mrf.mxu0
  %v1368 = vadd.f32 0.0, %v1367
  %1369 = vmatmul.bf16.gmra.mxu0 %v39
  %v1370 = vpop.f32.mrf.mxu0
  %v1371 = vadd.f32 0.0, %v1370
  %v1372 = vpop.f32.mrf.mxu0
  %v1373 = vadd.f32 0.0, %v1372
  %1374 = vmatmul.bf16.gmra.mxu0 %v40
  %v1375 = vpop.f32.mrf.mxu0
  %v1376 = vadd.f32 0.0, %v1375
  %v1377 = vpop.f32.mrf.mxu0
  %v1378 = vadd.f32 0.0, %v1377
  %1379 = vmatmul.bf16.gmra.mxu0 %v41
  %v1380 = vpop.f32.mrf.mxu0
  %v1381 = vadd.f32 0.0, %v1380
  %v1382 = vpop.f32.mrf.mxu0
  %v1383 = vadd.f32 0.0, %v1382
  %1384 = vmatmul.bf16.gmra.mxu0 %v42
  %v1385 = vpop.f32.mrf.mxu0
  %v1386 = vadd.f32 0.0, %v1385
  %v1387 = vpop.f32.mrf.mxu0
  %v1388 = vadd.f32 0.0, %v1387
  %1389 = vmatmul.bf16.gmra.mxu0 %v43
  %v1390 = vpop.f32.mrf.mxu0
  %v1391 = vadd.f32 0.0, %v1390
  %v1392 = vpop.f32.mrf.mxu0
  %v1393 = vadd.f32 0.0, %v1392
  %1394 = vmatmul.bf16.gmra.mxu0 %v44
  %v1395 = vpop.f32.mrf.mxu0
  %v1396 = vadd.f32 0.0, %v1395
  %v1397 = vpop.f32.mrf.mxu0
  %v1398 = vadd.f32 0.0, %v1397
  %1399 = vmatmul.bf16.gmra.mxu0 %v45
  %v1400 = vpop.f32.mrf.mxu0
  %v1401 = vadd.f32 0.0, %v1400
  %v1402 = vpop.f32.mrf.mxu0
  %v1403 = vadd.f32 0.0, %v1402
  %1404 = vmatmul.bf16.gmra.mxu0 %v46
  %v1405 = vpop.f32.mrf.mxu0
  %v1406 = vadd.f32 0.0, %v1405
  %v1407 = vpop.f32.mrf.mxu0
  %v1408 = vadd.f32 0.0, %v1407
  %1409 = vmatmul.bf16.gmra.mxu0 %v47
  %v1410 = vpop.f32.mrf.mxu0
  %v1411 = vadd.f32 0.0, %v1410
  %v1412 = vpop.f32.mrf.mxu0
  %v1413 = vadd.f32 0.0, %v1412
  %1414 = vmatmul.bf16.gmra.mxu0 %v48
  %v1415 = vpop.f32.mrf.mxu0
  %v1416 = vadd.f32 0.0, %v1415
  %v1417 = vpop.f32.mrf.mxu0
  %1418 = vdwg.mxu0
  %1419 = vmatpush.bf16.msra.mxu0 %v582
  %1420 = vmatpush.bf16.msra.mxu0 %v569
  %1421 = vmatpush.bf16.msra.mxu0 %v556
  %1422 = vmatpush.bf16.msra.mxu0 %v543
  %1423 = vmatpush.bf16.msra.mxu0 %v530
  %1424 = vmatpush.bf16.msra.mxu0 %v517
  %1425 = vmatpush.bf16.msra.mxu0 %v504
  %1426 = vmatpush.bf16.msra.mxu0 %v491
  %1427 = vmatmul.bf16.gmra.mxu0 %v36
  %v1428 = vpop.f32.mrf.mxu0
  %v1429 = vadd.f32 0.0, %v1428
  %v1430 = vpop.f32.mrf.mxu0
  %v1431 = vadd.f32 0.0, %v1430
  %1432 = vmatmul.bf16.gmra.mxu0 %v37
  %v1433 = vpop.f32.mrf.mxu0
  %v1434 = vadd.f32 0.0, %v1433
  %v1435 = vpop.f32.mrf.mxu0
  %v1436 = vadd.f32 0.0, %v1435
  %1437 = vmatmul.bf16.gmra.mxu0 %v38
  %v1438 = vpop.f32.mrf.mxu0
  %v1439 = vadd.f32 0.0, %v1438
  %v1440 = vpop.f32.mrf.mxu0
  %v1441 = vadd.f32 0.0, %v1440
  %1442 = vmatmul.bf16.gmra.mxu0 %v39
  %v1443 = vpop.f32.mrf.mxu0
  %v1444 = vadd.f32 0.0, %v1443
  %v1445 = vpop.f32.mrf.mxu0
  %v1446 = vadd.f32 0.0, %v1445
  %1447 = vmatmul.bf16.gmra.mxu0 %v40
  %v1448 = vpop.f32.mrf.mxu0
  %v1449 = vadd.f32 0.0, %v1448
  %v1450 = vpop.f32.mrf.mxu0
  %v1451 = vadd.f32 0.0, %v1450
  %1452 = vmatmul.bf16.gmra.mxu0 %v41
  %v1453 = vpop.f32.mrf.mxu0
  %v1454 = vadd.f32 0.0, %v1453
  %v1455 = vpop.f32.mrf.mxu0
  %v1456 = vadd.f32 0.0, %v1455
  %1457 = vmatmul.bf16.gmra.mxu0 %v42
  %v1458 = vpop.f32.mrf.mxu0
  %v1459 = vadd.f32 0.0, %v1458
  %v1460 = vpop.f32.mrf.mxu0
  %v1461 = vadd.f32 0.0, %v1460
  %1462 = vmatmul.bf16.gmra.mxu0 %v43
  %v1463 = vpop.f32.mrf.mxu0
  %v1464 = vadd.f32 0.0, %v1463
  %v1465 = vpop.f32.mrf.mxu0
  %v1466 = vadd.f32 0.0, %v1465
  %1467 = vmatmul.bf16.gmra.mxu0 %v44
  %v1468 = vpop.f32.mrf.mxu0
  %v1469 = vadd.f32 0.0, %v1468
  %v1470 = vpop.f32.mrf.mxu0
  %v1471 = vadd.f32 0.0, %v1470
  %1472 = vmatmul.bf16.gmra.mxu0 %v45
  %v1473 = vpop.f32.mrf.mxu0
  %v1474 = vadd.f32 0.0, %v1473
  %v1475 = vpop.f32.mrf.mxu0
  %v1476 = vadd.f32 0.0, %v1475
  %1477 = vmatmul.bf16.gmra.mxu0 %v46
  %v1478 = vpop.f32.mrf.mxu0
  %v1479 = vadd.f32 0.0, %v1478
  %v1480 = vpop.f32.mrf.mxu0
  %v1481 = vadd.f32 0.0, %v1480
  %1482 = vmatmul.bf16.gmra.mxu0 %v47
  %v1483 = vpop.f32.mrf.mxu0
  %v1484 = vadd.f32 0.0, %v1483
  %v1485 = vpop.f32.mrf.mxu0
  %v1486 = vadd.f32 0.0, %v1485
  %1487 = vmatmul.bf16.gmra.mxu0 %v48
  %v1488 = vpop.f32.mrf.mxu0
  %v1489 = vadd.f32 0.0, %v1488
  %v1490 = vpop.f32.mrf.mxu0
  %1491 = vdwg.mxu0
  %1492 = vmatpush.bf16.msra.mxu0 %v583
  %1493 = vmatpush.bf16.msra.mxu0 %v570
  %1494 = vmatpush.bf16.msra.mxu0 %v557
  %1495 = vmatpush.bf16.msra.mxu0 %v544
  %1496 = vmatpush.bf16.msra.mxu0 %v531
  %1497 = vmatpush.bf16.msra.mxu0 %v518
  %1498 = vmatpush.bf16.msra.mxu0 %v505
  %1499 = vmatpush.bf16.msra.mxu0 %v492
  %1500 = vmatmul.bf16.gmra.mxu0 %v36
  %v1501 = vpop.f32.mrf.mxu0
  %v1502 = vadd.f32 0.0, %v1501
  %v1503 = vpop.f32.mrf.mxu0
  %v1504 = vadd.f32 0.0, %v1503
  %1505 = vmatmul.bf16.gmra.mxu0 %v37
  %v1506 = vpop.f32.mrf.mxu0
  %v1507 = vadd.f32 0.0, %v1506
  %v1508 = vpop.f32.mrf.mxu0
  %v1509 = vadd.f32 0.0, %v1508
  %1510 = vmatmul.bf16.gmra.mxu0 %v38
  %v1511 = vpop.f32.mrf.mxu0
  %v1512 = vadd.f32 0.0, %v1511
  %v1513 = vpop.f32.mrf.mxu0
  %v1514 = vadd.f32 0.0, %v1513
  %1515 = vmatmul.bf16.gmra.mxu0 %v39
  %v1516 = vpop.f32.mrf.mxu0
  %v1517 = vadd.f32 0.0, %v1516
  %v1518 = vpop.f32.mrf.mxu0
  %v1519 = vadd.f32 0.0, %v1518
  %1520 = vmatmul.bf16.gmra.mxu0 %v40
  %v1521 = vpop.f32.mrf.mxu0
  %v1522 = vadd.f32 0.0, %v1521
  %v1523 = vpop.f32.mrf.mxu0
  %v1524 = vadd.f32 0.0, %v1523
  %1525 = vmatmul.bf16.gmra.mxu0 %v41
  %v1526 = vpop.f32.mrf.mxu0
  %v1527 = vadd.f32 0.0, %v1526
  %v1528 = vpop.f32.mrf.mxu0
  %v1529 = vadd.f32 0.0, %v1528
  %1530 = vmatmul.bf16.gmra.mxu0 %v42
  %v1531 = vpop.f32.mrf.mxu0
  %v1532 = vadd.f32 0.0, %v1531
  %v1533 = vpop.f32.mrf.mxu0
  %v1534 = vadd.f32 0.0, %v1533
  %1535 = vmatmul.bf16.gmra.mxu0 %v43
  %v1536 = vpop.f32.mrf.mxu0
  %v1537 = vadd.f32 0.0, %v1536
  %v1538 = vpop.f32.mrf.mxu0
  %v1539 = vadd.f32 0.0, %v1538
  %1540 = vmatmul.bf16.gmra.mxu0 %v44
  %v1541 = vpop.f32.mrf.mxu0
  %v1542 = vadd.f32 0.0, %v1541
  %v1543 = vpop.f32.mrf.mxu0
  %v1544 = vadd.f32 0.0, %v1543
  %1545 = vmatmul.bf16.gmra.mxu0 %v45
  %v1546 = vpop.f32.mrf.mxu0
  %v1547 = vadd.f32 0.0, %v1546
  %v1548 = vpop.f32.mrf.mxu0
  %v1549 = vadd.f32 0.0, %v1548
  %1550 = vmatmul.bf16.gmra.mxu0 %v46
  %v1551 = vpop.f32.mrf.mxu0
  %v1552 = vadd.f32 0.0, %v1551
  %v1553 = vpop.f32.mrf.mxu0
  %v1554 = vadd.f32 0.0, %v1553
  %1555 = vmatmul.bf16.gmra.mxu0 %v47
  %v1556 = vpop.f32.mrf.mxu0
  %v1557 = vadd.f32 0.0, %v1556
  %v1558 = vpop.f32.mrf.mxu0
  %v1559 = vadd.f32 0.0, %v1558
  %1560 = vmatmul.bf16.gmra.mxu0 %v48
  %v1561 = vpop.f32.mrf.mxu0
  %v1562 = vadd.f32 0.0, %v1561
  %v1563 = vpop.f32.mrf.mxu0
  %1564 = vdwg.mxu0
  %1565 = vmatpush.bf16.msra.mxu0 %v584
  %1566 = vmatpush.bf16.msra.mxu0 %v571
  %1567 = vmatpush.bf16.msra.mxu0 %v558
  %1568 = vmatpush.bf16.msra.mxu0 %v545
  %1569 = vmatpush.bf16.msra.mxu0 %v532
  %1570 = vmatpush.bf16.msra.mxu0 %v519
  %1571 = vmatpush.bf16.msra.mxu0 %v506
  %1572 = vmatpush.bf16.msra.mxu0 %v493
  %1573 = vmatmul.bf16.gmra.mxu0 %v36
  %v1574 = vpop.f32.mrf.mxu0
  %v1575 = vadd.f32 0.0, %v1574
  %v1576 = vpop.f32.mrf.mxu0
  %v1577 = vadd.f32 0.0, %v1576
  %1578 = vmatmul.bf16.gmra.mxu0 %v37
  %v1579 = vpop.f32.mrf.mxu0
  %v1580 = vadd.f32 0.0, %v1579
  %v1581 = vpop.f32.mrf.mxu0
  %v1582 = vadd.f32 0.0, %v1581
  %1583 = vmatmul.bf16.gmra.mxu0 %v38
  %v1584 = vpop.f32.mrf.mxu0
  %v1585 = vadd.f32 0.0, %v1584
  %v1586 = vpop.f32.mrf.mxu0
  %v1587 = vadd.f32 0.0, %v1586
  %1588 = vmatmul.bf16.gmra.mxu0 %v39
  %v1589 = vpop.f32.mrf.mxu0
  %v1590 = vadd.f32 0.0, %v1589
  %v1591 = vpop.f32.mrf.mxu0
  %v1592 = vadd.f32 0.0, %v1591
  %1593 = vmatmul.bf16.gmra.mxu0 %v40
  %v1594 = vpop.f32.mrf.mxu0
  %v1595 = vadd.f32 0.0, %v1594
  %v1596 = vpop.f32.mrf.mxu0
  %v1597 = vadd.f32 0.0, %v1596
  %1598 = vmatmul.bf16.gmra.mxu0 %v41
  %v1599 = vpop.f32.mrf.mxu0
  %v1600 = vadd.f32 0.0, %v1599
  %v1601 = vpop.f32.mrf.mxu0
  %v1602 = vadd.f32 0.0, %v1601
  %1603 = vmatmul.bf16.gmra.mxu0 %v42
  %v1604 = vpop.f32.mrf.mxu0
  %v1605 = vadd.f32 0.0, %v1604
  %v1606 = vpop.f32.mrf.mxu0
  %v1607 = vadd.f32 0.0, %v1606
  %1608 = vmatmul.bf16.gmra.mxu0 %v43
  %v1609 = vpop.f32.mrf.mxu0
  %v1610 = vadd.f32 0.0, %v1609
  %v1611 = vpop.f32.mrf.mxu0
  %v1612 = vadd.f32 0.0, %v1611
  %1613 = vmatmul.bf16.gmra.mxu0 %v44
  %v1614 = vpop.f32.mrf.mxu0
  %v1615 = vadd.f32 0.0, %v1614
  %v1616 = vpop.f32.mrf.mxu0
  %v1617 = vadd.f32 0.0, %v1616
  %1618 = vmatmul.bf16.gmra.mxu0 %v45
  %v1619 = vpop.f32.mrf.mxu0
  %v1620 = vadd.f32 0.0, %v1619
  %v1621 = vpop.f32.mrf.mxu0
  %v1622 = vadd.f32 0.0, %v1621
  %1623 = vmatmul.bf16.gmra.mxu0 %v46
  %v1624 = vpop.f32.mrf.mxu0
  %v1625 = vadd.f32 0.0, %v1624
  %v1626 = vpop.f32.mrf.mxu0
  %v1627 = vadd.f32 0.0, %v1626
  %1628 = vmatmul.bf16.gmra.mxu0 %v47
  %v1629 = vpop.f32.mrf.mxu0
  %v1630 = vadd.f32 0.0, %v1629
  %v1631 = vpop.f32.mrf.mxu0
  %v1632 = vadd.f32 0.0, %v1631
  %1633 = vmatmul.bf16.gmra.mxu0 %v48
  %v1634 = vpop.f32.mrf.mxu0
  %v1635 = vadd.f32 0.0, %v1634
  %v1636 = vpop.f32.mrf.mxu0
  %1637 = vdwg.mxu0
  %1638 = vst [vmem:[%s2] sm:$0xff] %v699
  %1639 = vst [vmem:[%s2 + $0x8] sm:$0xff] %v772
  %1640 = vst [vmem:[%s2 + $0x10] sm:$0xff] %v845
  %1641 = vst [vmem:[%s2 + $0x18] sm:$0xff] %v918
  %1642 = vst [vmem:[%s2 + $0x20] sm:$0xff] %v991
  %1643 = vst [vmem:[%s2 + $0x28] sm:$0xff] %v1064
  %1644 = vst [vmem:[%s2 + $0x30] sm:$0xff] %v1137
  %1645 = vst [vmem:[%s2 + $0x38] sm:$0xff] %v1210
  %1646 = vst [vmem:[%s2 + $0x40] sm:$0xff] %v1283
  %1647 = vst [vmem:[%s2 + $0x48] sm:$0xff] %v1356
  %1648 = vst [vmem:[%s2 + $0x50] sm:$0xff] %v1429
  %1649 = vst [vmem:[%s2 + $0x58] sm:$0xff] %v1502
  %1650 = vst [vmem:[%s2 + $0x60] sm:$0xff] %v1575
  %1651 = vst [vmem:[%s2 + $0x68] sm:$0xff] %v701
  %1652 = vst [vmem:[%s2 + $0x70] sm:$0xff] %v774
  %1653 = vst [vmem:[%s2 + $0x78] sm:$0xff] %v847
  %1654 = vst [vmem:[%s2 + $0x80] sm:$0xff] %v920
  %1655 = vst [vmem:[%s2 + $0x88] sm:$0xff] %v993
  %1656 = vst [vmem:[%s2 + $0x90] sm:$0xff] %v1066
  %1657 = vst [vmem:[%s2 + $0x98] sm:$0xff] %v1139
  %1658 = vst [vmem:[%s2 + $0xa0] sm:$0xff] %v1212
  %1659 = vst [vmem:[%s2 + $0xa8] sm:$0xff] %v1285
  %1660 = vst [vmem:[%s2 + $0xb0] sm:$0xff] %v1358
  %1661 = vst [vmem:[%s2 + $0xb8] sm:$0xff] %v1431
  %1662 = vst [vmem:[%s2 + $0xc0] sm:$0xff] %v1504
  %1663 = vst [vmem:[%s2 + $0xc8] sm:$0xff] %v1577
  %1664 = vst [vmem:[%s2 + $0xd0] sm:$0xff] %v704
  %1665 = vst [vmem:[%s2 + $0xd8] sm:$0xff] %v777
  %1666 = vst [vmem:[%s2 + $0xe0] sm:$0xff] %v850
  %1667 = vst [vmem:[%s2 + $0xe8] sm:$0xff] %v923
  %1668 = vst [vmem:[%s2 + $0xf0] sm:$0xff] %v996
  %1669 = vst [vmem:[%s2 + $0xf8] sm:$0xff] %v1069
  %1670 = vst [vmem:[%s2 + $0x100] sm:$0xff] %v1142
  %1671 = vst [vmem:[%s2 + $0x108] sm:$0xff] %v1215
  %1672 = vst [vmem:[%s2 + $0x110] sm:$0xff] %v1288
  %1673 = vst [vmem:[%s2 + $0x118] sm:$0xff] %v1361
  %1674 = vst [vmem:[%s2 + $0x120] sm:$0xff] %v1434
  %1675 = vst [vmem:[%s2 + $0x128] sm:$0xff] %v1507
  %1676 = vst [vmem:[%s2 + $0x130] sm:$0xff] %v1580
  %1677 = vst [vmem:[%s2 + $0x138] sm:$0xff] %v706
  %1678 = vst [vmem:[%s2 + $0x140] sm:$0xff] %v779
  %1679 = vst [vmem:[%s2 + $0x148] sm:$0xff] %v852
  %1680 = vst [vmem:[%s2 + $0x150] sm:$0xff] %v925
  %1681 = vst [vmem:[%s2 + $0x158] sm:$0xff] %v998
  %1682 = vst [vmem:[%s2 + $0x160] sm:$0xff] %v1071
  %1683 = vst [vmem:[%s2 + $0x168] sm:$0xff] %v1144
  %1684 = vst [vmem:[%s2 + $0x170] sm:$0xff] %v1217
  %1685 = vst [vmem:[%s2 + $0x178] sm:$0xff] %v1290
  %1686 = vst [vmem:[%s2 + $0x180] sm:$0xff] %v1363
  %1687 = vst [vmem:[%s2 + $0x188] sm:$0xff] %v1436
  %1688 = vst [vmem:[%s2 + $0x190] sm:$0xff] %v1509
  %1689 = vst [vmem:[%s2 + $0x198] sm:$0xff] %v1582
  %1690 = vst [vmem:[%s2 + $0x1a0] sm:$0xff] %v709
  %1691 = vst [vmem:[%s2 + $0x1a8] sm:$0xff] %v782
  %1692 = vst [vmem:[%s2 + $0x1b0] sm:$0xff] %v855
  %1693 = vst [vmem:[%s2 + $0x1b8] sm:$0xff] %v928
  %1694 = vst [vmem:[%s2 + $0x1c0] sm:$0xff] %v1001
  %1695 = vst [vmem:[%s2 + $0x1c8] sm:$0xff] %v1074
  %1696 = vst [vmem:[%s2 + $0x1d0] sm:$0xff] %v1147
  %1697 = vst [vmem:[%s2 + $0x1d8] sm:$0xff] %v1220
  %1698 = vst [vmem:[%s2 + $0x1e0] sm:$0xff] %v1293
  %1699 = vst [vmem:[%s2 + $0x1e8] sm:$0xff] %v1366
  %1700 = vst [vmem:[%s2 + $0x1f0] sm:$0xff] %v1439
  %1701 = vst [vmem:[%s2 + $0x1f8] sm:$0xff] %v1512
  %1702 = vst [vmem:[%s2 + $0x200] sm:$0xff] %v1585
  %1703 = vst [vmem:[%s2 + $0x208] sm:$0xff] %v711
  %1704 = vst [vmem:[%s2 + $0x210] sm:$0xff] %v784
  %1705 = vst [vmem:[%s2 + $0x218] sm:$0xff] %v857
  %1706 = vst [vmem:[%s2 + $0x220] sm:$0xff] %v930
  %1707 = vst [vmem:[%s2 + $0x228] sm:$0xff] %v1003
  %1708 = vst [vmem:[%s2 + $0x230] sm:$0xff] %v1076
  %1709 = vst [vmem:[%s2 + $0x238] sm:$0xff] %v1149
  %1710 = vst [vmem:[%s2 + $0x240] sm:$0xff] %v1222
  %1711 = vst [vmem:[%s2 + $0x248] sm:$0xff] %v1295
  %1712 = vst [vmem:[%s2 + $0x250] sm:$0xff] %v1368
  %1713 = vst [vmem:[%s2 + $0x258] sm:$0xff] %v1441
  %1714 = vst [vmem:[%s2 + $0x260] sm:$0xff] %v1514
  %1715 = vst [vmem:[%s2 + $0x268] sm:$0xff] %v1587
  %1716 = vst [vmem:[%s2 + $0x270] sm:$0xff] %v714
  %1717 = vst [vmem:[%s2 + $0x278] sm:$0xff] %v787
  %1718 = vst [vmem:[%s2 + $0x280] sm:$0xff] %v860
  %1719 = vst [vmem:[%s2 + $0x288] sm:$0xff] %v933
  %1720 = vst [vmem:[%s2 + $0x290] sm:$0xff] %v1006
  %1721 = vst [vmem:[%s2 + $0x298] sm:$0xff] %v1079
  %1722 = vst [vmem:[%s2 + $0x2a0] sm:$0xff] %v1152
  %1723 = vst [vmem:[%s2 + $0x2a8] sm:$0xff] %v1225
  %1724 = vst [vmem:[%s2 + $0x2b0] sm:$0xff] %v1298
  %1725 = vst [vmem:[%s2 + $0x2b8] sm:$0xff] %v1371
  %1726 = vst [vmem:[%s2 + $0x2c0] sm:$0xff] %v1444
  %1727 = vst [vmem:[%s2 + $0x2c8] sm:$0xff] %v1517
  %1728 = vst [vmem:[%s2 + $0x2d0] sm:$0xff] %v1590
  %1729 = vst [vmem:[%s2 + $0x2d8] sm:$0xff] %v716
  %1730 = vst [vmem:[%s2 + $0x2e0] sm:$0xff] %v789
  %1731 = vst [vmem:[%s2 + $0x2e8] sm:$0xff] %v862
  %1732 = vst [vmem:[%s2 + $0x2f0] sm:$0xff] %v935
  %1733 = vst [vmem:[%s2 + $0x2f8] sm:$0xff] %v1008
  %1734 = vst [vmem:[%s2 + $0x300] sm:$0xff] %v1081
  %1735 = vst [vmem:[%s2 + $0x308] sm:$0xff] %v1154
  %1736 = vst [vmem:[%s2 + $0x310] sm:$0xff] %v1227
  %1737 = vst [vmem:[%s2 + $0x318] sm:$0xff] %v1300
  %1738 = vst [vmem:[%s2 + $0x320] sm:$0xff] %v1373
  %1739 = vst [vmem:[%s2 + $0x328] sm:$0xff] %v1446
  %1740 = vst [vmem:[%s2 + $0x330] sm:$0xff] %v1519
  %1741 = vst [vmem:[%s2 + $0x338] sm:$0xff] %v1592
  %1742 = vst [vmem:[%s2 + $0x340] sm:$0xff] %v719
  %1743 = vst [vmem:[%s2 + $0x348] sm:$0xff] %v792
  %1744 = vst [vmem:[%s2 + $0x350] sm:$0xff] %v865
  %1745 = vst [vmem:[%s2 + $0x358] sm:$0xff] %v938
  %1746 = vst [vmem:[%s2 + $0x360] sm:$0xff] %v1011
  %1747 = vst [vmem:[%s2 + $0x368] sm:$0xff] %v1084
  %1748 = vst [vmem:[%s2 + $0x370] sm:$0xff] %v1157
  %1749 = vst [vmem:[%s2 + $0x378] sm:$0xff] %v1230
  %1750 = vst [vmem:[%s2 + $0x380] sm:$0xff] %v1303
  %1751 = vst [vmem:[%s2 + $0x388] sm:$0xff] %v1376
  %1752 = vst [vmem:[%s2 + $0x390] sm:$0xff] %v1449
  %1753 = vst [vmem:[%s2 + $0x398] sm:$0xff] %v1522
  %1754 = vst [vmem:[%s2 + $0x3a0] sm:$0xff] %v1595
  %1755 = vst [vmem:[%s2 + $0x3a8] sm:$0xff] %v721
  %1756 = vst [vmem:[%s2 + $0x3b0] sm:$0xff] %v794
  %1757 = vst [vmem:[%s2 + $0x3b8] sm:$0xff] %v867
  %1758 = vst [vmem:[%s2 + $0x3c0] sm:$0xff] %v940
  %1759 = vst [vmem:[%s2 + $0x3c8] sm:$0xff] %v1013
  %1760 = vst [vmem:[%s2 + $0x3d0] sm:$0xff] %v1086
  %1761 = vst [vmem:[%s2 + $0x3d8] sm:$0xff] %v1159
  %1762 = vst [vmem:[%s2 + $0x3e0] sm:$0xff] %v1232
  %1763 = vst [vmem:[%s2 + $0x3e8] sm:$0xff] %v1305
  %1764 = vst [vmem:[%s2 + $0x3f0] sm:$0xff] %v1378
  %1765 = vst [vmem:[%s2 + $0x3f8] sm:$0xff] %v1451
  %1766 = vst [vmem:[%s2 + $0x400] sm:$0xff] %v1524
  %1767 = vst [vmem:[%s2 + $0x408] sm:$0xff] %v1597
  %1768 = vst [vmem:[%s2 + $0x410] sm:$0xff] %v724
  %1769 = vst [vmem:[%s2 + $0x418] sm:$0xff] %v797
  %1770 = vst [vmem:[%s2 + $0x420] sm:$0xff] %v870
  %1771 = vst [vmem:[%s2 + $0x428] sm:$0xff] %v943
  %1772 = vst [vmem:[%s2 + $0x430] sm:$0xff] %v1016
  %1773 = vst [vmem:[%s2 + $0x438] sm:$0xff] %v1089
  %1774 = vst [vmem:[%s2 + $0x440] sm:$0xff] %v1162
  %1775 = vst [vmem:[%s2 + $0x448] sm:$0xff] %v1235
  %1776 = vst [vmem:[%s2 + $0x450] sm:$0xff] %v1308
  %1777 = vst [vmem:[%s2 + $0x458] sm:$0xff] %v1381
  %1778 = vst [vmem:[%s2 + $0x460] sm:$0xff] %v1454
  %1779 = vst [vmem:[%s2 + $0x468] sm:$0xff] %v1527
  %1780 = vst [vmem:[%s2 + $0x470] sm:$0xff] %v1600
  %1781 = vst [vmem:[%s2 + $0x478] sm:$0xff] %v726
  %1782 = vst [vmem:[%s2 + $0x480] sm:$0xff] %v799
  %1783 = vst [vmem:[%s2 + $0x488] sm:$0xff] %v872
  %1784 = vst [vmem:[%s2 + $0x490] sm:$0xff] %v945
  %1785 = vst [vmem:[%s2 + $0x498] sm:$0xff] %v1018
  %1786 = vst [vmem:[%s2 + $0x4a0] sm:$0xff] %v1091
  %1787 = vst [vmem:[%s2 + $0x4a8] sm:$0xff] %v1164
  %1788 = vst [vmem:[%s2 + $0x4b0] sm:$0xff] %v1237
  %1789 = vst [vmem:[%s2 + $0x4b8] sm:$0xff] %v1310
  %1790 = vst [vmem:[%s2 + $0x4c0] sm:$0xff] %v1383
  %1791 = vst [vmem:[%s2 + $0x4c8] sm:$0xff] %v1456
  %1792 = vst [vmem:[%s2 + $0x4d0] sm:$0xff] %v1529
  %1793 = vst [vmem:[%s2 + $0x4d8] sm:$0xff] %v1602
  %1794 = vst [vmem:[%s2 + $0x4e0] sm:$0xff] %v729
  %1795 = vst [vmem:[%s2 + $0x4e8] sm:$0xff] %v802
  %1796 = vst [vmem:[%s2 + $0x4f0] sm:$0xff] %v875
  %1797 = vst [vmem:[%s2 + $0x4f8] sm:$0xff] %v948
  %1798 = vst [vmem:[%s2 + $0x500] sm:$0xff] %v1021
  %1799 = vst [vmem:[%s2 + $0x508] sm:$0xff] %v1094
  %1800 = vst [vmem:[%s2 + $0x510] sm:$0xff] %v1167
  %1801 = vst [vmem:[%s2 + $0x518] sm:$0xff] %v1240
  %1802 = vst [vmem:[%s2 + $0x520] sm:$0xff] %v1313
  %1803 = vst [vmem:[%s2 + $0x528] sm:$0xff] %v1386
  %1804 = vst [vmem:[%s2 + $0x530] sm:$0xff] %v1459
  %1805 = vst [vmem:[%s2 + $0x538] sm:$0xff] %v1532
  %1806 = vst [vmem:[%s2 + $0x540] sm:$0xff] %v1605
  %1807 = vst [vmem:[%s2 + $0x548] sm:$0xff] %v731
  %1808 = vst [vmem:[%s2 + $0x550] sm:$0xff] %v804
  %1809 = vst [vmem:[%s2 + $0x558] sm:$0xff] %v877
  %1810 = vst [vmem:[%s2 + $0x560] sm:$0xff] %v950
  %1811 = vst [vmem:[%s2 + $0x568] sm:$0xff] %v1023
  %1812 = vst [vmem:[%s2 + $0x570] sm:$0xff] %v1096
  %1813 = vst [vmem:[%s2 + $0x578] sm:$0xff] %v1169
  %1814 = vst [vmem:[%s2 + $0x580] sm:$0xff] %v1242
  %1815 = vst [vmem:[%s2 + $0x588] sm:$0xff] %v1315
  %1816 = vst [vmem:[%s2 + $0x590] sm:$0xff] %v1388
  %1817 = vst [vmem:[%s2 + $0x598] sm:$0xff] %v1461
  %1818 = vst [vmem:[%s2 + $0x5a0] sm:$0xff] %v1534
  %1819 = vst [vmem:[%s2 + $0x5a8] sm:$0xff] %v1607
  %1820 = vst [vmem:[%s2 + $0x5b0] sm:$0xff] %v734
  %1821 = vst [vmem:[%s2 + $0x5b8] sm:$0xff] %v807
  %1822 = vst [vmem:[%s2 + $0x5c0] sm:$0xff] %v880
  %1823 = vst [vmem:[%s2 + $0x5c8] sm:$0xff] %v953
  %1824 = vst [vmem:[%s2 + $0x5d0] sm:$0xff] %v1026
  %1825 = vst [vmem:[%s2 + $0x5d8] sm:$0xff] %v1099
  %1826 = vst [vmem:[%s2 + $0x5e0] sm:$0xff] %v1172
  %1827 = vst [vmem:[%s2 + $0x5e8] sm:$0xff] %v1245
  %1828 = vst [vmem:[%s2 + $0x5f0] sm:$0xff] %v1318
  %1829 = vst [vmem:[%s2 + $0x5f8] sm:$0xff] %v1391
  %1830 = vst [vmem:[%s2 + $0x600] sm:$0xff] %v1464
  %1831 = vst [vmem:[%s2 + $0x608] sm:$0xff] %v1537
  %1832 = vst [vmem:[%s2 + $0x610] sm:$0xff] %v1610
  %1833 = vst [vmem:[%s2 + $0x618] sm:$0xff] %v736
  %1834 = vst [vmem:[%s2 + $0x620] sm:$0xff] %v809
  %1835 = vst [vmem:[%s2 + $0x628] sm:$0xff] %v882
  %1836 = vst [vmem:[%s2 + $0x630] sm:$0xff] %v955
  %1837 = vst [vmem:[%s2 + $0x638] sm:$0xff] %v1028
  %1838 = vst [vmem:[%s2 + $0x640] sm:$0xff] %v1101
  %1839 = vst [vmem:[%s2 + $0x648] sm:$0xff] %v1174
  %1840 = vst [vmem:[%s2 + $0x650] sm:$0xff] %v1247
  %1841 = vst [vmem:[%s2 + $0x658] sm:$0xff] %v1320
  %1842 = vst [vmem:[%s2 + $0x660] sm:$0xff] %v1393
  %1843 = vst [vmem:[%s2 + $0x668] sm:$0xff] %v1466
  %1844 = vst [vmem:[%s2 + $0x670] sm:$0xff] %v1539
  %1845 = vst [vmem:[%s2 + $0x678] sm:$0xff] %v1612
  %1846 = vst [vmem:[%s2 + $0x680] sm:$0xff] %v739
  %1847 = vst [vmem:[%s2 + $0x688] sm:$0xff] %v812
  %1848 = vst [vmem:[%s2 + $0x690] sm:$0xff] %v885
  %1849 = vst [vmem:[%s2 + $0x698] sm:$0xff] %v958
  %1850 = vst [vmem:[%s2 + $0x6a0] sm:$0xff] %v1031
  %1851 = vst [vmem:[%s2 + $0x6a8] sm:$0xff] %v1104
  %1852 = vst [vmem:[%s2 + $0x6b0] sm:$0xff] %v1177
  %1853 = vst [vmem:[%s2 + $0x6b8] sm:$0xff] %v1250
  %1854 = vst [vmem:[%s2 + $0x6c0] sm:$0xff] %v1323
  %1855 = vst [vmem:[%s2 + $0x6c8] sm:$0xff] %v1396
  %1856 = vst [vmem:[%s2 + $0x6d0] sm:$0xff] %v1469
  %1857 = vst [vmem:[%s2 + $0x6d8] sm:$0xff] %v1542
  %1858 = vst [vmem:[%s2 + $0x6e0] sm:$0xff] %v1615
  %1859 = vst [vmem:[%s2 + $0x6e8] sm:$0xff] %v741
  %1860 = vst [vmem:[%s2 + $0x6f0] sm:$0xff] %v814
  %1861 = vst [vmem:[%s2 + $0x6f8] sm:$0xff] %v887
  %1862 = vst [vmem:[%s2 + $0x700] sm:$0xff] %v960
  %1863 = vst [vmem:[%s2 + $0x708] sm:$0xff] %v1033
  %1864 = vst [vmem:[%s2 + $0x710] sm:$0xff] %v1106
  %1865 = vst [vmem:[%s2 + $0x718] sm:$0xff] %v1179
  %1866 = vst [vmem:[%s2 + $0x720] sm:$0xff] %v1252
  %1867 = vst [vmem:[%s2 + $0x728] sm:$0xff] %v1325
  %1868 = vst [vmem:[%s2 + $0x730] sm:$0xff] %v1398
  %1869 = vst [vmem:[%s2 + $0x738] sm:$0xff] %v1471
  %1870 = vst [vmem:[%s2 + $0x740] sm:$0xff] %v1544
  %1871 = vst [vmem:[%s2 + $0x748] sm:$0xff] %v1617
  %1872 = vst [vmem:[%s2 + $0x750] sm:$0xff] %v744
  %1873 = vst [vmem:[%s2 + $0x758] sm:$0xff] %v817
  %1874 = vst [vmem:[%s2 + $0x760] sm:$0xff] %v890
  %1875 = vst [vmem:[%s2 + $0x768] sm:$0xff] %v963
  %1876 = vst [vmem:[%s2 + $0x770] sm:$0xff] %v1036
  %1877 = vst [vmem:[%s2 + $0x778] sm:$0xff] %v1109
  %1878 = vst [vmem:[%s2 + $0x780] sm:$0xff] %v1182
  %1879 = vst [vmem:[%s2 + $0x788] sm:$0xff] %v1255
  %1880 = vst [vmem:[%s2 + $0x790] sm:$0xff] %v1328
  %1881 = vst [vmem:[%s2 + $0x798] sm:$0xff] %v1401
  %1882 = vst [vmem:[%s2 + $0x7a0] sm:$0xff] %v1474
  %1883 = vst [vmem:[%s2 + $0x7a8] sm:$0xff] %v1547
  %1884 = vst [vmem:[%s2 + $0x7b0] sm:$0xff] %v1620
  %1885 = vst [vmem:[%s2 + $0x7b8] sm:$0xff] %v746
  %1886 = vst [vmem:[%s2 + $0x7c0] sm:$0xff] %v819
  %1887 = vst [vmem:[%s2 + $0x7c8] sm:$0xff] %v892
  %1888 = vst [vmem:[%s2 + $0x7d0] sm:$0xff] %v965
  %1889 = vst [vmem:[%s2 + $0x7d8] sm:$0xff] %v1038
  %1890 = vst [vmem:[%s2 + $0x7e0] sm:$0xff] %v1111
  %1891 = vst [vmem:[%s2 + $0x7e8] sm:$0xff] %v1184
  %1892 = vst [vmem:[%s2 + $0x7f0] sm:$0xff] %v1257
  %1893 = vst [vmem:[%s2 + $0x7f8] sm:$0xff] %v1330
  %1894 = vst [vmem:[%s2 + $0x800] sm:$0xff] %v1403
  %1895 = vst [vmem:[%s2 + $0x808] sm:$0xff] %v1476
  %1896 = vst [vmem:[%s2 + $0x810] sm:$0xff] %v1549
  %1897 = vst [vmem:[%s2 + $0x818] sm:$0xff] %v1622
  %1898 = vst [vmem:[%s2 + $0x820] sm:$0xff] %v749
  %1899 = vst [vmem:[%s2 + $0x828] sm:$0xff] %v822
  %1900 = vst [vmem:[%s2 + $0x830] sm:$0xff] %v895
  %1901 = vst [vmem:[%s2 + $0x838] sm:$0xff] %v968
  %1902 = vst [vmem:[%s2 + $0x840] sm:$0xff] %v1041
  %1903 = vst [vmem:[%s2 + $0x848] sm:$0xff] %v1114
  %1904 = vst [vmem:[%s2 + $0x850] sm:$0xff] %v1187
  %1905 = vst [vmem:[%s2 + $0x858] sm:$0xff] %v1260
  %1906 = vst [vmem:[%s2 + $0x860] sm:$0xff] %v1333
  %1907 = vst [vmem:[%s2 + $0x868] sm:$0xff] %v1406
  %1908 = vst [vmem:[%s2 + $0x870] sm:$0xff] %v1479
  %1909 = vst [vmem:[%s2 + $0x878] sm:$0xff] %v1552
  %1910 = vst [vmem:[%s2 + $0x880] sm:$0xff] %v1625
  %1911 = vst [vmem:[%s2 + $0x888] sm:$0xff] %v751
  %1912 = vst [vmem:[%s2 + $0x890] sm:$0xff] %v824
  %1913 = vst [vmem:[%s2 + $0x898] sm:$0xff] %v897
  %1914 = vst [vmem:[%s2 + $0x8a0] sm:$0xff] %v970
  %1915 = vst [vmem:[%s2 + $0x8a8] sm:$0xff] %v1043
  %1916 = vst [vmem:[%s2 + $0x8b0] sm:$0xff] %v1116
  %1917 = vst [vmem:[%s2 + $0x8b8] sm:$0xff] %v1189
  %1918 = vst [vmem:[%s2 + $0x8c0] sm:$0xff] %v1262
  %1919 = vst [vmem:[%s2 + $0x8c8] sm:$0xff] %v1335
  %1920 = vst [vmem:[%s2 + $0x8d0] sm:$0xff] %v1408
  %1921 = vst [vmem:[%s2 + $0x8d8] sm:$0xff] %v1481
  %1922 = vst [vmem:[%s2 + $0x8e0] sm:$0xff] %v1554
  %1923 = vst [vmem:[%s2 + $0x8e8] sm:$0xff] %v1627
  %1924 = vst [vmem:[%s2 + $0x8f0] sm:$0xff] %v754
  %1925 = vst [vmem:[%s2 + $0x8f8] sm:$0xff] %v827
  %1926 = vst [vmem:[%s2 + $0x900] sm:$0xff] %v900
  %1927 = vst [vmem:[%s2 + $0x908] sm:$0xff] %v973
  %1928 = vst [vmem:[%s2 + $0x910] sm:$0xff] %v1046
  %1929 = vst [vmem:[%s2 + $0x918] sm:$0xff] %v1119
  %1930 = vst [vmem:[%s2 + $0x920] sm:$0xff] %v1192
  %1931 = vst [vmem:[%s2 + $0x928] sm:$0xff] %v1265
  %1932 = vst [vmem:[%s2 + $0x930] sm:$0xff] %v1338
  %1933 = vst [vmem:[%s2 + $0x938] sm:$0xff] %v1411
  %1934 = vst [vmem:[%s2 + $0x940] sm:$0xff] %v1484
  %1935 = vst [vmem:[%s2 + $0x948] sm:$0xff] %v1557
  %1936 = vst [vmem:[%s2 + $0x950] sm:$0xff] %v1630
  %1937 = vst [vmem:[%s2 + $0x958] sm:$0xff] %v756
  %1938 = vst [vmem:[%s2 + $0x960] sm:$0xff] %v829
  %1939 = vst [vmem:[%s2 + $0x968] sm:$0xff] %v902
  %1940 = vst [vmem:[%s2 + $0x970] sm:$0xff] %v975
  %1941 = vst [vmem:[%s2 + $0x978] sm:$0xff] %v1048
  %1942 = vst [vmem:[%s2 + $0x980] sm:$0xff] %v1121
  %1943 = vst [vmem:[%s2 + $0x988] sm:$0xff] %v1194
  %1944 = vst [vmem:[%s2 + $0x990] sm:$0xff] %v1267
  %1945 = vst [vmem:[%s2 + $0x998] sm:$0xff] %v1340
  %1946 = vst [vmem:[%s2 + $0x9a0] sm:$0xff] %v1413
  %1947 = vst [vmem:[%s2 + $0x9a8] sm:$0xff] %v1486
  %1948 = vst [vmem:[%s2 + $0x9b0] sm:$0xff] %v1559
  %1949 = vst [vmem:[%s2 + $0x9b8] sm:$0xff] %v1632
  %1950 = vst [vmem:[%s2 + $0x9c0] sm:$0xff] %v759
  %1951 = vst [vmem:[%s2 + $0x9c8] sm:$0xff] %v832
  %1952 = vst [vmem:[%s2 + $0x9d0] sm:$0xff] %v905
  %1953 = vst [vmem:[%s2 + $0x9d8] sm:$0xff] %v978
  %1954 = vst [vmem:[%s2 + $0x9e0] sm:$0xff] %v1051
  %1955 = vst [vmem:[%s2 + $0x9e8] sm:$0xff] %v1124
  %1956 = vst [vmem:[%s2 + $0x9f0] sm:$0xff] %v1197
  %1957 = vst [vmem:[%s2 + $0x9f8] sm:$0xff] %v1270
  %1958 = vst [vmem:[%s2 + $0xa00] sm:$0xff] %v1343
  %1959 = vst [vmem:[%s2 + $0xa08] sm:$0xff] %v1416
  %1960 = vst [vmem:[%s2 + $0xa10] sm:$0xff] %v1489
  %1961 = vst [vmem:[%s2 + $0xa18] sm:$0xff] %v1562
  %1962 = vst [vmem:[%s2 + $0xa20] sm:$0xff] %v1635
  // Predicated region
  $region10: #{image_decoder_forward.5} parent=0 // pred_check
    _
  $region11: #{image_decoder_forward.5} parent=0 // pred_check_branch
    %1964 = sbr.rel (0) target = $region13
  $region12: #{image_decoder_forward.5} parent=0 // pred_region
    _
  $region13: #{image_decoder_forward.5} parent=0 // pred_fallthru
    _
  // Predicated region
  $region14: #{image_decoder_forward.5} parent=0 // pred_check
    _
  $region15: #{image_decoder_forward.5} parent=0 // pred_check_branch
    %1966 = sbr.rel (0) target = $region17
  $region16: #{image_decoder_forward.5} parent=0 // pred_region
    _
  $region17: #{image_decoder_forward.5} parent=0 // pred_fallthru
    _

// kernel: image_decoder_forward.6
$region0: #{image_decoder_forward.6}
  #allocation0 [shape = 'u32[]', space=smem, size = 0x4, offset = 0x4, fixed_abs, tag = 'smem constant byte address 0x4 - core index']
  #allocation1 [shape = 'u32[72,128]{1,0:T(1,128)}', space=vmem, size = 0x9000, scoped, tag = 'internal scratch']
  %s0 = inlined_call_operand.vmem [shape: f32[1536,64], index: 0, kind: input, shape index: {}]
  %s1 = inlined_call_operand.vmem [shape: bf16[64,1152], index: 1, kind: input, shape index: {}]
  %s2 = inlined_call_operand.vmem [shape: f32[1536,1152], index: 2, kind: output, shape index: {}]
  %s3 = sld [smem:[#allocation0]]
  $region41: #{image_decoder_forward.6} parent=0
    _
  %s5 = ssub.s32 1, %s3
  %s6 = scalar_select 0, %s5, %s3
  loop: start=0, step=1, limit=8
  $region2: #{image_decoder_forward.6} parent=0 // loop_pre_header
    _
  $region3: #{image_decoder_forward.6} parent=0 // loop_header
    %s8 = sphi 0, %s12
    %p9 = scmp.ge.s32.totalorder %s8, 8
    %s18 = sphi 0, %s20
    %s21 = sphi 0, %s18
    %s22 = sphi 0, %s21
    %s38 = sphi 0, %s22
    %s42 = sphi 0, %s42
    %s44 = sphi 0, %s42
    %s45 = sphi 0, %s44
    %s59 = sphi 0, %s45
    %s65 = sphi 0, %s67
    %s68 = sphi 0, %s65
    %s69 = sphi 0, %s68
    %s85 = sphi 0, %s69
  $region4: #{image_decoder_forward.6} parent=0 // loop_header_branch
    %11 = sbr.rel (%p9) target = $region8
  $region5: #{image_decoder_forward.6} parent=0 // loop_body
    %s13 = ssub.s32 %s8, 1
    %s14 = ssub.s32 %s8, 2
    %s15 = sadd.s32 %s8, 1
    %s16 = ssub.s32 %s8, %s15
    %p17 = scmp.eq.s32.totalorder %s16, 0
    %s19 = sadd.s32 %s18, 1
    %s20 = scalar_select %p17, %s18, %s19
    %p23 = pneg %p17
    %p24 = scmp.eq.s32.totalorder %s8, 5
    %p25 = por %p23, %p24
    %p26 = scmp.ne.s32.totalorder %s18, %s21
    %p27 = scmp.eq.s32.totalorder %s8, 0
    %p28 = por %p26, %p27
    %p29 = scmp.ne.s32.totalorder %s18, %s21
    %p30 = scmp.eq.s32.totalorder %s13, 5
    %p31 = por %p29, %p30
    %p32 = scmp.ne.s32.totalorder %s21, %s22
    %p33 = scmp.eq.s32.totalorder %s13, 0
    %p34 = por %p32, %p33
    %p35 = scmp.ne.s32.totalorder %s21, %s22
    %p36 = scmp.eq.s32.totalorder %s14, 5
    %p37 = por %p35, %p36
    %p39 = scmp.ne.s32.totalorder %s22, %s38
    %p40 = scmp.eq.s32.totalorder %s14, 0
    %p41 = por %p39, %p40
    %s43 = sadd.s32 %s42, 1
    %p46 = scmp.eq.s32.totalorder %s8, 5
    %p47 = scmp.ne.s32.totalorder %s42, %s44
    %p48 = scmp.eq.s32.totalorder %s8, 0
    %p49 = por %p47, %p48
    %p50 = scmp.ne.s32.totalorder %s42, %s44
    %p51 = scmp.eq.s32.totalorder %s13, 5
    %p52 = por %p50, %p51
    %p53 = scmp.ne.s32.totalorder %s44, %s45
    %p54 = scmp.eq.s32.totalorder %s13, 0
    %p55 = por %p53, %p54
    %p56 = scmp.ne.s32.totalorder %s44, %s45
    %p57 = scmp.eq.s32.totalorder %s14, 5
    %p58 = por %p56, %p57
    %p60 = scmp.ne.s32.totalorder %s45, %s59
    %p61 = scmp.eq.s32.totalorder %s14, 0
    %p62 = por %p60, %p61
    %s63 = ssub.s32 %s8, %s15
    %p64 = scmp.eq.s32.totalorder %s63, 0
    %s66 = sadd.s32 %s65, 1
    %s67 = scalar_select %p64, %s65, %s66
    %p70 = pneg %p64
    %p71 = scmp.eq.s32.totalorder %s8, 5
    %p72 = por %p70, %p71
    %p73 = scmp.ne.s32.totalorder %s65, %s68
    %p74 = scmp.eq.s32.totalorder %s8, 0
    %p75 = por %p73, %p74
    %p76 = scmp.ne.s32.totalorder %s65, %s68
    %p77 = scmp.eq.s32.totalorder %s13, 5
    %p78 = por %p76, %p77
    %p79 = scmp.ne.s32.totalorder %s68, %s69
    %p80 = scmp.eq.s32.totalorder %s13, 0
    %p81 = por %p79, %p80
    %p82 = scmp.ne.s32.totalorder %s68, %s69
    %p83 = scmp.eq.s32.totalorder %s14, 5
    %p84 = por %p82, %p83
    %p86 = scmp.ne.s32.totalorder %s69, %s85
    %p87 = scmp.eq.s32.totalorder %s14, 0
    %p88 = por %p86, %p87
    %p89 = scmp.le.s32.totalorder 1, %s8
    %p90 = scmp.lt.s32.totalorder %s8, 7
    %p91 = pnand %p89, %p90
    %p92 = pneg %p91
    // Predicated region
    $region9: #{image_decoder_forward.6} parent=5 // pred_check
      _
    $region10: #{image_decoder_forward.6} parent=5 // pred_check_branch
      %94 = sbr.rel (%p91) target = $region12
    $region11: #{image_decoder_forward.6} parent=5 // pred_region
      %s95 = ssub.s32 %s8, 1
      // Predicated region
      $region13: #{image_decoder_forward.6} parent=11 // pred_check
        %p96 = pneg %p55
      $region14: #{image_decoder_forward.6} parent=11 // pred_check_branch
        %98 = sbr.rel (%p96) target = $region16
      $region15: #{image_decoder_forward.6} parent=11 // pred_region
        _
      $region16: #{image_decoder_forward.6} parent=11 // pred_fallthru
        _
    $region12: #{image_decoder_forward.6} parent=5 // pred_fallthru
      _
    %p99 = scmp.lt.s32.totalorder %s8, 6
    // Predicated region
    $region17: #{image_decoder_forward.6} parent=5 // pred_check
      %p100 = pneg %p99
    $region18: #{image_decoder_forward.6} parent=5 // pred_check_branch
      %102 = sbr.rel (%p100) target = $region20
    $region19: #{image_decoder_forward.6} parent=5 // pred_region
      // Predicated region
      $region21: #{image_decoder_forward.6} parent=19 // pred_check
        %p103 = pneg %p28
      $region22: #{image_decoder_forward.6} parent=19 // pred_check_branch
        %105 = sbr.rel (%p103) target = $region24
      $region23: #{image_decoder_forward.6} parent=19 // pred_region
        %s106 = smul.u32 32, %s8
        %p107 = scmp.lt.s32.totalorder %s106, 191
        %s108 = scalar_select %p107, %s106, 191
        %s109 = smul.addr %s108, 8
        %s110 = scalar_lea.vmem %s0, %s109
        %s111 = smul.u32 32, %s8
      $region24: #{image_decoder_forward.6} parent=19 // pred_fallthru
        _
    $region20: #{image_decoder_forward.6} parent=5 // pred_fallthru
      _
    %p112 = scmp.le.s32.totalorder 1, %s8
    %p113 = scmp.lt.s32.totalorder %s8, 7
    %p114 = pnand %p112, %p113
    %p115 = pneg %p114
    // Predicated region
    $region25: #{image_decoder_forward.6} parent=5 // pred_check
      _
    $region26: #{image_decoder_forward.6} parent=5 // pred_check_branch
      %117 = sbr.rel (%p114) target = $region28
    $region27: #{image_decoder_forward.6} parent=5 // pred_region
      %s118 = ssub.s32 %s8, 1
      %s119 = smul.u32 32, %s13
      %p120 = scmp.lt.s32.totalorder %s119, 191
      %s121 = scalar_select %p120, %s119, 191
      %s122 = smul.addr %s121, 8
      %s123 = scalar_lea.vmem %s0, %s122
      %p124 = pneg %p34
      %p125 = pneg %p31
      %p126 = pneg %p55
      %p127 = pneg %p52
      %p128 = pneg %p81
      %p129 = pneg %p78
      %s130 = smul.u32 32, %s13
      %p131 = scmp.lt.s32.totalorder %s130, 191
      %s132 = scalar_select %p131, %s130, 191
      %s133 = smul.addr %s132, 9
      %s134 = smul.addr %s133, 8
      %s135 = scalar_lea.vmem %s2, %s134
      %s136 = smul.u32 32, %s13
      %p137 = scmp.lt.s32.totalorder %s136, 191
      %s138 = scalar_select %p137, %s136, 191
      %s139 = smul.addr %s138, 8
      %s140 = scalar_lea.vmem %s0, %s139
      %s141 = smul.u32 32, %s13
      %s142 = smul.u32 32, %s13
      %p143 = scmp.lt.s32.totalorder %s142, 191
      %s144 = scalar_select %p143, %s142, 191
      %s145 = smul.addr %s144, 9
      %s146 = smul.addr %s145, 8
      %s147 = scalar_lea.vmem %s2, %s146
      %s148 = smul.u32 32, %s13
      %v150 = vld [vmem:[%s140] sm:$0xff]
      %v151 = vld [vmem:[%s140 + $0x8] sm:$0xff]
      %v152 = vld [vmem:[%s140 + $0x10] sm:$0xff]
      %v153 = vld [vmem:[%s140 + $0x18] sm:$0xff]
      %v154 = vld [vmem:[%s140 + $0x20] sm:$0xff]
      %v155 = vld [vmem:[%s140 + $0x28] sm:$0xff]
      %v156 = vld [vmem:[%s140 + $0x30] sm:$0xff]
      %v157 = vld [vmem:[%s140 + $0x38] sm:$0xff]
      %v158 = vld [vmem:[%s140 + $0x40] sm:$0xff]
      %v159 = vld [vmem:[%s140 + $0x48] sm:$0xff]
      %v160 = vld [vmem:[%s140 + $0x50] sm:$0xff]
      %v161 = vld [vmem:[%s140 + $0x58] sm:$0xff]
      %v162 = vld [vmem:[%s140 + $0x60] sm:$0xff]
      %v163 = vld [vmem:[%s140 + $0x68] sm:$0xff]
      %v164 = vld [vmem:[%s140 + $0x70] sm:$0xff]
      %v165 = vld [vmem:[%s140 + $0x78] sm:$0xff]
      %v166 = vld [vmem:[%s140 + $0x80] sm:$0xff]
      %v167 = vld [vmem:[%s140 + $0x88] sm:$0xff]
      %v168 = vld [vmem:[%s140 + $0x90] sm:$0xff]
      %v169 = vld [vmem:[%s140 + $0x98] sm:$0xff]
      %v170 = vld [vmem:[%s140 + $0xa0] sm:$0xff]
      %v171 = vld [vmem:[%s140 + $0xa8] sm:$0xff]
      %v172 = vld [vmem:[%s140 + $0xb0] sm:$0xff]
      %v173 = vld [vmem:[%s140 + $0xb8] sm:$0xff]
      %v174 = vld [vmem:[%s140 + $0xc0] sm:$0xff]
      %v175 = vld [vmem:[%s140 + $0xc8] sm:$0xff]
      %v176 = vld [vmem:[%s140 + $0xd0] sm:$0xff]
      %v177 = vld [vmem:[%s140 + $0xd8] sm:$0xff]
      %v178 = vld [vmem:[%s140 + $0xe0] sm:$0xff]
      %v179 = vld [vmem:[%s140 + $0xe8] sm:$0xff]
      %v180 = vld [vmem:[%s140 + $0xf0] sm:$0xff]
      %v181 = vld [vmem:[%s140 + $0xf8] sm:$0xff]
      %v182 = vpack.c.bf16 %v151, %v150
      %v183 = vpack.c.bf16 %v153, %v152
      %v184 = vpack.c.bf16 %v155, %v154
      %v185 = vpack.c.bf16 %v157, %v156
      %v186 = vpack.c.bf16 %v159, %v158
      %v187 = vpack.c.bf16 %v161, %v160
      %v188 = vpack.c.bf16 %v163, %v162
      %v189 = vpack.c.bf16 %v165, %v164
      %v190 = vpack.c.bf16 %v167, %v166
      %v191 = vpack.c.bf16 %v169, %v168
      %v192 = vpack.c.bf16 %v171, %v170
      %v193 = vpack.c.bf16 %v173, %v172
      %v194 = vpack.c.bf16 %v175, %v174
      %v195 = vpack.c.bf16 %v177, %v176
      %v196 = vpack.c.bf16 %v179, %v178
      %v197 = vpack.c.bf16 %v181, %v180
      %v198 = vld [vmem:[%s1] sm:$0xff]
      %v199 = vld [vmem:[%s1 + $0x8] sm:$0xff]
      %v200 = vld [vmem:[%s1 + $0x10] sm:$0xff]
      %v201 = vld [vmem:[%s1 + $0x18] sm:$0xff]
      %v202 = vld [vmem:[%s1 + $0x20] sm:$0xf]
      %v203 = vld [vmem:[%s1 + $0x24] sm:$0xff]
      %v204 = vld [vmem:[%s1 + $0x2c] sm:$0xff]
      %v205 = vld [vmem:[%s1 + $0x34] sm:$0xff]
      %v206 = vld [vmem:[%s1 + $0x3c] sm:$0xff]
      %v207 = vld [vmem:[%s1 + $0x44] sm:$0xf]
      %v208 = vld [vmem:[%s1 + $0x48] sm:$0xff]
      %v209 = vld [vmem:[%s1 + $0x50] sm:$0xff]
      %v210 = vld [vmem:[%s1 + $0x58] sm:$0xff]
      %v211 = vld [vmem:[%s1 + $0x60] sm:$0xff]
      %v212 = vld [vmem:[%s1 + $0x68] sm:$0xf]
      %v213 = vld [vmem:[%s1 + $0x6c] sm:$0xff]
      %v214 = vld [vmem:[%s1 + $0x74] sm:$0xff]
      %v215 = vld [vmem:[%s1 + $0x7c] sm:$0xff]
      %v216 = vld [vmem:[%s1 + $0x84] sm:$0xff]
      %v217 = vld [vmem:[%s1 + $0x8c] sm:$0xf]
      %v218 = vld [vmem:[%s1 + $0x90] sm:$0xff]
      %v219 = vld [vmem:[%s1 + $0x98] sm:$0xff]
      %v220 = vld [vmem:[%s1 + $0xa0] sm:$0xff]
      %v221 = vld [vmem:[%s1 + $0xa8] sm:$0xff]
      %v222 = vld [vmem:[%s1 + $0xb0] sm:$0xf]
      %v223 = vld [vmem:[%s1 + $0xb4] sm:$0xff]
      %v224 = vld [vmem:[%s1 + $0xbc] sm:$0xff]
      %v225 = vld [vmem:[%s1 + $0xc4] sm:$0xff]
      %v226 = vld [vmem:[%s1 + $0xcc] sm:$0xff]
      %v227 = vld [vmem:[%s1 + $0xd4] sm:$0xf]
      %v228 = vld [vmem:[%s1 + $0xd8] sm:$0xff]
      %v229 = vld [vmem:[%s1 + $0xe0] sm:$0xff]
      %v230 = vld [vmem:[%s1 + $0xe8] sm:$0xff]
      %v231 = vld [vmem:[%s1 + $0xf0] sm:$0xff]
      %v232 = vld [vmem:[%s1 + $0xf8] sm:$0xf]
      %v233 = vld [vmem:[%s1 + $0xfc] sm:$0xff]
      %v234 = vld [vmem:[%s1 + $0x104] sm:$0xff]
      %v235 = vld [vmem:[%s1 + $0x10c] sm:$0xff]
      %v236 = vld [vmem:[%s1 + $0x114] sm:$0xff]
      %v237 = vld [vmem:[%s1 + $0x11c] sm:$0xf]
      %v278 = vunpack.c.l.b16 %v198
      %v279 = vunpack.c.h.b16 %v198
      %v280 = vunpack.c.l.b16 %v199
      %v281 = vunpack.c.h.b16 %v199
      %v282 = vunpack.c.l.b16 %v200
      %v283 = vunpack.c.h.b16 %v200
      %v284 = vunpack.c.l.b16 %v201
      %v285 = vunpack.c.h.b16 %v201
      %v286 = vunpack.c.l.b16 %v202
      %v287 = vunpack.c.l.b16 %v203
      %v288 = vunpack.c.h.b16 %v203
      %v289 = vunpack.c.l.b16 %v204
      %v290 = vunpack.c.h.b16 %v204
      %v291 = vunpack.c.l.b16 %v205
      %v292 = vunpack.c.h.b16 %v205
      %v293 = vunpack.c.l.b16 %v206
      %v294 = vunpack.c.h.b16 %v206
      %v295 = vunpack.c.l.b16 %v207
      %v296 = vunpack.c.l.b16 %v208
      %v297 = vunpack.c.h.b16 %v208
      %v298 = vunpack.c.l.b16 %v209
      %v299 = vunpack.c.h.b16 %v209
      %v300 = vunpack.c.l.b16 %v210
      %v301 = vunpack.c.h.b16 %v210
      %v302 = vunpack.c.l.b16 %v211
      %v303 = vunpack.c.h.b16 %v211
      %v304 = vunpack.c.l.b16 %v212
      %v305 = vunpack.c.l.b16 %v213
      %v306 = vunpack.c.h.b16 %v213
      %v307 = vunpack.c.l.b16 %v214
      %v308 = vunpack.c.h.b16 %v214
      %v309 = vunpack.c.l.b16 %v215
      %v310 = vunpack.c.h.b16 %v215
      %v311 = vunpack.c.l.b16 %v216
      %v312 = vunpack.c.h.b16 %v216
      %v313 = vunpack.c.l.b16 %v217
      %v314 = vunpack.c.l.b16 %v218
      %v315 = vunpack.c.h.b16 %v218
      %v316 = vunpack.c.l.b16 %v219
      %v317 = vunpack.c.h.b16 %v219
      %v318 = vunpack.c.l.b16 %v220
      %v319 = vunpack.c.h.b16 %v220
      %v320 = vunpack.c.l.b16 %v221
      %v321 = vunpack.c.h.b16 %v221
      %v322 = vunpack.c.l.b16 %v222
      %v323 = vunpack.c.l.b16 %v223
      %v324 = vunpack.c.h.b16 %v223
      %v325 = vunpack.c.l.b16 %v224
      %v326 = vunpack.c.h.b16 %v224
      %v327 = vunpack.c.l.b16 %v225
      %v328 = vunpack.c.h.b16 %v225
      %v329 = vunpack.c.l.b16 %v226
      %v330 = vunpack.c.h.b16 %v226
      %v331 = vunpack.c.l.b16 %v227
      %v332 = vunpack.c.l.b16 %v228
      %v333 = vunpack.c.h.b16 %v228
      %v334 = vunpack.c.l.b16 %v229
      %v335 = vunpack.c.h.b16 %v229
      %v336 = vunpack.c.l.b16 %v230
      %v337 = vunpack.c.h.b16 %v230
      %v338 = vunpack.c.l.b16 %v231
      %v339 = vunpack.c.h.b16 %v231
      %v340 = vunpack.c.l.b16 %v232
      %v341 = vunpack.c.l.b16 %v233
      %v342 = vunpack.c.h.b16 %v233
      %v343 = vunpack.c.l.b16 %v234
      %v344 = vunpack.c.h.b16 %v234
      %v345 = vunpack.c.l.b16 %v235
      %v346 = vunpack.c.h.b16 %v235
      %v347 = vunpack.c.l.b16 %v236
      %v348 = vunpack.c.h.b16 %v236
      %v349 = vunpack.c.l.b16 %v237
      %v350 = vpack.c.b16 %v287, %v278
      %v351 = vpack.c.b16 %v288, %v279
      %v352 = vpack.c.b16 %v289, %v280
      %v353 = vpack.c.b16 %v290, %v281
      %v354 = vpack.c.b16 %v291, %v282
      %v355 = vpack.c.b16 %v292, %v283
      %v356 = vpack.c.b16 %v293, %v284
      %v357 = vpack.c.b16 %v294, %v285
      %v358 = vpack.c.b16 %v295, %v286
      %v359 = vpack.c.b16 %v305, %v296
      %v360 = vpack.c.b16 %v306, %v297
      %v361 = vpack.c.b16 %v307, %v298
      %v362 = vpack.c.b16 %v308, %v299
      %v363 = vpack.c.b16 %v309, %v300
      %v364 = vpack.c.b16 %v310, %v301
      %v365 = vpack.c.b16 %v311, %v302
      %v366 = vpack.c.b16 %v312, %v303
      %v367 = vpack.c.b16 %v313, %v304
      %v368 = vpack.c.b16 %v323, %v314
      %v369 = vpack.c.b16 %v324, %v315
      %v370 = vpack.c.b16 %v325, %v316
      %v371 = vpack.c.b16 %v326, %v317
      %v372 = vpack.c.b16 %v327, %v318
      %v373 = vpack.c.b16 %v328, %v319
      %v374 = vpack.c.b16 %v329, %v320
      %v375 = vpack.c.b16 %v330, %v321
      %v376 = vpack.c.b16 %v331, %v322
      %v377 = vpack.c.b16 %v341, %v332
      %v378 = vpack.c.b16 %v342, %v333
      %v379 = vpack.c.b16 %v343, %v334
      %v380 = vpack.c.b16 %v344, %v335
      %v381 = vpack.c.b16 %v345, %v336
      %v382 = vpack.c.b16 %v346, %v337
      %v383 = vpack.c.b16 %v347, %v338
      %v384 = vpack.c.b16 %v348, %v339
      %v385 = vpack.c.b16 %v349, %v340
      %vm422 = vcmask 523264
      %v424 = vsel %vm422, %v182, 0
      %v427 = vsel %vm422, %v183, 0
      %v430 = vsel %vm422, %v184, 0
      %v433 = vsel %vm422, %v185, 0
      %v436 = vsel %vm422, %v186, 0
      %v439 = vsel %vm422, %v187, 0
      %v442 = vsel %vm422, %v188, 0
      %v445 = vsel %vm422, %v189, 0
      %v448 = vsel %vm422, %v190, 0
      %v451 = vsel %vm422, %v191, 0
      %v454 = vsel %vm422, %v192, 0
      %v457 = vsel %vm422, %v193, 0
      %v460 = vsel %vm422, %v194, 0
      %v463 = vsel %vm422, %v195, 0
      %v466 = vsel %vm422, %v196, 0
      %v469 = vsel %vm422, %v197, 0
      %471 = vmatpush.bf16.msra.mxu0 0
      %472 = vmatpush.bf16.msra.mxu0 0
      %473 = vmatpush.bf16.msra.mxu0 0
      %474 = vmatpush.bf16.msra.mxu0 0
      %475 = vmatpush.bf16.msra.mxu0 %v377
      %476 = vmatpush.bf16.msra.mxu0 %v368
      %477 = vmatpush.bf16.msra.mxu0 %v359
      %478 = vmatpush.bf16.msra.mxu0 %v350
      %479 = vmatmul.bf16.gmra.mxu0 %v424
      %v480 = vpop.f32.mrf.mxu0
      %v481 = vadd.f32 0.0, %v480
      %v482 = vpop.f32.mrf.mxu0
      %v483 = vadd.f32 0.0, %v482
      %484 = vmatmul.bf16.gmra.mxu0 %v427
      %v485 = vpop.f32.mrf.mxu0
      %v486 = vadd.f32 0.0, %v485
      %v487 = vpop.f32.mrf.mxu0
      %v488 = vadd.f32 0.0, %v487
      %489 = vmatmul.bf16.gmra.mxu0 %v430
      %v490 = vpop.f32.mrf.mxu0
      %v491 = vadd.f32 0.0, %v490
      %v492 = vpop.f32.mrf.mxu0
      %v493 = vadd.f32 0.0, %v492
      %494 = vmatmul.bf16.gmra.mxu0 %v433
      %v495 = vpop.f32.mrf.mxu0
      %v496 = vadd.f32 0.0, %v495
      %v497 = vpop.f32.mrf.mxu0
      %v498 = vadd.f32 0.0, %v497
      %499 = vmatmul.bf16.gmra.mxu0 %v436
      %v500 = vpop.f32.mrf.mxu0
      %v501 = vadd.f32 0.0, %v500
      %v502 = vpop.f32.mrf.mxu0
      %v503 = vadd.f32 0.0, %v502
      %504 = vmatmul.bf16.gmra.mxu0 %v439
      %v505 = vpop.f32.mrf.mxu0
      %v506 = vadd.f32 0.0, %v505
      %v507 = vpop.f32.mrf.mxu0
      %v508 = vadd.f32 0.0, %v507
      %509 = vmatmul.bf16.gmra.mxu0 %v442
      %v510 = vpop.f32.mrf.mxu0
      %v511 = vadd.f32 0.0, %v510
      %v512 = vpop.f32.mrf.mxu0
      %v513 = vadd.f32 0.0, %v512
      %514 = vmatmul.bf16.gmra.mxu0 %v445
      %v515 = vpop.f32.mrf.mxu0
      %v516 = vadd.f32 0.0, %v515
      %v517 = vpop.f32.mrf.mxu0
      %v518 = vadd.f32 0.0, %v517
      %519 = vmatmul.bf16.gmra.mxu0 %v448
      %v520 = vpop.f32.mrf.mxu0
      %v521 = vadd.f32 0.0, %v520
      %v522 = vpop.f32.mrf.mxu0
      %v523 = vadd.f32 0.0, %v522
      %524 = vmatmul.bf16.gmra.mxu0 %v451
      %v525 = vpop.f32.mrf.mxu0
      %v526 = vadd.f32 0.0, %v525
      %v527 = vpop.f32.mrf.mxu0
      %v528 = vadd.f32 0.0, %v527
      %529 = vmatmul.bf16.gmra.mxu0 %v454
      %v530 = vpop.f32.mrf.mxu0
      %v531 = vadd.f32 0.0, %v530
      %v532 = vpop.f32.mrf.mxu0
      %v533 = vadd.f32 0.0, %v532
      %534 = vmatmul.bf16.gmra.mxu0 %v457
      %v535 = vpop.f32.mrf.mxu0
      %v536 = vadd.f32 0.0, %v535
      %v537 = vpop.f32.mrf.mxu0
      %v538 = vadd.f32 0.0, %v537
      %539 = vmatmul.bf16.gmra.mxu0 %v460
      %v540 = vpop.f32.mrf.mxu0
      %v541 = vadd.f32 0.0, %v540
      %v542 = vpop.f32.mrf.mxu0
      %v543 = vadd.f32 0.0, %v542
      %544 = vmatmul.bf16.gmra.mxu0 %v463
      %v545 = vpop.f32.mrf.mxu0
      %v546 = vadd.f32 0.0, %v545
      %v547 = vpop.f32.mrf.mxu0
      %v548 = vadd.f32 0.0, %v547
      %549 = vmatmul.bf16.gmra.mxu0 %v466
      %v550 = vpop.f32.mrf.mxu0
      %v551 = vadd.f32 0.0, %v550
      %v552 = vpop.f32.mrf.mxu0
      %v553 = vadd.f32 0.0, %v552
      %554 = vmatmul.bf16.gmra.mxu0 %v469
      %v555 = vpop.f32.mrf.mxu0
      %v556 = vadd.f32 0.0, %v555
      %v557 = vpop.f32.mrf.mxu0
      %v558 = vadd.f32 0.0, %v557
      %559 = vdwg.mxu0
      %560 = vmatpush.bf16.msra.mxu0 0
      %561 = vmatpush.bf16.msra.mxu0 0
      %562 = vmatpush.bf16.msra.mxu0 0
      %563 = vmatpush.bf16.msra.mxu0 0
      %564 = vmatpush.bf16.msra.mxu0 %v378
      %565 = vmatpush.bf16.msra.mxu0 %v369
      %566 = vmatpush.bf16.msra.mxu0 %v360
      %567 = vmatpush.bf16.msra.mxu0 %v351
      %568 = vmatmul.bf16.gmra.mxu0 %v424
      %v569 = vpop.f32.mrf.mxu0
      %v570 = vadd.f32 0.0, %v569
      %v571 = vpop.f32.mrf.mxu0
      %v572 = vadd.f32 0.0, %v571
      %573 = vmatmul.bf16.gmra.mxu0 %v427
      %v574 = vpop.f32.mrf.mxu0
      %v575 = vadd.f32 0.0, %v574
      %v576 = vpop.f32.mrf.mxu0
      %v577 = vadd.f32 0.0, %v576
      %578 = vmatmul.bf16.gmra.mxu0 %v430
      %v579 = vpop.f32.mrf.mxu0
      %v580 = vadd.f32 0.0, %v579
      %v581 = vpop.f32.mrf.mxu0
      %v582 = vadd.f32 0.0, %v581
      %583 = vmatmul.bf16.gmra.mxu0 %v433
      %v584 = vpop.f32.mrf.mxu0
      %v585 = vadd.f32 0.0, %v584
      %v586 = vpop.f32.mrf.mxu0
      %v587 = vadd.f32 0.0, %v586
      %588 = vmatmul.bf16.gmra.mxu0 %v436
      %v589 = vpop.f32.mrf.mxu0
      %v590 = vadd.f32 0.0, %v589
      %v591 = vpop.f32.mrf.mxu0
      %v592 = vadd.f32 0.0, %v591
      %593 = vmatmul.bf16.gmra.mxu0 %v439
      %v594 = vpop.f32.mrf.mxu0
      %v595 = vadd.f32 0.0, %v594
      %v596 = vpop.f32.mrf.mxu0
      %v597 = vadd.f32 0.0, %v596
      %598 = vmatmul.bf16.gmra.mxu0 %v442
      %v599 = vpop.f32.mrf.mxu0
      %v600 = vadd.f32 0.0, %v599
      %v601 = vpop.f32.mrf.mxu0
      %v602 = vadd.f32 0.0, %v601
      %603 = vmatmul.bf16.gmra.mxu0 %v445
      %v604 = vpop.f32.mrf.mxu0
      %v605 = vadd.f32 0.0, %v604
      %v606 = vpop.f32.mrf.mxu0
      %v607 = vadd.f32 0.0, %v606
      %608 = vmatmul.bf16.gmra.mxu0 %v448
      %v609 = vpop.f32.mrf.mxu0
      %v610 = vadd.f32 0.0, %v609
      %v611 = vpop.f32.mrf.mxu0
      %v612 = vadd.f32 0.0, %v611
      %613 = vmatmul.bf16.gmra.mxu0 %v451
      %v614 = vpop.f32.mrf.mxu0
      %v615 = vadd.f32 0.0, %v614
      %v616 = vpop.f32.mrf.mxu0
      %v617 = vadd.f32 0.0, %v616
      %618 = vmatmul.bf16.gmra.mxu0 %v454
      %v619 = vpop.f32.mrf.mxu0
      %v620 = vadd.f32 0.0, %v619
      %v621 = vpop.f32.mrf.mxu0
      %v622 = vadd.f32 0.0, %v621
      %623 = vmatmul.bf16.gmra.mxu0 %v457
      %v624 = vpop.f32.mrf.mxu0
      %v625 = vadd.f32 0.0, %v624
      %v626 = vpop.f32.mrf.mxu0
      %v627 = vadd.f32 0.0, %v626
      %628 = vmatmul.bf16.gmra.mxu0 %v460
      %v629 = vpop.f32.mrf.mxu0
      %v630 = vadd.f32 0.0, %v629
      %v631 = vpop.f32.mrf.mxu0
      %v632 = vadd.f32 0.0, %v631
      %633 = vmatmul.bf16.gmra.mxu0 %v463
      %v634 = vpop.f32.mrf.mxu0
      %v635 = vadd.f32 0.0, %v634
      %v636 = vpop.f32.mrf.mxu0
      %v637 = vadd.f32 0.0, %v636
      %638 = vmatmul.bf16.gmra.mxu0 %v466
      %v639 = vpop.f32.mrf.mxu0
      %v640 = vadd.f32 0.0, %v639
      %v641 = vpop.f32.mrf.mxu0
      %v642 = vadd.f32 0.0, %v641
      %643 = vmatmul.bf16.gmra.mxu0 %v469
      %v644 = vpop.f32.mrf.mxu0
      %v645 = vadd.f32 0.0, %v644
      %v646 = vpop.f32.mrf.mxu0
      %v647 = vadd.f32 0.0, %v646
      %648 = vdwg.mxu0
      %649 = vmatpush.bf16.msra.mxu0 0
      %650 = vmatpush.bf16.msra.mxu0 0
      %651 = vmatpush.bf16.msra.mxu0 0
      %652 = vmatpush.bf16.msra.mxu0 0
      %653 = vmatpush.bf16.msra.mxu0 %v379
      %654 = vmatpush.bf16.msra.mxu0 %v370
      %655 = vmatpush.bf16.msra.mxu0 %v361
      %656 = vmatpush.bf16.msra.mxu0 %v352
      %657 = vmatmul.bf16.gmra.mxu0 %v424
      %v658 = vpop.f32.mrf.mxu0
      %v659 = vadd.f32 0.0, %v658
      %v660 = vpop.f32.mrf.mxu0
      %v661 = vadd.f32 0.0, %v660
      %662 = vmatmul.bf16.gmra.mxu0 %v427
      %v663 = vpop.f32.mrf.mxu0
      %v664 = vadd.f32 0.0, %v663
      %v665 = vpop.f32.mrf.mxu0
      %v666 = vadd.f32 0.0, %v665
      %667 = vmatmul.bf16.gmra.mxu0 %v430
      %v668 = vpop.f32.mrf.mxu0
      %v669 = vadd.f32 0.0, %v668
      %v670 = vpop.f32.mrf.mxu0
      %v671 = vadd.f32 0.0, %v670
      %672 = vmatmul.bf16.gmra.mxu0 %v433
      %v673 = vpop.f32.mrf.mxu0
      %v674 = vadd.f32 0.0, %v673
      %v675 = vpop.f32.mrf.mxu0
      %v676 = vadd.f32 0.0, %v675
      %677 = vmatmul.bf16.gmra.mxu0 %v436
      %v678 = vpop.f32.mrf.mxu0
      %v679 = vadd.f32 0.0, %v678
      %v680 = vpop.f32.mrf.mxu0
      %v681 = vadd.f32 0.0, %v680
      %682 = vmatmul.bf16.gmra.mxu0 %v439
      %v683 = vpop.f32.mrf.mxu0
      %v684 = vadd.f32 0.0, %v683
      %v685 = vpop.f32.mrf.mxu0
      %v686 = vadd.f32 0.0, %v685
      %687 = vmatmul.bf16.gmra.mxu0 %v442
      %v688 = vpop.f32.mrf.mxu0
      %v689 = vadd.f32 0.0, %v688
      %v690 = vpop.f32.mrf.mxu0
      %v691 = vadd.f32 0.0, %v690
      %692 = vmatmul.bf16.gmra.mxu0 %v445
      %v693 = vpop.f32.mrf.mxu0
      %v694 = vadd.f32 0.0, %v693
      %v695 = vpop.f32.mrf.mxu0
      %v696 = vadd.f32 0.0, %v695
      %697 = vmatmul.bf16.gmra.mxu0 %v448
      %v698 = vpop.f32.mrf.mxu0
      %v699 = vadd.f32 0.0, %v698
      %v700 = vpop.f32.mrf.mxu0
      %v701 = vadd.f32 0.0, %v700
      %702 = vmatmul.bf16.gmra.mxu0 %v451
      %v703 = vpop.f32.mrf.mxu0
      %v704 = vadd.f32 0.0, %v703
      %v705 = vpop.f32.mrf.mxu0
      %v706 = vadd.f32 0.0, %v705
      %707 = vmatmul.bf16.gmra.mxu0 %v454
      %v708 = vpop.f32.mrf.mxu0
      %v709 = vadd.f32 0.0, %v708
      %v710 = vpop.f32.mrf.mxu0
      %v711 = vadd.f32 0.0, %v710
      %712 = vmatmul.bf16.gmra.mxu0 %v457
      %v713 = vpop.f32.mrf.mxu0
      %v714 = vadd.f32 0.0, %v713
      %v715 = vpop.f32.mrf.mxu0
      %v716 = vadd.f32 0.0, %v715
      %717 = vmatmul.bf16.gmra.mxu0 %v460
      %v718 = vpop.f32.mrf.mxu0
      %v719 = vadd.f32 0.0, %v718
      %v720 = vpop.f32.mrf.mxu0
      %v721 = vadd.f32 0.0, %v720
      %722 = vmatmul.bf16.gmra.mxu0 %v463
      %v723 = vpop.f32.mrf.mxu0
      %v724 = vadd.f32 0.0, %v723
      %v725 = vpop.f32.mrf.mxu0
      %v726 = vadd.f32 0.0, %v725
      %727 = vmatmul.bf16.gmra.mxu0 %v466
      %v728 = vpop.f32.mrf.mxu0
      %v729 = vadd.f32 0.0, %v728
      %v730 = vpop.f32.mrf.mxu0
      %v731 = vadd.f32 0.0, %v730
      %732 = vmatmul.bf16.gmra.mxu0 %v469
      %v733 = vpop.f32.mrf.mxu0
      %v734 = vadd.f32 0.0, %v733
      %v735 = vpop.f32.mrf.mxu0
      %v736 = vadd.f32 0.0, %v735
      %737 = vdwg.mxu0
      %738 = vmatpush.bf16.msra.mxu0 0
      %739 = vmatpush.bf16.msra.mxu0 0
      %740 = vmatpush.bf16.msra.mxu0 0
      %741 = vmatpush.bf16.msra.mxu0 0
      %742 = vmatpush.bf16.msra.mxu0 %v380
      %743 = vmatpush.bf16.msra.mxu0 %v371
      %744 = vmatpush.bf16.msra.mxu0 %v362
      %745 = vmatpush.bf16.msra.mxu0 %v353
      %746 = vmatmul.bf16.gmra.mxu0 %v424
      %v747 = vpop.f32.mrf.mxu0
      %v748 = vadd.f32 0.0, %v747
      %v749 = vpop.f32.mrf.mxu0
      %v750 = vadd.f32 0.0, %v749
      %751 = vmatmul.bf16.gmra.mxu0 %v427
      %v752 = vpop.f32.mrf.mxu0
      %v753 = vadd.f32 0.0, %v752
      %v754 = vpop.f32.mrf.mxu0
      %v755 = vadd.f32 0.0, %v754
      %756 = vmatmul.bf16.gmra.mxu0 %v430
      %v757 = vpop.f32.mrf.mxu0
      %v758 = vadd.f32 0.0, %v757
      %v759 = vpop.f32.mrf.mxu0
      %v760 = vadd.f32 0.0, %v759
      %761 = vmatmul.bf16.gmra.mxu0 %v433
      %v762 = vpop.f32.mrf.mxu0
      %v763 = vadd.f32 0.0, %v762
      %v764 = vpop.f32.mrf.mxu0
      %v765 = vadd.f32 0.0, %v764
      %766 = vmatmul.bf16.gmra.mxu0 %v436
      %v767 = vpop.f32.mrf.mxu0
      %v768 = vadd.f32 0.0, %v767
      %v769 = vpop.f32.mrf.mxu0
      %v770 = vadd.f32 0.0, %v769
      %771 = vmatmul.bf16.gmra.mxu0 %v439
      %v772 = vpop.f32.mrf.mxu0
      %v773 = vadd.f32 0.0, %v772
      %v774 = vpop.f32.mrf.mxu0
      %v775 = vadd.f32 0.0, %v774
      %776 = vmatmul.bf16.gmra.mxu0 %v442
      %v777 = vpop.f32.mrf.mxu0
      %v778 = vadd.f32 0.0, %v777
      %v779 = vpop.f32.mrf.mxu0
      %v780 = vadd.f32 0.0, %v779
      %781 = vmatmul.bf16.gmra.mxu0 %v445
      %v782 = vpop.f32.mrf.mxu0
      %v783 = vadd.f32 0.0, %v782
      %v784 = vpop.f32.mrf.mxu0
      %v785 = vadd.f32 0.0, %v784
      %786 = vmatmul.bf16.gmra.mxu0 %v448
      %v787 = vpop.f32.mrf.mxu0
      %v788 = vadd.f32 0.0, %v787
      %v789 = vpop.f32.mrf.mxu0
      %v790 = vadd.f32 0.0, %v789
      %791 = vmatmul.bf16.gmra.mxu0 %v451
      %v792 = vpop.f32.mrf.mxu0
      %v793 = vadd.f32 0.0, %v792
      %v794 = vpop.f32.mrf.mxu0
      %v795 = vadd.f32 0.0, %v794
      %796 = vmatmul.bf16.gmra.mxu0 %v454
      %v797 = vpop.f32.mrf.mxu0
      %v798 = vadd.f32 0.0, %v797
      %v799 = vpop.f32.mrf.mxu0
      %v800 = vadd.f32 0.0, %v799
      %801 = vmatmul.bf16.gmra.mxu0 %v457
      %v802 = vpop.f32.mrf.mxu0
      %v803 = vadd.f32 0.0, %v802
      %v804 = vpop.f32.mrf.mxu0
      %v805 = vadd.f32 0.0, %v804
      %806 = vmatmul.bf16.gmra.mxu0 %v460
      %v807 = vpop.f32.mrf.mxu0
      %v808 = vadd.f32 0.0, %v807
      %v809 = vpop.f32.mrf.mxu0
      %v810 = vadd.f32 0.0, %v809
      %811 = vmatmul.bf16.gmra.mxu0 %v463
      %v812 = vpop.f32.mrf.mxu0
      %v813 = vadd.f32 0.0, %v812
      %v814 = vpop.f32.mrf.mxu0
      %v815 = vadd.f32 0.0, %v814
      %816 = vmatmul.bf16.gmra.mxu0 %v466
      %v817 = vpop.f32.mrf.mxu0
      %v818 = vadd.f32 0.0, %v817
      %v819 = vpop.f32.mrf.mxu0
      %v820 = vadd.f32 0.0, %v819
      %821 = vmatmul.bf16.gmra.mxu0 %v469
      %v822 = vpop.f32.mrf.mxu0
      %v823 = vadd.f32 0.0, %v822
      %v824 = vpop.f32.mrf.mxu0
      %v825 = vadd.f32 0.0, %v824
      %826 = vdwg.mxu0
      %827 = vmatpush.bf16.msra.mxu0 0
      %828 = vmatpush.bf16.msra.mxu0 0
      %829 = vmatpush.bf16.msra.mxu0 0
      %830 = vmatpush.bf16.msra.mxu0 0
      %831 = vmatpush.bf16.msra.mxu0 %v381
      %832 = vmatpush.bf16.msra.mxu0 %v372
      %833 = vmatpush.bf16.msra.mxu0 %v363
      %834 = vmatpush.bf16.msra.mxu0 %v354
      %835 = vmatmul.bf16.gmra.mxu0 %v424
      %v836 = vpop.f32.mrf.mxu0
      %v837 = vadd.f32 0.0, %v836
      %v838 = vpop.f32.mrf.mxu0
      %v839 = vadd.f32 0.0, %v838
      %840 = vmatmul.bf16.gmra.mxu0 %v427
      %v841 = vpop.f32.mrf.mxu0
      %v842 = vadd.f32 0.0, %v841
      %v843 = vpop.f32.mrf.mxu0
      %v844 = vadd.f32 0.0, %v843
      %845 = vmatmul.bf16.gmra.mxu0 %v430
      %v846 = vpop.f32.mrf.mxu0
      %v847 = vadd.f32 0.0, %v846
      %v848 = vpop.f32.mrf.mxu0
      %v849 = vadd.f32 0.0, %v848
      %850 = vmatmul.bf16.gmra.mxu0 %v433
      %v851 = vpop.f32.mrf.mxu0
      %v852 = vadd.f32 0.0, %v851
      %v853 = vpop.f32.mrf.mxu0
      %v854 = vadd.f32 0.0, %v853
      %855 = vmatmul.bf16.gmra.mxu0 %v436
      %v856 = vpop.f32.mrf.mxu0
      %v857 = vadd.f32 0.0, %v856
      %v858 = vpop.f32.mrf.mxu0
      %v859 = vadd.f32 0.0, %v858
      %860 = vmatmul.bf16.gmra.mxu0 %v439
      %v861 = vpop.f32.mrf.mxu0
      %v862 = vadd.f32 0.0, %v861
      %v863 = vpop.f32.mrf.mxu0
      %v864 = vadd.f32 0.0, %v863
      %865 = vmatmul.bf16.gmra.mxu0 %v442
      %v866 = vpop.f32.mrf.mxu0
      %v867 = vadd.f32 0.0, %v866
      %v868 = vpop.f32.mrf.mxu0
      %v869 = vadd.f32 0.0, %v868
      %870 = vmatmul.bf16.gmra.mxu0 %v445
      %v871 = vpop.f32.mrf.mxu0
      %v872 = vadd.f32 0.0, %v871
      %v873 = vpop.f32.mrf.mxu0
      %v874 = vadd.f32 0.0, %v873
      %875 = vmatmul.bf16.gmra.mxu0 %v448
      %v876 = vpop.f32.mrf.mxu0
      %v877 = vadd.f32 0.0, %v876
      %v878 = vpop.f32.mrf.mxu0
      %v879 = vadd.f32 0.0, %v878
      %880 = vmatmul.bf16.gmra.mxu0 %v451
      %v881 = vpop.f32.mrf.mxu0
      %v882 = vadd.f32 0.0, %v881
      %v883 = vpop.f32.mrf.mxu0
      %v884 = vadd.f32 0.0, %v883
      %885 = vmatmul.bf16.gmra.mxu0 %v454
      %v886 = vpop.f32.mrf.mxu0
      %v887 = vadd.f32 0.0, %v886
      %v888 = vpop.f32.mrf.mxu0
      %v889 = vadd.f32 0.0, %v888
      %890 = vmatmul.bf16.gmra.mxu0 %v457
      %v891 = vpop.f32.mrf.mxu0
      %v892 = vadd.f32 0.0, %v891
      %v893 = vpop.f32.mrf.mxu0
      %v894 = vadd.f32 0.0, %v893
      %895 = vmatmul.bf16.gmra.mxu0 %v460
      %v896 = vpop.f32.mrf.mxu0
      %v897 = vadd.f32 0.0, %v896
      %v898 = vpop.f32.mrf.mxu0
      %v899 = vadd.f32 0.0, %v898
      %900 = vmatmul.bf16.gmra.mxu0 %v463
      %v901 = vpop.f32.mrf.mxu0
      %v902 = vadd.f32 0.0, %v901
      %v903 = vpop.f32.mrf.mxu0
      %v904 = vadd.f32 0.0, %v903
      %905 = vmatmul.bf16.gmra.mxu0 %v466
      %v906 = vpop.f32.mrf.mxu0
      %v907 = vadd.f32 0.0, %v906
      %v908 = vpop.f32.mrf.mxu0
      %v909 = vadd.f32 0.0, %v908
      %910 = vmatmul.bf16.gmra.mxu0 %v469
      %v911 = vpop.f32.mrf.mxu0
      %v912 = vadd.f32 0.0, %v911
      %v913 = vpop.f32.mrf.mxu0
      %v914 = vadd.f32 0.0, %v913
      %915 = vdwg.mxu0
      %916 = vmatpush.bf16.msra.mxu0 0
      %917 = vmatpush.bf16.msra.mxu0 0
      %918 = vmatpush.bf16.msra.mxu0 0
      %919 = vmatpush.bf16.msra.mxu0 0
      %920 = vmatpush.bf16.msra.mxu0 %v382
      %921 = vmatpush.bf16.msra.mxu0 %v373
      %922 = vmatpush.bf16.msra.mxu0 %v364
      %923 = vmatpush.bf16.msra.mxu0 %v355
      %924 = vmatmul.bf16.gmra.mxu0 %v424
      %v925 = vpop.f32.mrf.mxu0
      %v926 = vadd.f32 0.0, %v925
      %v927 = vpop.f32.mrf.mxu0
      %v928 = vadd.f32 0.0, %v927
      %929 = vmatmul.bf16.gmra.mxu0 %v427
      %v930 = vpop.f32.mrf.mxu0
      %v931 = vadd.f32 0.0, %v930
      %v932 = vpop.f32.mrf.mxu0
      %v933 = vadd.f32 0.0, %v932
      %934 = vmatmul.bf16.gmra.mxu0 %v430
      %v935 = vpop.f32.mrf.mxu0
      %v936 = vadd.f32 0.0, %v935
      %v937 = vpop.f32.mrf.mxu0
      %v938 = vadd.f32 0.0, %v937
      %939 = vmatmul.bf16.gmra.mxu0 %v433
      %v940 = vpop.f32.mrf.mxu0
      %v941 = vadd.f32 0.0, %v940
      %v942 = vpop.f32.mrf.mxu0
      %v943 = vadd.f32 0.0, %v942
      %944 = vmatmul.bf16.gmra.mxu0 %v436
      %v945 = vpop.f32.mrf.mxu0
      %v946 = vadd.f32 0.0, %v945
      %v947 = vpop.f32.mrf.mxu0
      %v948 = vadd.f32 0.0, %v947
      %949 = vmatmul.bf16.gmra.mxu0 %v439
      %v950 = vpop.f32.mrf.mxu0
      %v951 = vadd.f32 0.0, %v950
      %v952 = vpop.f32.mrf.mxu0
      %v953 = vadd.f32 0.0, %v952
      %954 = vmatmul.bf16.gmra.mxu0 %v442
      %v955 = vpop.f32.mrf.mxu0
      %v956 = vadd.f32 0.0, %v955
      %v957 = vpop.f32.mrf.mxu0
      %v958 = vadd.f32 0.0, %v957
      %959 = vmatmul.bf16.gmra.mxu0 %v445
      %v960 = vpop.f32.mrf.mxu0
      %v961 = vadd.f32 0.0, %v960
      %v962 = vpop.f32.mrf.mxu0
      %v963 = vadd.f32 0.0, %v962
      %964 = vmatmul.bf16.gmra.mxu0 %v448
      %v965 = vpop.f32.mrf.mxu0
      %v966 = vadd.f32 0.0, %v965
      %v967 = vpop.f32.mrf.mxu0
      %v968 = vadd.f32 0.0, %v967
      %969 = vmatmul.bf16.gmra.mxu0 %v451
      %v970 = vpop.f32.mrf.mxu0
      %v971 = vadd.f32 0.0, %v970
      %v972 = vpop.f32.mrf.mxu0
      %v973 = vadd.f32 0.0, %v972
      %974 = vmatmul.bf16.gmra.mxu0 %v454
      %v975 = vpop.f32.mrf.mxu0
      %v976 = vadd.f32 0.0, %v975
      %v977 = vpop.f32.mrf.mxu0
      %v978 = vadd.f32 0.0, %v977
      %979 = vmatmul.bf16.gmra.mxu0 %v457
      %v980 = vpop.f32.mrf.mxu0
      %v981 = vadd.f32 0.0, %v980
      %v982 = vpop.f32.mrf.mxu0
      %v983 = vadd.f32 0.0, %v982
      %984 = vmatmul.bf16.gmra.mxu0 %v460
      %v985 = vpop.f32.mrf.mxu0
      %v986 = vadd.f32 0.0, %v985
      %v987 = vpop.f32.mrf.mxu0
      %v988 = vadd.f32 0.0, %v987
      %989 = vmatmul.bf16.gmra.mxu0 %v463
      %v990 = vpop.f32.mrf.mxu0
      %v991 = vadd.f32 0.0, %v990
      %v992 = vpop.f32.mrf.mxu0
      %v993 = vadd.f32 0.0, %v992
      %994 = vmatmul.bf16.gmra.mxu0 %v466
      %v995 = vpop.f32.mrf.mxu0
      %v996 = vadd.f32 0.0, %v995
      %v997 = vpop.f32.mrf.mxu0
      %v998 = vadd.f32 0.0, %v997
      %999 = vmatmul.bf16.gmra.mxu0 %v469
      %v1000 = vpop.f32.mrf.mxu0
      %v1001 = vadd.f32 0.0, %v1000
      %v1002 = vpop.f32.mrf.mxu0
      %v1003 = vadd.f32 0.0, %v1002
      %1004 = vdwg.mxu0
      %1005 = vmatpush.bf16.msra.mxu0 0
      %1006 = vmatpush.bf16.msra.mxu0 0
      %1007 = vmatpush.bf16.msra.mxu0 0
      %1008 = vmatpush.bf16.msra.mxu0 0
      %1009 = vmatpush.bf16.msra.mxu0 %v383
      %1010 = vmatpush.bf16.msra.mxu0 %v374
      %1011 = vmatpush.bf16.msra.mxu0 %v365
      %1012 = vmatpush.bf16.msra.mxu0 %v356
      %1013 = vmatmul.bf16.gmra.mxu0 %v424
      %v1014 = vpop.f32.mrf.mxu0
      %v1015 = vadd.f32 0.0, %v1014
      %v1016 = vpop.f32.mrf.mxu0
      %v1017 = vadd.f32 0.0, %v1016
      %1018 = vmatmul.bf16.gmra.mxu0 %v427
      %v1019 = vpop.f32.mrf.mxu0
      %v1020 = vadd.f32 0.0, %v1019
      %v1021 = vpop.f32.mrf.mxu0
      %v1022 = vadd.f32 0.0, %v1021
      %1023 = vmatmul.bf16.gmra.mxu0 %v430
      %v1024 = vpop.f32.mrf.mxu0
      %v1025 = vadd.f32 0.0, %v1024
      %v1026 = vpop.f32.mrf.mxu0
      %v1027 = vadd.f32 0.0, %v1026
      %1028 = vmatmul.bf16.gmra.mxu0 %v433
      %v1029 = vpop.f32.mrf.mxu0
      %v1030 = vadd.f32 0.0, %v1029
      %v1031 = vpop.f32.mrf.mxu0
      %v1032 = vadd.f32 0.0, %v1031
      %1033 = vmatmul.bf16.gmra.mxu0 %v436
      %v1034 = vpop.f32.mrf.mxu0
      %v1035 = vadd.f32 0.0, %v1034
      %v1036 = vpop.f32.mrf.mxu0
      %v1037 = vadd.f32 0.0, %v1036
      %1038 = vmatmul.bf16.gmra.mxu0 %v439
      %v1039 = vpop.f32.mrf.mxu0
      %v1040 = vadd.f32 0.0, %v1039
      %v1041 = vpop.f32.mrf.mxu0
      %v1042 = vadd.f32 0.0, %v1041
      %1043 = vmatmul.bf16.gmra.mxu0 %v442
      %v1044 = vpop.f32.mrf.mxu0
      %v1045 = vadd.f32 0.0, %v1044
      %v1046 = vpop.f32.mrf.mxu0
      %v1047 = vadd.f32 0.0, %v1046
      %1048 = vmatmul.bf16.gmra.mxu0 %v445
      %v1049 = vpop.f32.mrf.mxu0
      %v1050 = vadd.f32 0.0, %v1049
      %v1051 = vpop.f32.mrf.mxu0
      %v1052 = vadd.f32 0.0, %v1051
      %1053 = vmatmul.bf16.gmra.mxu0 %v448
      %v1054 = vpop.f32.mrf.mxu0
      %v1055 = vadd.f32 0.0, %v1054
      %v1056 = vpop.f32.mrf.mxu0
      %v1057 = vadd.f32 0.0, %v1056
      %1058 = vmatmul.bf16.gmra.mxu0 %v451
      %v1059 = vpop.f32.mrf.mxu0
      %v1060 = vadd.f32 0.0, %v1059
      %v1061 = vpop.f32.mrf.mxu0
      %v1062 = vadd.f32 0.0, %v1061
      %1063 = vmatmul.bf16.gmra.mxu0 %v454
      %v1064 = vpop.f32.mrf.mxu0
      %v1065 = vadd.f32 0.0, %v1064
      %v1066 = vpop.f32.mrf.mxu0
      %v1067 = vadd.f32 0.0, %v1066
      %1068 = vmatmul.bf16.gmra.mxu0 %v457
      %v1069 = vpop.f32.mrf.mxu0
      %v1070 = vadd.f32 0.0, %v1069
      %v1071 = vpop.f32.mrf.mxu0
      %v1072 = vadd.f32 0.0, %v1071
      %1073 = vmatmul.bf16.gmra.mxu0 %v460
      %v1074 = vpop.f32.mrf.mxu0
      %v1075 = vadd.f32 0.0, %v1074
      %v1076 = vpop.f32.mrf.mxu0
      %v1077 = vadd.f32 0.0, %v1076
      %1078 = vmatmul.bf16.gmra.mxu0 %v463
      %v1079 = vpop.f32.mrf.mxu0
      %v1080 = vadd.f32 0.0, %v1079
      %v1081 = vpop.f32.mrf.mxu0
      %v1082 = vadd.f32 0.0, %v1081
      %1083 = vmatmul.bf16.gmra.mxu0 %v466
      %v1084 = vpop.f32.mrf.mxu0
      %v1085 = vadd.f32 0.0, %v1084
      %v1086 = vpop.f32.mrf.mxu0
      %v1087 = vadd.f32 0.0, %v1086
      %1088 = vmatmul.bf16.gmra.mxu0 %v469
      %v1089 = vpop.f32.mrf.mxu0
      %v1090 = vadd.f32 0.0, %v1089
      %v1091 = vpop.f32.mrf.mxu0
      %v1092 = vadd.f32 0.0, %v1091
      %1093 = vdwg.mxu0
      %1094 = vmatpush.bf16.msra.mxu0 0
      %1095 = vmatpush.bf16.msra.mxu0 0
      %1096 = vmatpush.bf16.msra.mxu0 0
      %1097 = vmatpush.bf16.msra.mxu0 0
      %1098 = vmatpush.bf16.msra.mxu0 %v384
      %1099 = vmatpush.bf16.msra.mxu0 %v375
      %1100 = vmatpush.bf16.msra.mxu0 %v366
      %1101 = vmatpush.bf16.msra.mxu0 %v357
      %1102 = vmatmul.bf16.gmra.mxu0 %v424
      %v1103 = vpop.f32.mrf.mxu0
      %v1104 = vadd.f32 0.0, %v1103
      %v1105 = vpop.f32.mrf.mxu0
      %v1106 = vadd.f32 0.0, %v1105
      %1107 = vmatmul.bf16.gmra.mxu0 %v427
      %v1108 = vpop.f32.mrf.mxu0
      %v1109 = vadd.f32 0.0, %v1108
      %v1110 = vpop.f32.mrf.mxu0
      %v1111 = vadd.f32 0.0, %v1110
      %1112 = vmatmul.bf16.gmra.mxu0 %v430
      %v1113 = vpop.f32.mrf.mxu0
      %v1114 = vadd.f32 0.0, %v1113
      %v1115 = vpop.f32.mrf.mxu0
      %v1116 = vadd.f32 0.0, %v1115
      %1117 = vmatmul.bf16.gmra.mxu0 %v433
      %v1118 = vpop.f32.mrf.mxu0
      %v1119 = vadd.f32 0.0, %v1118
      %v1120 = vpop.f32.mrf.mxu0
      %v1121 = vadd.f32 0.0, %v1120
      %1122 = vmatmul.bf16.gmra.mxu0 %v436
      %v1123 = vpop.f32.mrf.mxu0
      %v1124 = vadd.f32 0.0, %v1123
      %v1125 = vpop.f32.mrf.mxu0
      %v1126 = vadd.f32 0.0, %v1125
      %1127 = vmatmul.bf16.gmra.mxu0 %v439
      %v1128 = vpop.f32.mrf.mxu0
      %v1129 = vadd.f32 0.0, %v1128
      %v1130 = vpop.f32.mrf.mxu0
      %v1131 = vadd.f32 0.0, %v1130
      %1132 = vmatmul.bf16.gmra.mxu0 %v442
      %v1133 = vpop.f32.mrf.mxu0
      %v1134 = vadd.f32 0.0, %v1133
      %v1135 = vpop.f32.mrf.mxu0
      %v1136 = vadd.f32 0.0, %v1135
      %1137 = vmatmul.bf16.gmra.mxu0 %v445
      %v1138 = vpop.f32.mrf.mxu0
      %v1139 = vadd.f32 0.0, %v1138
      %v1140 = vpop.f32.mrf.mxu0
      %v1141 = vadd.f32 0.0, %v1140
      %1142 = vmatmul.bf16.gmra.mxu0 %v448
      %v1143 = vpop.f32.mrf.mxu0
      %v1144 = vadd.f32 0.0, %v1143
      %v1145 = vpop.f32.mrf.mxu0
      %v1146 = vadd.f32 0.0, %v1145
      %1147 = vmatmul.bf16.gmra.mxu0 %v451
      %v1148 = vpop.f32.mrf.mxu0
      %v1149 = vadd.f32 0.0, %v1148
      %v1150 = vpop.f32.mrf.mxu0
      %v1151 = vadd.f32 0.0, %v1150
      %1152 = vmatmul.bf16.gmra.mxu0 %v454
      %v1153 = vpop.f32.mrf.mxu0
      %v1154 = vadd.f32 0.0, %v1153
      %v1155 = vpop.f32.mrf.mxu0
      %v1156 = vadd.f32 0.0, %v1155
      %1157 = vmatmul.bf16.gmra.mxu0 %v457
      %v1158 = vpop.f32.mrf.mxu0
      %v1159 = vadd.f32 0.0, %v1158
      %v1160 = vpop.f32.mrf.mxu0
      %v1161 = vadd.f32 0.0, %v1160
      %1162 = vmatmul.bf16.gmra.mxu0 %v460
      %v1163 = vpop.f32.mrf.mxu0
      %v1164 = vadd.f32 0.0, %v1163
      %v1165 = vpop.f32.mrf.mxu0
      %v1166 = vadd.f32 0.0, %v1165
      %1167 = vmatmul.bf16.gmra.mxu0 %v463
      %v1168 = vpop.f32.mrf.mxu0
      %v1169 = vadd.f32 0.0, %v1168
      %v1170 = vpop.f32.mrf.mxu0
      %v1171 = vadd.f32 0.0, %v1170
      %1172 = vmatmul.bf16.gmra.mxu0 %v466
      %v1173 = vpop.f32.mrf.mxu0
      %v1174 = vadd.f32 0.0, %v1173
      %v1175 = vpop.f32.mrf.mxu0
      %v1176 = vadd.f32 0.0, %v1175
      %1177 = vmatmul.bf16.gmra.mxu0 %v469
      %v1178 = vpop.f32.mrf.mxu0
      %v1179 = vadd.f32 0.0, %v1178
      %v1180 = vpop.f32.mrf.mxu0
      %v1181 = vadd.f32 0.0, %v1180
      %1182 = vdwg.mxu0
      %1183 = vmatpush.bf16.msra.mxu0 0
      %1184 = vmatpush.bf16.msra.mxu0 0
      %1185 = vmatpush.bf16.msra.mxu0 0
      %1186 = vmatpush.bf16.msra.mxu0 0
      %1187 = vmatpush.bf16.msra.mxu0 %v385
      %1188 = vmatpush.bf16.msra.mxu0 %v376
      %1189 = vmatpush.bf16.msra.mxu0 %v367
      %1190 = vmatpush.bf16.msra.mxu0 %v358
      %1191 = vmatmul.bf16.gmra.mxu0 %v424
      %v1192 = vpop.f32.mrf.mxu0
      %v1193 = vadd.f32 0.0, %v1192
      %v1194 = vpop.f32.mrf.mxu0
      %v1195 = vadd.f32 0.0, %v1194
      %1196 = vmatmul.bf16.gmra.mxu0 %v427
      %v1197 = vpop.f32.mrf.mxu0
      %v1198 = vadd.f32 0.0, %v1197
      %v1199 = vpop.f32.mrf.mxu0
      %v1200 = vadd.f32 0.0, %v1199
      %1201 = vmatmul.bf16.gmra.mxu0 %v430
      %v1202 = vpop.f32.mrf.mxu0
      %v1203 = vadd.f32 0.0, %v1202
      %v1204 = vpop.f32.mrf.mxu0
      %v1205 = vadd.f32 0.0, %v1204
      %1206 = vmatmul.bf16.gmra.mxu0 %v433
      %v1207 = vpop.f32.mrf.mxu0
      %v1208 = vadd.f32 0.0, %v1207
      %v1209 = vpop.f32.mrf.mxu0
      %v1210 = vadd.f32 0.0, %v1209
      %1211 = vmatmul.bf16.gmra.mxu0 %v436
      %v1212 = vpop.f32.mrf.mxu0
      %v1213 = vadd.f32 0.0, %v1212
      %v1214 = vpop.f32.mrf.mxu0
      %v1215 = vadd.f32 0.0, %v1214
      %1216 = vmatmul.bf16.gmra.mxu0 %v439
      %v1217 = vpop.f32.mrf.mxu0
      %v1218 = vadd.f32 0.0, %v1217
      %v1219 = vpop.f32.mrf.mxu0
      %v1220 = vadd.f32 0.0, %v1219
      %1221 = vmatmul.bf16.gmra.mxu0 %v442
      %v1222 = vpop.f32.mrf.mxu0
      %v1223 = vadd.f32 0.0, %v1222
      %v1224 = vpop.f32.mrf.mxu0
      %v1225 = vadd.f32 0.0, %v1224
      %1226 = vmatmul.bf16.gmra.mxu0 %v445
      %v1227 = vpop.f32.mrf.mxu0
      %v1228 = vadd.f32 0.0, %v1227
      %v1229 = vpop.f32.mrf.mxu0
      %v1230 = vadd.f32 0.0, %v1229
      %1231 = vmatmul.bf16.gmra.mxu0 %v448
      %v1232 = vpop.f32.mrf.mxu0
      %v1233 = vadd.f32 0.0, %v1232
      %v1234 = vpop.f32.mrf.mxu0
      %v1235 = vadd.f32 0.0, %v1234
      %1236 = vmatmul.bf16.gmra.mxu0 %v451
      %v1237 = vpop.f32.mrf.mxu0
      %v1238 = vadd.f32 0.0, %v1237
      %v1239 = vpop.f32.mrf.mxu0
      %v1240 = vadd.f32 0.0, %v1239
      %1241 = vmatmul.bf16.gmra.mxu0 %v454
      %v1242 = vpop.f32.mrf.mxu0
      %v1243 = vadd.f32 0.0, %v1242
      %v1244 = vpop.f32.mrf.mxu0
      %v1245 = vadd.f32 0.0, %v1244
      %1246 = vmatmul.bf16.gmra.mxu0 %v457
      %v1247 = vpop.f32.mrf.mxu0
      %v1248 = vadd.f32 0.0, %v1247
      %v1249 = vpop.f32.mrf.mxu0
      %v1250 = vadd.f32 0.0, %v1249
      %1251 = vmatmul.bf16.gmra.mxu0 %v460
      %v1252 = vpop.f32.mrf.mxu0
      %v1253 = vadd.f32 0.0, %v1252
      %v1254 = vpop.f32.mrf.mxu0
      %v1255 = vadd.f32 0.0, %v1254
      %1256 = vmatmul.bf16.gmra.mxu0 %v463
      %v1257 = vpop.f32.mrf.mxu0
      %v1258 = vadd.f32 0.0, %v1257
      %v1259 = vpop.f32.mrf.mxu0
      %v1260 = vadd.f32 0.0, %v1259
      %1261 = vmatmul.bf16.gmra.mxu0 %v466
      %v1262 = vpop.f32.mrf.mxu0
      %v1263 = vadd.f32 0.0, %v1262
      %v1264 = vpop.f32.mrf.mxu0
      %v1265 = vadd.f32 0.0, %v1264
      %1266 = vmatmul.bf16.gmra.mxu0 %v469
      %v1267 = vpop.f32.mrf.mxu0
      %v1268 = vadd.f32 0.0, %v1267
      %v1269 = vpop.f32.mrf.mxu0
      %v1270 = vadd.f32 0.0, %v1269
      %1271 = vdwg.mxu0
      %1272 = vst [vmem:[%s147] sm:$0xff] %v481
      %1273 = vst [vmem:[%s147 + $0x8] sm:$0xff] %v570
      %1274 = vst [vmem:[%s147 + $0x10] sm:$0xff] %v659
      %1275 = vst [vmem:[%s147 + $0x18] sm:$0xff] %v748
      %1276 = vst [vmem:[%s147 + $0x20] sm:$0xff] %v837
      %1277 = vst [vmem:[%s147 + $0x28] sm:$0xff] %v926
      %1278 = vst [vmem:[%s147 + $0x30] sm:$0xff] %v1015
      %1279 = vst [vmem:[%s147 + $0x38] sm:$0xff] %v1104
      %1280 = vst [vmem:[%s147 + $0x40] sm:$0xff] %v1193
      %1281 = vst [vmem:[%s147 + $0x48] sm:$0xff] %v483
      %1282 = vst [vmem:[%s147 + $0x50] sm:$0xff] %v572
      %1283 = vst [vmem:[%s147 + $0x58] sm:$0xff] %v661
      %1284 = vst [vmem:[%s147 + $0x60] sm:$0xff] %v750
      %1285 = vst [vmem:[%s147 + $0x68] sm:$0xff] %v839
      %1286 = vst [vmem:[%s147 + $0x70] sm:$0xff] %v928
      %1287 = vst [vmem:[%s147 + $0x78] sm:$0xff] %v1017
      %1288 = vst [vmem:[%s147 + $0x80] sm:$0xff] %v1106
      %1289 = vst [vmem:[%s147 + $0x88] sm:$0xff] %v1195
      %1290 = vst [vmem:[%s147 + $0x90] sm:$0xff] %v486
      %1291 = vst [vmem:[%s147 + $0x98] sm:$0xff] %v575
      %1292 = vst [vmem:[%s147 + $0xa0] sm:$0xff] %v664
      %1293 = vst [vmem:[%s147 + $0xa8] sm:$0xff] %v753
      %1294 = vst [vmem:[%s147 + $0xb0] sm:$0xff] %v842
      %1295 = vst [vmem:[%s147 + $0xb8] sm:$0xff] %v931
      %1296 = vst [vmem:[%s147 + $0xc0] sm:$0xff] %v1020
      %1297 = vst [vmem:[%s147 + $0xc8] sm:$0xff] %v1109
      %1298 = vst [vmem:[%s147 + $0xd0] sm:$0xff] %v1198
      %1299 = vst [vmem:[%s147 + $0xd8] sm:$0xff] %v488
      %1300 = vst [vmem:[%s147 + $0xe0] sm:$0xff] %v577
      %1301 = vst [vmem:[%s147 + $0xe8] sm:$0xff] %v666
      %1302 = vst [vmem:[%s147 + $0xf0] sm:$0xff] %v755
      %1303 = vst [vmem:[%s147 + $0xf8] sm:$0xff] %v844
      %1304 = vst [vmem:[%s147 + $0x100] sm:$0xff] %v933
      %1305 = vst [vmem:[%s147 + $0x108] sm:$0xff] %v1022
      %1306 = vst [vmem:[%s147 + $0x110] sm:$0xff] %v1111
      %1307 = vst [vmem:[%s147 + $0x118] sm:$0xff] %v1200
      %1308 = vst [vmem:[%s147 + $0x120] sm:$0xff] %v491
      %1309 = vst [vmem:[%s147 + $0x128] sm:$0xff] %v580
      %1310 = vst [vmem:[%s147 + $0x130] sm:$0xff] %v669
      %1311 = vst [vmem:[%s147 + $0x138] sm:$0xff] %v758
      %1312 = vst [vmem:[%s147 + $0x140] sm:$0xff] %v847
      %1313 = vst [vmem:[%s147 + $0x148] sm:$0xff] %v936
      %1314 = vst [vmem:[%s147 + $0x150] sm:$0xff] %v1025
      %1315 = vst [vmem:[%s147 + $0x158] sm:$0xff] %v1114
      %1316 = vst [vmem:[%s147 + $0x160] sm:$0xff] %v1203
      %1317 = vst [vmem:[%s147 + $0x168] sm:$0xff] %v493
      %1318 = vst [vmem:[%s147 + $0x170] sm:$0xff] %v582
      %1319 = vst [vmem:[%s147 + $0x178] sm:$0xff] %v671
      %1320 = vst [vmem:[%s147 + $0x180] sm:$0xff] %v760
      %1321 = vst [vmem:[%s147 + $0x188] sm:$0xff] %v849
      %1322 = vst [vmem:[%s147 + $0x190] sm:$0xff] %v938
      %1323 = vst [vmem:[%s147 + $0x198] sm:$0xff] %v1027
      %1324 = vst [vmem:[%s147 + $0x1a0] sm:$0xff] %v1116
      %1325 = vst [vmem:[%s147 + $0x1a8] sm:$0xff] %v1205
      %1326 = vst [vmem:[%s147 + $0x1b0] sm:$0xff] %v496
      %1327 = vst [vmem:[%s147 + $0x1b8] sm:$0xff] %v585
      %1328 = vst [vmem:[%s147 + $0x1c0] sm:$0xff] %v674
      %1329 = vst [vmem:[%s147 + $0x1c8] sm:$0xff] %v763
      %1330 = vst [vmem:[%s147 + $0x1d0] sm:$0xff] %v852
      %1331 = vst [vmem:[%s147 + $0x1d8] sm:$0xff] %v941
      %1332 = vst [vmem:[%s147 + $0x1e0] sm:$0xff] %v1030
      %1333 = vst [vmem:[%s147 + $0x1e8] sm:$0xff] %v1119
      %1334 = vst [vmem:[%s147 + $0x1f0] sm:$0xff] %v1208
      %1335 = vst [vmem:[%s147 + $0x1f8] sm:$0xff] %v498
      %1336 = vst [vmem:[%s147 + $0x200] sm:$0xff] %v587
      %1337 = vst [vmem:[%s147 + $0x208] sm:$0xff] %v676
      %1338 = vst [vmem:[%s147 + $0x210] sm:$0xff] %v765
      %1339 = vst [vmem:[%s147 + $0x218] sm:$0xff] %v854
      %1340 = vst [vmem:[%s147 + $0x220] sm:$0xff] %v943
      %1341 = vst [vmem:[%s147 + $0x228] sm:$0xff] %v1032
      %1342 = vst [vmem:[%s147 + $0x230] sm:$0xff] %v1121
      %1343 = vst [vmem:[%s147 + $0x238] sm:$0xff] %v1210
      %1344 = vst [vmem:[%s147 + $0x240] sm:$0xff] %v501
      %1345 = vst [vmem:[%s147 + $0x248] sm:$0xff] %v590
      %1346 = vst [vmem:[%s147 + $0x250] sm:$0xff] %v679
      %1347 = vst [vmem:[%s147 + $0x258] sm:$0xff] %v768
      %1348 = vst [vmem:[%s147 + $0x260] sm:$0xff] %v857
      %1349 = vst [vmem:[%s147 + $0x268] sm:$0xff] %v946
      %1350 = vst [vmem:[%s147 + $0x270] sm:$0xff] %v1035
      %1351 = vst [vmem:[%s147 + $0x278] sm:$0xff] %v1124
      %1352 = vst [vmem:[%s147 + $0x280] sm:$0xff] %v1213
      %1353 = vst [vmem:[%s147 + $0x288] sm:$0xff] %v503
      %1354 = vst [vmem:[%s147 + $0x290] sm:$0xff] %v592
      %1355 = vst [vmem:[%s147 + $0x298] sm:$0xff] %v681
      %1356 = vst [vmem:[%s147 + $0x2a0] sm:$0xff] %v770
      %1357 = vst [vmem:[%s147 + $0x2a8] sm:$0xff] %v859
      %1358 = vst [vmem:[%s147 + $0x2b0] sm:$0xff] %v948
      %1359 = vst [vmem:[%s147 + $0x2b8] sm:$0xff] %v1037
      %1360 = vst [vmem:[%s147 + $0x2c0] sm:$0xff] %v1126
      %1361 = vst [vmem:[%s147 + $0x2c8] sm:$0xff] %v1215
      %1362 = vst [vmem:[%s147 + $0x2d0] sm:$0xff] %v506
      %1363 = vst [vmem:[%s147 + $0x2d8] sm:$0xff] %v595
      %1364 = vst [vmem:[%s147 + $0x2e0] sm:$0xff] %v684
      %1365 = vst [vmem:[%s147 + $0x2e8] sm:$0xff] %v773
      %1366 = vst [vmem:[%s147 + $0x2f0] sm:$0xff] %v862
      %1367 = vst [vmem:[%s147 + $0x2f8] sm:$0xff] %v951
      %1368 = vst [vmem:[%s147 + $0x300] sm:$0xff] %v1040
      %1369 = vst [vmem:[%s147 + $0x308] sm:$0xff] %v1129
      %1370 = vst [vmem:[%s147 + $0x310] sm:$0xff] %v1218
      %1371 = vst [vmem:[%s147 + $0x318] sm:$0xff] %v508
      %1372 = vst [vmem:[%s147 + $0x320] sm:$0xff] %v597
      %1373 = vst [vmem:[%s147 + $0x328] sm:$0xff] %v686
      %1374 = vst [vmem:[%s147 + $0x330] sm:$0xff] %v775
      %1375 = vst [vmem:[%s147 + $0x338] sm:$0xff] %v864
      %1376 = vst [vmem:[%s147 + $0x340] sm:$0xff] %v953
      %1377 = vst [vmem:[%s147 + $0x348] sm:$0xff] %v1042
      %1378 = vst [vmem:[%s147 + $0x350] sm:$0xff] %v1131
      %1379 = vst [vmem:[%s147 + $0x358] sm:$0xff] %v1220
      %1380 = vst [vmem:[%s147 + $0x360] sm:$0xff] %v511
      %1381 = vst [vmem:[%s147 + $0x368] sm:$0xff] %v600
      %1382 = vst [vmem:[%s147 + $0x370] sm:$0xff] %v689
      %1383 = vst [vmem:[%s147 + $0x378] sm:$0xff] %v778
      %1384 = vst [vmem:[%s147 + $0x380] sm:$0xff] %v867
      %1385 = vst [vmem:[%s147 + $0x388] sm:$0xff] %v956
      %1386 = vst [vmem:[%s147 + $0x390] sm:$0xff] %v1045
      %1387 = vst [vmem:[%s147 + $0x398] sm:$0xff] %v1134
      %1388 = vst [vmem:[%s147 + $0x3a0] sm:$0xff] %v1223
      %1389 = vst [vmem:[%s147 + $0x3a8] sm:$0xff] %v513
      %1390 = vst [vmem:[%s147 + $0x3b0] sm:$0xff] %v602
      %1391 = vst [vmem:[%s147 + $0x3b8] sm:$0xff] %v691
      %1392 = vst [vmem:[%s147 + $0x3c0] sm:$0xff] %v780
      %1393 = vst [vmem:[%s147 + $0x3c8] sm:$0xff] %v869
      %1394 = vst [vmem:[%s147 + $0x3d0] sm:$0xff] %v958
      %1395 = vst [vmem:[%s147 + $0x3d8] sm:$0xff] %v1047
      %1396 = vst [vmem:[%s147 + $0x3e0] sm:$0xff] %v1136
      %1397 = vst [vmem:[%s147 + $0x3e8] sm:$0xff] %v1225
      %1398 = vst [vmem:[%s147 + $0x3f0] sm:$0xff] %v516
      %1399 = vst [vmem:[%s147 + $0x3f8] sm:$0xff] %v605
      %1400 = vst [vmem:[%s147 + $0x400] sm:$0xff] %v694
      %1401 = vst [vmem:[%s147 + $0x408] sm:$0xff] %v783
      %1402 = vst [vmem:[%s147 + $0x410] sm:$0xff] %v872
      %1403 = vst [vmem:[%s147 + $0x418] sm:$0xff] %v961
      %1404 = vst [vmem:[%s147 + $0x420] sm:$0xff] %v1050
      %1405 = vst [vmem:[%s147 + $0x428] sm:$0xff] %v1139
      %1406 = vst [vmem:[%s147 + $0x430] sm:$0xff] %v1228
      %1407 = vst [vmem:[%s147 + $0x438] sm:$0xff] %v518
      %1408 = vst [vmem:[%s147 + $0x440] sm:$0xff] %v607
      %1409 = vst [vmem:[%s147 + $0x448] sm:$0xff] %v696
      %1410 = vst [vmem:[%s147 + $0x450] sm:$0xff] %v785
      %1411 = vst [vmem:[%s147 + $0x458] sm:$0xff] %v874
      %1412 = vst [vmem:[%s147 + $0x460] sm:$0xff] %v963
      %1413 = vst [vmem:[%s147 + $0x468] sm:$0xff] %v1052
      %1414 = vst [vmem:[%s147 + $0x470] sm:$0xff] %v1141
      %1415 = vst [vmem:[%s147 + $0x478] sm:$0xff] %v1230
      %1416 = vst [vmem:[%s147 + $0x480] sm:$0xff] %v521
      %1417 = vst [vmem:[%s147 + $0x488] sm:$0xff] %v610
      %1418 = vst [vmem:[%s147 + $0x490] sm:$0xff] %v699
      %1419 = vst [vmem:[%s147 + $0x498] sm:$0xff] %v788
      %1420 = vst [vmem:[%s147 + $0x4a0] sm:$0xff] %v877
      %1421 = vst [vmem:[%s147 + $0x4a8] sm:$0xff] %v966
      %1422 = vst [vmem:[%s147 + $0x4b0] sm:$0xff] %v1055
      %1423 = vst [vmem:[%s147 + $0x4b8] sm:$0xff] %v1144
      %1424 = vst [vmem:[%s147 + $0x4c0] sm:$0xff] %v1233
      %1425 = vst [vmem:[%s147 + $0x4c8] sm:$0xff] %v523
      %1426 = vst [vmem:[%s147 + $0x4d0] sm:$0xff] %v612
      %1427 = vst [vmem:[%s147 + $0x4d8] sm:$0xff] %v701
      %1428 = vst [vmem:[%s147 + $0x4e0] sm:$0xff] %v790
      %1429 = vst [vmem:[%s147 + $0x4e8] sm:$0xff] %v879
      %1430 = vst [vmem:[%s147 + $0x4f0] sm:$0xff] %v968
      %1431 = vst [vmem:[%s147 + $0x4f8] sm:$0xff] %v1057
      %1432 = vst [vmem:[%s147 + $0x500] sm:$0xff] %v1146
      %1433 = vst [vmem:[%s147 + $0x508] sm:$0xff] %v1235
      %1434 = vst [vmem:[%s147 + $0x510] sm:$0xff] %v526
      %1435 = vst [vmem:[%s147 + $0x518] sm:$0xff] %v615
      %1436 = vst [vmem:[%s147 + $0x520] sm:$0xff] %v704
      %1437 = vst [vmem:[%s147 + $0x528] sm:$0xff] %v793
      %1438 = vst [vmem:[%s147 + $0x530] sm:$0xff] %v882
      %1439 = vst [vmem:[%s147 + $0x538] sm:$0xff] %v971
      %1440 = vst [vmem:[%s147 + $0x540] sm:$0xff] %v1060
      %1441 = vst [vmem:[%s147 + $0x548] sm:$0xff] %v1149
      %1442 = vst [vmem:[%s147 + $0x550] sm:$0xff] %v1238
      %1443 = vst [vmem:[%s147 + $0x558] sm:$0xff] %v528
      %1444 = vst [vmem:[%s147 + $0x560] sm:$0xff] %v617
      %1445 = vst [vmem:[%s147 + $0x568] sm:$0xff] %v706
      %1446 = vst [vmem:[%s147 + $0x570] sm:$0xff] %v795
      %1447 = vst [vmem:[%s147 + $0x578] sm:$0xff] %v884
      %1448 = vst [vmem:[%s147 + $0x580] sm:$0xff] %v973
      %1449 = vst [vmem:[%s147 + $0x588] sm:$0xff] %v1062
      %1450 = vst [vmem:[%s147 + $0x590] sm:$0xff] %v1151
      %1451 = vst [vmem:[%s147 + $0x598] sm:$0xff] %v1240
      %1452 = vst [vmem:[%s147 + $0x5a0] sm:$0xff] %v531
      %1453 = vst [vmem:[%s147 + $0x5a8] sm:$0xff] %v620
      %1454 = vst [vmem:[%s147 + $0x5b0] sm:$0xff] %v709
      %1455 = vst [vmem:[%s147 + $0x5b8] sm:$0xff] %v798
      %1456 = vst [vmem:[%s147 + $0x5c0] sm:$0xff] %v887
      %1457 = vst [vmem:[%s147 + $0x5c8] sm:$0xff] %v976
      %1458 = vst [vmem:[%s147 + $0x5d0] sm:$0xff] %v1065
      %1459 = vst [vmem:[%s147 + $0x5d8] sm:$0xff] %v1154
      %1460 = vst [vmem:[%s147 + $0x5e0] sm:$0xff] %v1243
      %1461 = vst [vmem:[%s147 + $0x5e8] sm:$0xff] %v533
      %1462 = vst [vmem:[%s147 + $0x5f0] sm:$0xff] %v622
      %1463 = vst [vmem:[%s147 + $0x5f8] sm:$0xff] %v711
      %1464 = vst [vmem:[%s147 + $0x600] sm:$0xff] %v800
      %1465 = vst [vmem:[%s147 + $0x608] sm:$0xff] %v889
      %1466 = vst [vmem:[%s147 + $0x610] sm:$0xff] %v978
      %1467 = vst [vmem:[%s147 + $0x618] sm:$0xff] %v1067
      %1468 = vst [vmem:[%s147 + $0x620] sm:$0xff] %v1156
      %1469 = vst [vmem:[%s147 + $0x628] sm:$0xff] %v1245
      %1470 = vst [vmem:[%s147 + $0x630] sm:$0xff] %v536
      %1471 = vst [vmem:[%s147 + $0x638] sm:$0xff] %v625
      %1472 = vst [vmem:[%s147 + $0x640] sm:$0xff] %v714
      %1473 = vst [vmem:[%s147 + $0x648] sm:$0xff] %v803
      %1474 = vst [vmem:[%s147 + $0x650] sm:$0xff] %v892
      %1475 = vst [vmem:[%s147 + $0x658] sm:$0xff] %v981
      %1476 = vst [vmem:[%s147 + $0x660] sm:$0xff] %v1070
      %1477 = vst [vmem:[%s147 + $0x668] sm:$0xff] %v1159
      %1478 = vst [vmem:[%s147 + $0x670] sm:$0xff] %v1248
      %1479 = vst [vmem:[%s147 + $0x678] sm:$0xff] %v538
      %1480 = vst [vmem:[%s147 + $0x680] sm:$0xff] %v627
      %1481 = vst [vmem:[%s147 + $0x688] sm:$0xff] %v716
      %1482 = vst [vmem:[%s147 + $0x690] sm:$0xff] %v805
      %1483 = vst [vmem:[%s147 + $0x698] sm:$0xff] %v894
      %1484 = vst [vmem:[%s147 + $0x6a0] sm:$0xff] %v983
      %1485 = vst [vmem:[%s147 + $0x6a8] sm:$0xff] %v1072
      %1486 = vst [vmem:[%s147 + $0x6b0] sm:$0xff] %v1161
      %1487 = vst [vmem:[%s147 + $0x6b8] sm:$0xff] %v1250
      %1488 = vst [vmem:[%s147 + $0x6c0] sm:$0xff] %v541
      %1489 = vst [vmem:[%s147 + $0x6c8] sm:$0xff] %v630
      %1490 = vst [vmem:[%s147 + $0x6d0] sm:$0xff] %v719
      %1491 = vst [vmem:[%s147 + $0x6d8] sm:$0xff] %v808
      %1492 = vst [vmem:[%s147 + $0x6e0] sm:$0xff] %v897
      %1493 = vst [vmem:[%s147 + $0x6e8] sm:$0xff] %v986
      %1494 = vst [vmem:[%s147 + $0x6f0] sm:$0xff] %v1075
      %1495 = vst [vmem:[%s147 + $0x6f8] sm:$0xff] %v1164
      %1496 = vst [vmem:[%s147 + $0x700] sm:$0xff] %v1253
      %1497 = vst [vmem:[%s147 + $0x708] sm:$0xff] %v543
      %1498 = vst [vmem:[%s147 + $0x710] sm:$0xff] %v632
      %1499 = vst [vmem:[%s147 + $0x718] sm:$0xff] %v721
      %1500 = vst [vmem:[%s147 + $0x720] sm:$0xff] %v810
      %1501 = vst [vmem:[%s147 + $0x728] sm:$0xff] %v899
      %1502 = vst [vmem:[%s147 + $0x730] sm:$0xff] %v988
      %1503 = vst [vmem:[%s147 + $0x738] sm:$0xff] %v1077
      %1504 = vst [vmem:[%s147 + $0x740] sm:$0xff] %v1166
      %1505 = vst [vmem:[%s147 + $0x748] sm:$0xff] %v1255
      %1506 = vst [vmem:[%s147 + $0x750] sm:$0xff] %v546
      %1507 = vst [vmem:[%s147 + $0x758] sm:$0xff] %v635
      %1508 = vst [vmem:[%s147 + $0x760] sm:$0xff] %v724
      %1509 = vst [vmem:[%s147 + $0x768] sm:$0xff] %v813
      %1510 = vst [vmem:[%s147 + $0x770] sm:$0xff] %v902
      %1511 = vst [vmem:[%s147 + $0x778] sm:$0xff] %v991
      %1512 = vst [vmem:[%s147 + $0x780] sm:$0xff] %v1080
      %1513 = vst [vmem:[%s147 + $0x788] sm:$0xff] %v1169
      %1514 = vst [vmem:[%s147 + $0x790] sm:$0xff] %v1258
      %1515 = vst [vmem:[%s147 + $0x798] sm:$0xff] %v548
      %1516 = vst [vmem:[%s147 + $0x7a0] sm:$0xff] %v637
      %1517 = vst [vmem:[%s147 + $0x7a8] sm:$0xff] %v726
      %1518 = vst [vmem:[%s147 + $0x7b0] sm:$0xff] %v815
      %1519 = vst [vmem:[%s147 + $0x7b8] sm:$0xff] %v904
      %1520 = vst [vmem:[%s147 + $0x7c0] sm:$0xff] %v993
      %1521 = vst [vmem:[%s147 + $0x7c8] sm:$0xff] %v1082
      %1522 = vst [vmem:[%s147 + $0x7d0] sm:$0xff] %v1171
      %1523 = vst [vmem:[%s147 + $0x7d8] sm:$0xff] %v1260
      %1524 = vst [vmem:[%s147 + $0x7e0] sm:$0xff] %v551
      %1525 = vst [vmem:[%s147 + $0x7e8] sm:$0xff] %v640
      %1526 = vst [vmem:[%s147 + $0x7f0] sm:$0xff] %v729
      %1527 = vst [vmem:[%s147 + $0x7f8] sm:$0xff] %v818
      %1528 = vst [vmem:[%s147 + $0x800] sm:$0xff] %v907
      %1529 = vst [vmem:[%s147 + $0x808] sm:$0xff] %v996
      %1530 = vst [vmem:[%s147 + $0x810] sm:$0xff] %v1085
      %1531 = vst [vmem:[%s147 + $0x818] sm:$0xff] %v1174
      %1532 = vst [vmem:[%s147 + $0x820] sm:$0xff] %v1263
      %1533 = vst [vmem:[%s147 + $0x828] sm:$0xff] %v553
      %1534 = vst [vmem:[%s147 + $0x830] sm:$0xff] %v642
      %1535 = vst [vmem:[%s147 + $0x838] sm:$0xff] %v731
      %1536 = vst [vmem:[%s147 + $0x840] sm:$0xff] %v820
      %1537 = vst [vmem:[%s147 + $0x848] sm:$0xff] %v909
      %1538 = vst [vmem:[%s147 + $0x850] sm:$0xff] %v998
      %1539 = vst [vmem:[%s147 + $0x858] sm:$0xff] %v1087
      %1540 = vst [vmem:[%s147 + $0x860] sm:$0xff] %v1176
      %1541 = vst [vmem:[%s147 + $0x868] sm:$0xff] %v1265
      %1542 = vst [vmem:[%s147 + $0x870] sm:$0xff] %v556
      %1543 = vst [vmem:[%s147 + $0x878] sm:$0xff] %v645
      %1544 = vst [vmem:[%s147 + $0x880] sm:$0xff] %v734
      %1545 = vst [vmem:[%s147 + $0x888] sm:$0xff] %v823
      %1546 = vst [vmem:[%s147 + $0x890] sm:$0xff] %v912
      %1547 = vst [vmem:[%s147 + $0x898] sm:$0xff] %v1001
      %1548 = vst [vmem:[%s147 + $0x8a0] sm:$0xff] %v1090
      %1549 = vst [vmem:[%s147 + $0x8a8] sm:$0xff] %v1179
      %1550 = vst [vmem:[%s147 + $0x8b0] sm:$0xff] %v1268
      %1551 = vst [vmem:[%s147 + $0x8b8] sm:$0xff] %v558
      %1552 = vst [vmem:[%s147 + $0x8c0] sm:$0xff] %v647
      %1553 = vst [vmem:[%s147 + $0x8c8] sm:$0xff] %v736
      %1554 = vst [vmem:[%s147 + $0x8d0] sm:$0xff] %v825
      %1555 = vst [vmem:[%s147 + $0x8d8] sm:$0xff] %v914
      %1556 = vst [vmem:[%s147 + $0x8e0] sm:$0xff] %v1003
      %1557 = vst [vmem:[%s147 + $0x8e8] sm:$0xff] %v1092
      %1558 = vst [vmem:[%s147 + $0x8f0] sm:$0xff] %v1181
      %1559 = vst [vmem:[%s147 + $0x8f8] sm:$0xff] %v1270
      %s1560 = smul.u32 32, %s13
      %p1561 = scmp.lt.s32.totalorder %s1560, 191
      %s1562 = scalar_select %p1561, %s1560, 191
      %s1563 = smul.addr %s1562, 9
      %s1564 = smul.addr %s1563, 8
      %s1565 = scalar_lea.vmem %s2, %s1564
      // Predicated region
      $region29: #{image_decoder_forward.6} parent=27 // pred_check
        %p1566 = pneg %p78
      $region30: #{image_decoder_forward.6} parent=27 // pred_check_branch
        %1568 = sbr.rel (%p1566) target = $region32
      $region31: #{image_decoder_forward.6} parent=27 // pred_region
        %s1569 = smul.u32 32, %s13
      $region32: #{image_decoder_forward.6} parent=27 // pred_fallthru
        _
    $region28: #{image_decoder_forward.6} parent=5 // pred_fallthru
      _
    %p1570 = scmp.le.s32.totalorder 2, %s8
    // Predicated region
    $region33: #{image_decoder_forward.6} parent=5 // pred_check
      %p1571 = pneg %p1570
    $region34: #{image_decoder_forward.6} parent=5 // pred_check_branch
      %1573 = sbr.rel (%p1571) target = $region36
    $region35: #{image_decoder_forward.6} parent=5 // pred_region
      %s1574 = ssub.s32 %s8, 2
      // Predicated region
      $region37: #{image_decoder_forward.6} parent=35 // pred_check
        %p1575 = pneg %p84
      $region38: #{image_decoder_forward.6} parent=35 // pred_check_branch
        %1577 = sbr.rel (%p1575) target = $region40
      $region39: #{image_decoder_forward.6} parent=35 // pred_region
        %s1578 = smul.u32 32, %s14
        %p1579 = scmp.lt.s32.totalorder %s1578, 191
        %s1580 = scalar_select %p1579, %s1578, 191
        %s1581 = smul.addr %s1580, 9
        %s1582 = smul.addr %s1581, 8
        %s1583 = scalar_lea.vmem %s2, %s1582
      $region40: #{image_decoder_forward.6} parent=35 // pred_fallthru
        _
    $region36: #{image_decoder_forward.6} parent=5 // pred_fallthru
      _
  $region6: #{image_decoder_forward.6} parent=0 // loop_footer
    %s12 = sadd.s32 1, %s8
  $region7: #{image_decoder_forward.6} parent=0 // loop_footer_branch
    %7 = sbr.rel target = $region3
  $region8: #{image_decoder_forward.6} parent=0 // loop_exit
    _

// kernel: image_decoder_forward.7
$region0: #{image_decoder_forward.7}
  #allocation0 [shape = 'u32[]', space=smem, size = 0x4, offset = 0x4, fixed_abs, tag = 'smem constant byte address 0x4 - core index']
  #allocation1 [shape = 'u32[72,128]{1,0:T(1,128)}', space=vmem, size = 0x9000, scoped, tag = 'internal scratch']
  %s0 = inlined_call_operand.vmem [shape: f32[7424,32], index: 0, kind: input, shape index: {}]
  %s1 = inlined_call_operand.vmem [shape: bf16[32,128], index: 1, kind: input, shape index: {}]
  %s2 = inlined_call_operand.vmem [shape: f32[7424,128], index: 2, kind: output, shape index: {}]
  %s3 = sld [smem:[#allocation0]]
  $region41: #{image_decoder_forward.7} parent=0
    _
  %s5 = ssub.s32 1, %s3
  %s6 = scalar_select 0, %s5, %s3
  loop: start=0, step=1, limit=31
  $region2: #{image_decoder_forward.7} parent=0 // loop_pre_header
    _
  $region3: #{image_decoder_forward.7} parent=0 // loop_header
    %s8 = sphi 0, %s12
    %p9 = scmp.ge.s32.totalorder %s8, 31
    %s18 = sphi 0, %s20
    %s21 = sphi 0, %s18
    %s22 = sphi 0, %s21
    %s38 = sphi 0, %s22
    %s42 = sphi 0, %s42
    %s44 = sphi 0, %s42
    %s45 = sphi 0, %s44
    %s59 = sphi 0, %s45
    %s65 = sphi 0, %s67
    %s68 = sphi 0, %s65
    %s69 = sphi 0, %s68
    %s85 = sphi 0, %s69
  $region4: #{image_decoder_forward.7} parent=0 // loop_header_branch
    %11 = sbr.rel (%p9) target = $region8
  $region5: #{image_decoder_forward.7} parent=0 // loop_body
    %s13 = ssub.s32 %s8, 1
    %s14 = ssub.s32 %s8, 2
    %s15 = sadd.s32 %s8, 1
    %s16 = ssub.s32 %s8, %s15
    %p17 = scmp.eq.s32.totalorder %s16, 0
    %s19 = sadd.s32 %s18, 1
    %s20 = scalar_select %p17, %s18, %s19
    %p23 = pneg %p17
    %p24 = scmp.eq.s32.totalorder %s8, 28
    %p25 = por %p23, %p24
    %p26 = scmp.ne.s32.totalorder %s18, %s21
    %p27 = scmp.eq.s32.totalorder %s8, 0
    %p28 = por %p26, %p27
    %p29 = scmp.ne.s32.totalorder %s18, %s21
    %p30 = scmp.eq.s32.totalorder %s13, 28
    %p31 = por %p29, %p30
    %p32 = scmp.ne.s32.totalorder %s21, %s22
    %p33 = scmp.eq.s32.totalorder %s13, 0
    %p34 = por %p32, %p33
    %p35 = scmp.ne.s32.totalorder %s21, %s22
    %p36 = scmp.eq.s32.totalorder %s14, 28
    %p37 = por %p35, %p36
    %p39 = scmp.ne.s32.totalorder %s22, %s38
    %p40 = scmp.eq.s32.totalorder %s14, 0
    %p41 = por %p39, %p40
    %s43 = sadd.s32 %s42, 1
    %p46 = scmp.eq.s32.totalorder %s8, 28
    %p47 = scmp.ne.s32.totalorder %s42, %s44
    %p48 = scmp.eq.s32.totalorder %s8, 0
    %p49 = por %p47, %p48
    %p50 = scmp.ne.s32.totalorder %s42, %s44
    %p51 = scmp.eq.s32.totalorder %s13, 28
    %p52 = por %p50, %p51
    %p53 = scmp.ne.s32.totalorder %s44, %s45
    %p54 = scmp.eq.s32.totalorder %s13, 0
    %p55 = por %p53, %p54
    %p56 = scmp.ne.s32.totalorder %s44, %s45
    %p57 = scmp.eq.s32.totalorder %s14, 28
    %p58 = por %p56, %p57
    %p60 = scmp.ne.s32.totalorder %s45, %s59
    %p61 = scmp.eq.s32.totalorder %s14, 0
    %p62 = por %p60, %p61
    %s63 = ssub.s32 %s8, %s15
    %p64 = scmp.eq.s32.totalorder %s63, 0
    %s66 = sadd.s32 %s65, 1
    %s67 = scalar_select %p64, %s65, %s66
    %p70 = pneg %p64
    %p71 = scmp.eq.s32.totalorder %s8, 28
    %p72 = por %p70, %p71
    %p73 = scmp.ne.s32.totalorder %s65, %s68
    %p74 = scmp.eq.s32.totalorder %s8, 0
    %p75 = por %p73, %p74
    %p76 = scmp.ne.s32.totalorder %s65, %s68
    %p77 = scmp.eq.s32.totalorder %s13, 28
    %p78 = por %p76, %p77
    %p79 = scmp.ne.s32.totalorder %s68, %s69
    %p80 = scmp.eq.s32.totalorder %s13, 0
    %p81 = por %p79, %p80
    %p82 = scmp.ne.s32.totalorder %s68, %s69
    %p83 = scmp.eq.s32.totalorder %s14, 28
    %p84 = por %p82, %p83
    %p86 = scmp.ne.s32.totalorder %s69, %s85
    %p87 = scmp.eq.s32.totalorder %s14, 0
    %p88 = por %p86, %p87
    %p89 = scmp.le.s32.totalorder 1, %s8
    %p90 = scmp.lt.s32.totalorder %s8, 30
    %p91 = pnand %p89, %p90
    %p92 = pneg %p91
    // Predicated region
    $region9: #{image_decoder_forward.7} parent=5 // pred_check
      _
    $region10: #{image_decoder_forward.7} parent=5 // pred_check_branch
      %94 = sbr.rel (%p91) target = $region12
    $region11: #{image_decoder_forward.7} parent=5 // pred_region
      %s95 = ssub.s32 %s8, 1
      // Predicated region
      $region13: #{image_decoder_forward.7} parent=11 // pred_check
        %p96 = pneg %p55
      $region14: #{image_decoder_forward.7} parent=11 // pred_check_branch
        %98 = sbr.rel (%p96) target = $region16
      $region15: #{image_decoder_forward.7} parent=11 // pred_region
        _
      $region16: #{image_decoder_forward.7} parent=11 // pred_fallthru
        _
    $region12: #{image_decoder_forward.7} parent=5 // pred_fallthru
      _
    %p99 = scmp.lt.s32.totalorder %s8, 29
    // Predicated region
    $region17: #{image_decoder_forward.7} parent=5 // pred_check
      %p100 = pneg %p99
    $region18: #{image_decoder_forward.7} parent=5 // pred_check_branch
      %102 = sbr.rel (%p100) target = $region20
    $region19: #{image_decoder_forward.7} parent=5 // pred_region
      // Predicated region
      $region21: #{image_decoder_forward.7} parent=19 // pred_check
        %p103 = pneg %p28
      $region22: #{image_decoder_forward.7} parent=19 // pred_check_branch
        %105 = sbr.rel (%p103) target = $region24
      $region23: #{image_decoder_forward.7} parent=19 // pred_region
        %s106 = smul.u32 32, %s8
        %p107 = scmp.lt.s32.totalorder %s106, 927
        %s108 = scalar_select %p107, %s106, 927
        %s109 = smul.addr %s108, 8
        %s110 = scalar_lea.vmem %s0, %s109
        %s111 = smul.u32 32, %s8
      $region24: #{image_decoder_forward.7} parent=19 // pred_fallthru
        _
    $region20: #{image_decoder_forward.7} parent=5 // pred_fallthru
      _
    %p112 = scmp.le.s32.totalorder 1, %s8
    %p113 = scmp.lt.s32.totalorder %s8, 30
    %p114 = pnand %p112, %p113
    %p115 = pneg %p114
    // Predicated region
    $region25: #{image_decoder_forward.7} parent=5 // pred_check
      _
    $region26: #{image_decoder_forward.7} parent=5 // pred_check_branch
      %117 = sbr.rel (%p114) target = $region28
    $region27: #{image_decoder_forward.7} parent=5 // pred_region
      %s118 = ssub.s32 %s8, 1
      %s119 = smul.u32 32, %s13
      %p120 = scmp.lt.s32.totalorder %s119, 927
      %s121 = scalar_select %p120, %s119, 927
      %s122 = smul.addr %s121, 8
      %s123 = scalar_lea.vmem %s0, %s122
      %p124 = pneg %p34
      %p125 = pneg %p31
      %p126 = pneg %p55
      %p127 = pneg %p52
      %p128 = pneg %p81
      %p129 = pneg %p78
      %s130 = smul.u32 32, %s13
      %p131 = scmp.lt.s32.totalorder %s130, 927
      %s132 = scalar_select %p131, %s130, 927
      %s133 = smul.addr %s132, 8
      %s134 = scalar_lea.vmem %s2, %s133
      %s135 = smul.u32 32, %s13
      %p136 = scmp.lt.s32.totalorder %s135, 927
      %s137 = scalar_select %p136, %s135, 927
      %s138 = smul.addr %s137, 8
      %s139 = scalar_lea.vmem %s0, %s138
      %s140 = smul.u32 32, %s13
      %s141 = smul.u32 32, %s13
      %p142 = scmp.lt.s32.totalorder %s141, 927
      %s143 = scalar_select %p142, %s141, 927
      %s144 = smul.addr %s143, 8
      %s145 = scalar_lea.vmem %s2, %s144
      %s146 = smul.u32 32, %s13
      %v148 = vld [vmem:[%s139] sm:$0xff]
      %v149 = vld [vmem:[%s139 + $0x8] sm:$0xff]
      %v150 = vld [vmem:[%s139 + $0x10] sm:$0xff]
      %v151 = vld [vmem:[%s139 + $0x18] sm:$0xff]
      %v152 = vld [vmem:[%s139 + $0x20] sm:$0xff]
      %v153 = vld [vmem:[%s139 + $0x28] sm:$0xff]
      %v154 = vld [vmem:[%s139 + $0x30] sm:$0xff]
      %v155 = vld [vmem:[%s139 + $0x38] sm:$0xff]
      %v156 = vld [vmem:[%s139 + $0x40] sm:$0xff]
      %v157 = vld [vmem:[%s139 + $0x48] sm:$0xff]
      %v158 = vld [vmem:[%s139 + $0x50] sm:$0xff]
      %v159 = vld [vmem:[%s139 + $0x58] sm:$0xff]
      %v160 = vld [vmem:[%s139 + $0x60] sm:$0xff]
      %v161 = vld [vmem:[%s139 + $0x68] sm:$0xff]
      %v162 = vld [vmem:[%s139 + $0x70] sm:$0xff]
      %v163 = vld [vmem:[%s139 + $0x78] sm:$0xff]
      %v164 = vld [vmem:[%s139 + $0x80] sm:$0xff]
      %v165 = vld [vmem:[%s139 + $0x88] sm:$0xff]
      %v166 = vld [vmem:[%s139 + $0x90] sm:$0xff]
      %v167 = vld [vmem:[%s139 + $0x98] sm:$0xff]
      %v168 = vld [vmem:[%s139 + $0xa0] sm:$0xff]
      %v169 = vld [vmem:[%s139 + $0xa8] sm:$0xff]
      %v170 = vld [vmem:[%s139 + $0xb0] sm:$0xff]
      %v171 = vld [vmem:[%s139 + $0xb8] sm:$0xff]
      %v172 = vld [vmem:[%s139 + $0xc0] sm:$0xff]
      %v173 = vld [vmem:[%s139 + $0xc8] sm:$0xff]
      %v174 = vld [vmem:[%s139 + $0xd0] sm:$0xff]
      %v175 = vld [vmem:[%s139 + $0xd8] sm:$0xff]
      %v176 = vld [vmem:[%s139 + $0xe0] sm:$0xff]
      %v177 = vld [vmem:[%s139 + $0xe8] sm:$0xff]
      %v178 = vld [vmem:[%s139 + $0xf0] sm:$0xff]
      %v179 = vld [vmem:[%s139 + $0xf8] sm:$0xff]
      %v180 = vpack.c.bf16 %v149, %v148
      %v181 = vpack.c.bf16 %v151, %v150
      %v182 = vpack.c.bf16 %v153, %v152
      %v183 = vpack.c.bf16 %v155, %v154
      %v184 = vpack.c.bf16 %v157, %v156
      %v185 = vpack.c.bf16 %v159, %v158
      %v186 = vpack.c.bf16 %v161, %v160
      %v187 = vpack.c.bf16 %v163, %v162
      %v188 = vpack.c.bf16 %v165, %v164
      %v189 = vpack.c.bf16 %v167, %v166
      %v190 = vpack.c.bf16 %v169, %v168
      %v191 = vpack.c.bf16 %v171, %v170
      %v192 = vpack.c.bf16 %v173, %v172
      %v193 = vpack.c.bf16 %v175, %v174
      %v194 = vpack.c.bf16 %v177, %v176
      %v195 = vpack.c.bf16 %v179, %v178
      %v196 = vld [vmem:[%s1] sm:$0xf]
      %v197 = vld [vmem:[%s1 + $0x4] sm:$0xf]
      %v198 = vld [vmem:[%s1 + $0x8] sm:$0xf]
      %v199 = vld [vmem:[%s1 + $0xc] sm:$0xf]
      %v204 = vunpack.c.l.b16 %v196
      %v205 = vunpack.c.l.b16 %v197
      %v206 = vunpack.c.l.b16 %v198
      %v207 = vunpack.c.l.b16 %v199
      %v208 = vpack.c.b16 %v205, %v204
      %v209 = vpack.c.b16 %v207, %v206
      %vm212 = vcmask 261120
      %v214 = vsel %vm212, %v180, 0
      %v217 = vsel %vm212, %v181, 0
      %v220 = vsel %vm212, %v182, 0
      %v223 = vsel %vm212, %v183, 0
      %v226 = vsel %vm212, %v184, 0
      %v229 = vsel %vm212, %v185, 0
      %v232 = vsel %vm212, %v186, 0
      %v235 = vsel %vm212, %v187, 0
      %v238 = vsel %vm212, %v188, 0
      %v241 = vsel %vm212, %v189, 0
      %v244 = vsel %vm212, %v190, 0
      %v247 = vsel %vm212, %v191, 0
      %v250 = vsel %vm212, %v192, 0
      %v253 = vsel %vm212, %v193, 0
      %v256 = vsel %vm212, %v194, 0
      %v259 = vsel %vm212, %v195, 0
      %261 = vmatpush.bf16.msra.mxu0 0
      %262 = vmatpush.bf16.msra.mxu0 0
      %263 = vmatpush.bf16.msra.mxu0 0
      %264 = vmatpush.bf16.msra.mxu0 0
      %265 = vmatpush.bf16.msra.mxu0 0
      %266 = vmatpush.bf16.msra.mxu0 0
      %267 = vmatpush.bf16.msra.mxu0 %v209
      %268 = vmatpush.bf16.msra.mxu0 %v208
      %269 = vmatmul.bf16.gmra.mxu0 %v214
      %v270 = vpop.f32.mrf.mxu0
      %v271 = vadd.f32 0.0, %v270
      %v272 = vpop.f32.mrf.mxu0
      %v273 = vadd.f32 0.0, %v272
      %274 = vmatmul.bf16.gmra.mxu0 %v217
      %v275 = vpop.f32.mrf.mxu0
      %v276 = vadd.f32 0.0, %v275
      %v277 = vpop.f32.mrf.mxu0
      %v278 = vadd.f32 0.0, %v277
      %279 = vmatmul.bf16.gmra.mxu0 %v220
      %v280 = vpop.f32.mrf.mxu0
      %v281 = vadd.f32 0.0, %v280
      %v282 = vpop.f32.mrf.mxu0
      %v283 = vadd.f32 0.0, %v282
      %284 = vmatmul.bf16.gmra.mxu0 %v223
      %v285 = vpop.f32.mrf.mxu0
      %v286 = vadd.f32 0.0, %v285
      %v287 = vpop.f32.mrf.mxu0
      %v288 = vadd.f32 0.0, %v287
      %289 = vmatmul.bf16.gmra.mxu0 %v226
      %v290 = vpop.f32.mrf.mxu0
      %v291 = vadd.f32 0.0, %v290
      %v292 = vpop.f32.mrf.mxu0
      %v293 = vadd.f32 0.0, %v292
      %294 = vmatmul.bf16.gmra.mxu0 %v229
      %v295 = vpop.f32.mrf.mxu0
      %v296 = vadd.f32 0.0, %v295
      %v297 = vpop.f32.mrf.mxu0
      %v298 = vadd.f32 0.0, %v297
      %299 = vmatmul.bf16.gmra.mxu0 %v232
      %v300 = vpop.f32.mrf.mxu0
      %v301 = vadd.f32 0.0, %v300
      %v302 = vpop.f32.mrf.mxu0
      %v303 = vadd.f32 0.0, %v302
      %304 = vmatmul.bf16.gmra.mxu0 %v235
      %v305 = vpop.f32.mrf.mxu0
      %v306 = vadd.f32 0.0, %v305
      %v307 = vpop.f32.mrf.mxu0
      %v308 = vadd.f32 0.0, %v307
      %309 = vmatmul.bf16.gmra.mxu0 %v238
      %v310 = vpop.f32.mrf.mxu0
      %v311 = vadd.f32 0.0, %v310
      %v312 = vpop.f32.mrf.mxu0
      %v313 = vadd.f32 0.0, %v312
      %314 = vmatmul.bf16.gmra.mxu0 %v241
      %v315 = vpop.f32.mrf.mxu0
      %v316 = vadd.f32 0.0, %v315
      %v317 = vpop.f32.mrf.mxu0
      %v318 = vadd.f32 0.0, %v317
      %319 = vmatmul.bf16.gmra.mxu0 %v244
      %v320 = vpop.f32.mrf.mxu0
      %v321 = vadd.f32 0.0, %v320
      %v322 = vpop.f32.mrf.mxu0
      %v323 = vadd.f32 0.0, %v322
      %324 = vmatmul.bf16.gmra.mxu0 %v247
      %v325 = vpop.f32.mrf.mxu0
      %v326 = vadd.f32 0.0, %v325
      %v327 = vpop.f32.mrf.mxu0
      %v328 = vadd.f32 0.0, %v327
      %329 = vmatmul.bf16.gmra.mxu0 %v250
      %v330 = vpop.f32.mrf.mxu0
      %v331 = vadd.f32 0.0, %v330
      %v332 = vpop.f32.mrf.mxu0
      %v333 = vadd.f32 0.0, %v332
      %334 = vmatmul.bf16.gmra.mxu0 %v253
      %v335 = vpop.f32.mrf.mxu0
      %v336 = vadd.f32 0.0, %v335
      %v337 = vpop.f32.mrf.mxu0
      %v338 = vadd.f32 0.0, %v337
      %339 = vmatmul.bf16.gmra.mxu0 %v256
      %v340 = vpop.f32.mrf.mxu0
      %v341 = vadd.f32 0.0, %v340
      %v342 = vpop.f32.mrf.mxu0
      %v343 = vadd.f32 0.0, %v342
      %344 = vmatmul.bf16.gmra.mxu0 %v259
      %v345 = vpop.f32.mrf.mxu0
      %v346 = vadd.f32 0.0, %v345
      %v347 = vpop.f32.mrf.mxu0
      %v348 = vadd.f32 0.0, %v347
      %349 = vdwg.mxu0
      %350 = vst [vmem:[%s145] sm:$0xff] %v271
      %351 = vst [vmem:[%s145 + $0x8] sm:$0xff] %v273
      %352 = vst [vmem:[%s145 + $0x10] sm:$0xff] %v276
      %353 = vst [vmem:[%s145 + $0x18] sm:$0xff] %v278
      %354 = vst [vmem:[%s145 + $0x20] sm:$0xff] %v281
      %355 = vst [vmem:[%s145 + $0x28] sm:$0xff] %v283
      %356 = vst [vmem:[%s145 + $0x30] sm:$0xff] %v286
      %357 = vst [vmem:[%s145 + $0x38] sm:$0xff] %v288
      %358 = vst [vmem:[%s145 + $0x40] sm:$0xff] %v291
      %359 = vst [vmem:[%s145 + $0x48] sm:$0xff] %v293
      %360 = vst [vmem:[%s145 + $0x50] sm:$0xff] %v296
      %361 = vst [vmem:[%s145 + $0x58] sm:$0xff] %v298
      %362 = vst [vmem:[%s145 + $0x60] sm:$0xff] %v301
      %363 = vst [vmem:[%s145 + $0x68] sm:$0xff] %v303
      %364 = vst [vmem:[%s145 + $0x70] sm:$0xff] %v306
      %365 = vst [vmem:[%s145 + $0x78] sm:$0xff] %v308
      %366 = vst [vmem:[%s145 + $0x80] sm:$0xff] %v311
      %367 = vst [vmem:[%s145 + $0x88] sm:$0xff] %v313
      %368 = vst [vmem:[%s145 + $0x90] sm:$0xff] %v316
      %369 = vst [vmem:[%s145 + $0x98] sm:$0xff] %v318
      %370 = vst [vmem:[%s145 + $0xa0] sm:$0xff] %v321
      %371 = vst [vmem:[%s145 + $0xa8] sm:$0xff] %v323
      %372 = vst [vmem:[%s145 + $0xb0] sm:$0xff] %v326
      %373 = vst [vmem:[%s145 + $0xb8] sm:$0xff] %v328
      %374 = vst [vmem:[%s145 + $0xc0] sm:$0xff] %v331
      %375 = vst [vmem:[%s145 + $0xc8] sm:$0xff] %v333
      %376 = vst [vmem:[%s145 + $0xd0] sm:$0xff] %v336
      %377 = vst [vmem:[%s145 + $0xd8] sm:$0xff] %v338
      %378 = vst [vmem:[%s145 + $0xe0] sm:$0xff] %v341
      %379 = vst [vmem:[%s145 + $0xe8] sm:$0xff] %v343
      %380 = vst [vmem:[%s145 + $0xf0] sm:$0xff] %v346
      %381 = vst [vmem:[%s145 + $0xf8] sm:$0xff] %v348
      %s382 = smul.u32 32, %s13
      %p383 = scmp.lt.s32.totalorder %s382, 927
      %s384 = scalar_select %p383, %s382, 927
      %s385 = smul.addr %s384, 8
      %s386 = scalar_lea.vmem %s2, %s385
      // Predicated region
      $region29: #{image_decoder_forward.7} parent=27 // pred_check
        %p387 = pneg %p78
      $region30: #{image_decoder_forward.7} parent=27 // pred_check_branch
        %389 = sbr.rel (%p387) target = $region32
      $region31: #{image_decoder_forward.7} parent=27 // pred_region
        %s390 = smul.u32 32, %s13
      $region32: #{image_decoder_forward.7} parent=27 // pred_fallthru
        _
    $region28: #{image_decoder_forward.7} parent=5 // pred_fallthru
      _
    %p391 = scmp.le.s32.totalorder 2, %s8
    // Predicated region
    $region33: #{image_decoder_forward.7} parent=5 // pred_check
      %p392 = pneg %p391
    $region34: #{image_decoder_forward.7} parent=5 // pred_check_branch
      %394 = sbr.rel (%p392) target = $region36
    $region35: #{image_decoder_forward.7} parent=5 // pred_region
      %s395 = ssub.s32 %s8, 2
      // Predicated region
      $region37: #{image_decoder_forward.7} parent=35 // pred_check
        %p396 = pneg %p84
      $region38: #{image_decoder_forward.7} parent=35 // pred_check_branch
        %398 = sbr.rel (%p396) target = $region40
      $region39: #{image_decoder_forward.7} parent=35 // pred_region
        %s399 = smul.u32 32, %s14
        %p400 = scmp.lt.s32.totalorder %s399, 927
        %s401 = scalar_select %p400, %s399, 927
        %s402 = smul.addr %s401, 8
        %s403 = scalar_lea.vmem %s2, %s402
      $region40: #{image_decoder_forward.7} parent=35 // pred_fallthru
        _
    $region36: #{image_decoder_forward.7} parent=5 // pred_fallthru
      _
  $region6: #{image_decoder_forward.7} parent=0 // loop_footer
    %s12 = sadd.s32 1, %s8
  $region7: #{image_decoder_forward.7} parent=0 // loop_footer_branch
    %7 = sbr.rel target = $region3
  $region8: #{image_decoder_forward.7} parent=0 // loop_exit
    _

</llo_original>
